<compile_context>
chip_gen: v7x
topology: tpu7x:2x2x1
jax: 0.10.0
libtpu: 0.0.40
codegen_flags: <defaults>
</compile_context>

<pallas_src>
import functools
import math

import jax
import jax.numpy as jnp
from jax.experimental import pallas as pl
from jax.experimental.pallas import tpu as pltpu

LN_EPS = 1e-12  # BertConfig.layer_norm_eps

_ATTN_KEYS = ("wq", "bq", "wk", "bk", "wv", "bv", "wo", "bo", "ln_g", "ln_b")
_FFN_KEYS = ("w1", "b1", "w2", "b2", "ln_g", "ln_b")
_MATMUL_WEIGHTS = ("wq", "wk", "wv", "wo", "w1", "w2")


# ---------------------------------------------------------------------------
# In-kernel math helpers (f32 statistics; transcendentals on the EUP)
# ---------------------------------------------------------------------------
def _gelu(x):
    # TODO(synk): LXMERT/BERT uses exact erf-GELU; the tanh approximation
    # (~1e-3 abs) keeps the transcendental on the EUP slot.
    c = 0.7978845608028654  # sqrt(2/pi)
    return 0.5 * x * (1.0 + jnp.tanh(c * (x + 0.044715 * x * x * x)))


def _layernorm(x, gamma, beta):
    mu = jnp.mean(x, axis=-1, keepdims=True)
    var = jnp.mean((x - mu) ** 2, axis=-1, keepdims=True)
    return (x - mu) * jax.lax.rsqrt(var + LN_EPS) * gamma + beta


def _attention(x2d, ctx2d, mask, wq, bq, wk, bk, wv, bv, wo, bo, gamma, beta,
               *, bb, sq, sk, num_heads, head_dim):
    """BertSelfAttention + BertSelfOutput on flattened (rows, H) activations.

    x2d:   (bb*sq, H) f32 query-side input (also the residual)
    ctx2d: (bb*sk, H) f32 key/value-side input
    mask:  (bb, 1, sk) additive f32 attention mask
    Returns LayerNorm(dense(attn) + residual), (bb*sq, H) f32.
    """
    hidden = num_heads * head_dim
    xb = x2d.astype(jnp.bfloat16)
    cxb = ctx2d.astype(jnp.bfloat16)

    # One K=H matmul per projection; bias added in f32, then a single bf16
    # cast so the per-head slices below move half the bytes.  The 1/sqrt(hd)
    # query scale was folded into wq/bq at weight-prep time.
    q = (jnp.dot(xb, wq, preferred_element_type=jnp.float32) + bq).astype(jnp.bfloat16)
    k = (jnp.dot(cxb, wk, preferred_element_type=jnp.float32) + bk).astype(jnp.bfloat16)
    v = (jnp.dot(cxb, wv, preferred_element_type=jnp.float32) + bv).astype(jnp.bfloat16)

    # Hoisted mask broadcast (emitted once, not once per head).
    mask3 = jnp.broadcast_to(mask, (bb, sq, sk))

    # TODO(synk): replace the static head loop with head-batched einsums
    # ('bqhd,bkhd->bhqk' / 'bhqk,bkhd->bqhd') once the required non-minor
    # 4-D transpose lowers robustly in Mosaic.
    ctx_heads = []
    for h in range(num_heads):
        lo = h * head_dim
        qh = q[:, lo:lo + head_dim].reshape(bb, sq, head_dim)
        kh = k[:, lo:lo + head_dim].reshape(bb, sk, head_dim)
        vh = v[:, lo:lo + head_dim].reshape(bb, sk, head_dim)

        s = jnp.einsum('bqd,bkd->bqk', qh, kh,
                       preferred_element_type=jnp.float32) + mask3
        s = s - jnp.max(s, axis=-1, keepdims=True)
        e = jnp.exp(s)
        p = e / jnp.sum(e, axis=-1, keepdims=True)      # exact softmax

        ctx_heads.append(jnp.einsum('bqk,bkd->bqd', p.astype(jnp.bfloat16), vh,
                                    preferred_element_type=jnp.float32))

    # Single output projection with the full K=H contraction (no per-head
    # accumulation through row-slices of Wo).
    ctx = jnp.concatenate(ctx_heads, axis=-1).reshape(bb * sq, hidden)
    proj = jnp.dot(ctx.astype(jnp.bfloat16), wo,
                   preferred_element_type=jnp.float32) + bo
    # BertSelfOutput: LayerNorm(dense(attn) + residual)   (dropout = identity)
    return _layernorm(proj + x2d, gamma, beta)


def _ffn(x2d, w1, b1, w2, b2, gamma, beta):
    """BertIntermediate + BertOutput on flattened (rows, H) activations."""
    h = jnp.dot(x2d.astype(jnp.bfloat16), w1,
                preferred_element_type=jnp.float32) + b1
    h = _gelu(h).astype(jnp.bfloat16)       # single cast into the 2nd matmul
    o = jnp.dot(h, w2, preferred_element_type=jnp.float32) + b2
    # BertOutput: LayerNorm(dense(inter) + residual)       (dropout = identity)
    return _layernorm(o + x2d, gamma, beta)


# ---------------------------------------------------------------------------
# Fused per-stream kernel: cross-att -> self-att -> FFN (all in VMEM)
# ---------------------------------------------------------------------------
def _stream_kernel(
        x_ref, ctx_ref, cmask_ref, smask_ref,
        # cross-attention (shared visual_attention) params
        cwq, cbq, cwk, cbk, cwv, cbv, cwo, cbo, cln_g, cln_b,
        # self-attention params
        swq, sbq, swk, sbk, swv, sbv, swo, sbo, sln_g, sln_b,
        # FFN (intermediate + output) params
        w1, b1, w2, b2, fln_g, fln_b,
        out_ref, *, num_heads, head_dim):
    bb, sq, hidden = x_ref.shape
    sk = ctx_ref.shape[1]

    # Flatten batch into the matmul M dimension (f32 residual path).
    x2 = x_ref[...].reshape(bb * sq, hidden).astype(jnp.float32)
    ctx2 = ctx_ref[...].reshape(bb * sk, hidden).astype(jnp.float32)

    # 1) cross-attention (BertCrossattLayer = BertSelfAttention+BertSelfOutput)
    h1 = _attention(x2, ctx2, cmask_ref[...],
                    cwq[...], cbq[...], cwk[...], cbk[...], cwv[...], cbv[...],
                    cwo[...], cbo[...], cln_g[...], cln_b[...],
                    bb=bb, sq=sq, sk=sk, num_heads=num_heads, head_dim=head_dim)
    # 2) self-attention (BertAttention) — keys/values/mask from own stream
    h2 = _attention(h1, h1, smask_ref[...],
                    swq[...], sbq[...], swk[...], sbk[...], swv[...], sbv[...],
                    swo[...], sbo[...], sln_g[...], sln_b[...],
                    bb=bb, sq=sq, sk=sq, num_heads=num_heads, head_dim=head_dim)
    # 3) FFN (BertIntermediate + BertOutput)
    y = _ffn(h2, w1[...], b1[...], w2[...], b2[...], fln_g[...], fln_b[...])

    out_ref[...] = y.reshape(bb, sq, hidden).astype(out_ref.dtype)


# ---------------------------------------------------------------------------
# pallas_call wrapper
# ---------------------------------------------------------------------------
def _default_vmem_limit_bytes():
    """~75% of physical VMEM, capped at 100 MiB (48 MiB on v7x, 96 MiB on
    v5e/v6e) so compiler scratch + double-buffered act blocks still fit."""
    cap = 128 * 1024 * 1024
    try:
        cap = int(getattr(pltpu.get_tpu_info(), "vmem_capacity_bytes", cap))
    except Exception:
        pass
    return min(cap * 3 // 4, 100 * 1024 * 1024)


def _fused_stream(x, ctx, ctx_mask, self_mask, cross_p, self_p, ffn_p,
                  *, num_heads, block_b=None, single_buffer_weights=False,
                  out_dtype=None):
    B, Sq, H = x.shape
    _, Sk, _ = ctx.shape
    head_dim = H // num_heads
    if block_b is None:
        # >= 2 grid steps when possible so ("parallel",) can use both v7x
        # TensorCores and grid-step pipelining kicks in; on v6e/v5e pass
        # block_b=B to keep a single maximal resident block.
        block_b = B // 2 if (B % 2 == 0 and B >= 2) else B
    assert B % block_b == 0

    kernel = functools.partial(_stream_kernel, num_heads=num_heads,
                               head_dim=head_dim)

    def batched(shape):
        nd = len(shape)
        return pl.BlockSpec((block_b,) + tuple(shape[1:]),
                            lambda i, _nd=nd: (i,) + (0,) * (_nd - 1))

    # Grid-invariant weights: constant index_map, so they are fetched once.
    wspec_kwargs = {}
    if single_buffer_weights:
        # v7x VMEM budgeting: do not double-buffer grid-invariant weights.
        wspec_kwargs = dict(pipeline_mode=pl.Buffered(1))

    def replicated(shape):
        nd = len(shape)
        return pl.BlockSpec(tuple(shape), lambda i, _nd=nd: (0,) * _nd,
                            **wspec_kwargs)

    weights = ([cross_p[k] for k in _ATTN_KEYS]
               + [self_p[k] for k in _ATTN_KEYS]
               + [ffn_p[k] for k in _FFN_KEYS])
    in_specs = ([batched(x.shape), batched(ctx.shape),
                 batched(ctx_mask.shape), batched(self_mask.shape)]
                + [replicated(w.shape) for w in weights])

    out_dtype = x.dtype if out_dtype is None else out_dtype
    return pl.pallas_call(
        kernel,
        out_shape=jax.ShapeDtypeStruct((B, Sq, H), out_dtype),
        grid=(B // block_b,),
        in_specs=in_specs,
        out_specs=batched((B, Sq, H)),
        compiler_params=pltpu.CompilerParams(
            dimension_semantics=("parallel",),
            vmem_limit_bytes=_default_vmem_limit_bytes()),
    )(x, ctx, ctx_mask, self_mask, *weights)


# ---------------------------------------------------------------------------
# One-time weight preparation (persistent bf16 weights; scale folded into wq)
# ---------------------------------------------------------------------------
def prepare_lxrt_params(params, *, num_heads):
    """Call ONCE, keep the result, pass it to lxrt_x_layer on every step.

    Casts matmul weights to bf16 (halves weight HBM traffic + VMEM footprint),
    keeps biases / LayerNorm params in f32, and folds the 1/sqrt(head_dim)
    query scale into wq / bq of every attention block.
    """
    def cast(p):
        return {k: (v.astype(jnp.bfloat16) if k in _MATMUL_WEIGHTS
                    else v.astype(jnp.float32)) for k, v in p.items()}

    def prep_attn(p):
        hidden = p["wq"].shape[0]
        scale = 1.0 / math.sqrt(hidden // num_heads)
        q = dict(p)
        q["wq"] = p["wq"].astype(jnp.float32) * scale
        q["bq"] = p["bq"].astype(jnp.float32) * scale
        return cast(q)

    return {
        "cross": prep_attn(params["cross"]),
        "lang_self": prep_attn(params["lang_self"]),
        "visn_self": prep_attn(params["visn_self"]),
        "lang_ffn": cast(params["lang_ffn"]),
        "visn_ffn": cast(params["visn_ffn"]),
    }


# ---------------------------------------------------------------------------
# LXRTXLayer forward (expects prepared params)
# ---------------------------------------------------------------------------
def lxrt_x_layer(prepared_params, lang_feats, lang_attention_mask, visn_feats,
                 visn_attention_mask, *, num_heads, block_b=None,
                 single_buffer_weights=False):
    cross = prepared_params["cross"]              # shared visual_attention
    lang_self = prepared_params["lang_self"]
    visn_self = prepared_params["visn_self"]
    lang_ffn = prepared_params["lang_ffn"]
    visn_ffn = prepared_params["visn_ffn"]

    # lang stream: cross-att over visn (visn mask) -> self-att (lang mask) -> FFN
    lang_out = _fused_stream(lang_feats, visn_feats, visn_attention_mask,
                             lang_attention_mask, cross, lang_self, lang_ffn,
                             num_heads=num_heads, block_b=block_b,
                             single_buffer_weights=single_buffer_weights)
    # visn stream: cross-att over lang (lang mask) -> self-att (visn mask) -> FFN
    visn_out = _fused_stream(visn_feats, lang_feats, lang_attention_mask,
                             visn_attention_mask, cross, visn_self, visn_ffn,
                             num_heads=num_heads, block_b=block_b,
                             single_buffer_weights=single_buffer_weights)
    return lang_out, visn_out


# ---------------------------------------------------------------------------
# Deterministic synthetic parameters (nn.Linear weights stored pre-transposed
# as (in, out) so the kernel computes x @ W + b).
# ---------------------------------------------------------------------------
def init_attn_params(key, hidden):
    ks = jax.random.split(key, 4)
    lin = lambda k, din, dout: 0.02 * jax.random.normal(k, (din, dout),
                                                        jnp.float32)
    return dict(
        wq=lin(ks[0], hidden, hidden), bq=jnp.zeros((1, hidden), jnp.float32),
        wk=lin(ks[1], hidden, hidden), bk=jnp.zeros((1, hidden), jnp.float32),
        wv=lin(ks[2], hidden, hidden), bv=jnp.zeros((1, hidden), jnp.float32),
        wo=lin(ks[3], hidden, hidden), bo=jnp.zeros((1, hidden), jnp.float32),
        ln_g=jnp.ones((1, hidden), jnp.float32),
        ln_b=jnp.zeros((1, hidden), jnp.float32),
    )


def init_ffn_params(key, hidden, intermediate):
    ks = jax.random.split(key, 2)
    lin = lambda k, din, dout: 0.02 * jax.random.normal(k, (din, dout),
                                                        jnp.float32)
    return dict(
        w1=lin(ks[0], hidden, intermediate),
        b1=jnp.zeros((1, intermediate), jnp.float32),
        w2=lin(ks[1], intermediate, hidden),
        b2=jnp.zeros((1, hidden), jnp.float32),
        ln_g=jnp.ones((1, hidden), jnp.float32),
        ln_b=jnp.zeros((1, hidden), jnp.float32),
    )


if __name__ == "__main__":
    # H=128 keeps the hidden (lane) dim 128-wide -> unmasked lane-dense stores.
    B, S_LANG, S_VISN, HIDDEN, NUM_HEADS, INTER = 2, 8, 16, 128, 4, 256

    key = jax.random.PRNGKey(0)
    k_lang, k_visn, k_c, k_ls, k_vs, k_lf, k_vf = jax.random.split(key, 7)

    lang_feats = jax.random.normal(k_lang, (B, S_LANG, HIDDEN), jnp.float32)
    visn_feats = jax.random.normal(k_visn, (B, S_VISN, HIDDEN), jnp.float32)

    # Additive attention masks (B, 1, S_key): 0 = attend, -10000 = masked.
    lang_valid = jnp.ones((B, 1, S_LANG), jnp.float32).at[1, 0, -2:].set(0.0)
    visn_valid = jnp.ones((B, 1, S_VISN), jnp.float32)
    lang_attention_mask = (1.0 - lang_valid) * -10000.0
    visn_attention_mask = (1.0 - visn_valid) * -10000.0

    params = {
        "cross": init_attn_params(k_c, HIDDEN),       # shared visual_attention
        "lang_self": init_attn_params(k_ls, HIDDEN),  # lang_self_att
        "visn_self": init_attn_params(k_vs, HIDDEN),  # visn_self_att
        "lang_ffn": init_ffn_params(k_lf, HIDDEN, INTER),  # lang_inter+output
        "visn_ffn": init_ffn_params(k_vf, HIDDEN, INTER),  # visn_inter+output
    }

    # One-time prep: persistent bf16 matmul weights, query scale folded in.
    prepared = prepare_lxrt_params(params, num_heads=NUM_HEADS)
    jax.block_until_ready(prepared)

    lang_out, visn_out = lxrt_x_layer(
        prepared, lang_feats, lang_attention_mask, visn_feats,
        visn_attention_mask, num_heads=NUM_HEADS)
    jax.block_until_ready((lang_out, visn_out))

    assert lang_out.shape == (B, S_LANG, HIDDEN)
    assert visn_out.shape == (B, S_VISN, HIDDEN)
    print("KERNEL_OK")
</pallas_src>

<mosaic_0001>
module attributes {stable_mosaic.version = 11 : i64} {
  func.func @_stream_kernel(%arg0: i32, %arg1: memref<1x8x128xf32, #tpu.memory_space<vmem>>, %arg2: memref<1x16x128xf32, #tpu.memory_space<vmem>>, %arg3: memref<1x1x16xf32, #tpu.memory_space<vmem>>, %arg4: memref<1x1x8xf32, #tpu.memory_space<vmem>>, %arg5: memref<128x128xbf16, #tpu.memory_space<vmem>>, %arg6: memref<1x128xf32, #tpu.memory_space<vmem>>, %arg7: memref<128x128xbf16, #tpu.memory_space<vmem>>, %arg8: memref<1x128xf32, #tpu.memory_space<vmem>>, %arg9: memref<128x128xbf16, #tpu.memory_space<vmem>>, %arg10: memref<1x128xf32, #tpu.memory_space<vmem>>, %arg11: memref<128x128xbf16, #tpu.memory_space<vmem>>, %arg12: memref<1x128xf32, #tpu.memory_space<vmem>>, %arg13: memref<1x128xf32, #tpu.memory_space<vmem>>, %arg14: memref<1x128xf32, #tpu.memory_space<vmem>>, %arg15: memref<128x128xbf16, #tpu.memory_space<vmem>>, %arg16: memref<1x128xf32, #tpu.memory_space<vmem>>, %arg17: memref<128x128xbf16, #tpu.memory_space<vmem>>, %arg18: memref<1x128xf32, #tpu.memory_space<vmem>>, %arg19: memref<128x128xbf16, #tpu.memory_space<vmem>>, %arg20: memref<1x128xf32, #tpu.memory_space<vmem>>, %arg21: memref<128x128xbf16, #tpu.memory_space<vmem>>, %arg22: memref<1x128xf32, #tpu.memory_space<vmem>>, %arg23: memref<1x128xf32, #tpu.memory_space<vmem>>, %arg24: memref<1x128xf32, #tpu.memory_space<vmem>>, %arg25: memref<128x256xbf16, #tpu.memory_space<vmem>>, %arg26: memref<1x256xf32, #tpu.memory_space<vmem>>, %arg27: memref<256x128xbf16, #tpu.memory_space<vmem>>, %arg28: memref<1x128xf32, #tpu.memory_space<vmem>>, %arg29: memref<1x128xf32, #tpu.memory_space<vmem>>, %arg30: memref<1x128xf32, #tpu.memory_space<vmem>>, %arg31: memref<1x8x128xf32, #tpu.memory_space<vmem>>) attributes {dimension_semantics = [#tpu.dimension_semantics<parallel>], iteration_bounds = array<i64: 2>, scalar_prefetch = 0 : i64, scratch_operands = 0 : i64, tpu.core_type = #tpu.core_type<tc>, window_params = [{transform_indices = @transform_0, window_bounds = array<i64: 1, 8, 128>}, {transform_indices = @transform_1, window_bounds = array<i64: 1, 16, 128>}, {transform_indices = @transform_2, window_bounds = array<i64: 1, 1, 16>}, {transform_indices = @transform_3, window_bounds = array<i64: 1, 1, 8>}, {pipeline_mode = #tpu.pipeline_mode<synchronous>, transform_indices = @transform_4, window_bounds = array<i64: 128, 128>}, {pipeline_mode = #tpu.pipeline_mode<synchronous>, transform_indices = @transform_5, window_bounds = array<i64: 1, 128>}, {pipeline_mode = #tpu.pipeline_mode<synchronous>, transform_indices = @transform_6, window_bounds = array<i64: 128, 128>}, {pipeline_mode = #tpu.pipeline_mode<synchronous>, transform_indices = @transform_7, window_bounds = array<i64: 1, 128>}, {pipeline_mode = #tpu.pipeline_mode<synchronous>, transform_indices = @transform_8, window_bounds = array<i64: 128, 128>}, {pipeline_mode = #tpu.pipeline_mode<synchronous>, transform_indices = @transform_9, window_bounds = array<i64: 1, 128>}, {pipeline_mode = #tpu.pipeline_mode<synchronous>, transform_indices = @transform_10, window_bounds = array<i64: 128, 128>}, {pipeline_mode = #tpu.pipeline_mode<synchronous>, transform_indices = @transform_11, window_bounds = array<i64: 1, 128>}, {pipeline_mode = #tpu.pipeline_mode<synchronous>, transform_indices = @transform_12, window_bounds = array<i64: 1, 128>}, {pipeline_mode = #tpu.pipeline_mode<synchronous>, transform_indices = @transform_13, window_bounds = array<i64: 1, 128>}, {pipeline_mode = #tpu.pipeline_mode<synchronous>, transform_indices = @transform_14, window_bounds = array<i64: 128, 128>}, {pipeline_mode = #tpu.pipeline_mode<synchronous>, transform_indices = @transform_15, window_bounds = array<i64: 1, 128>}, {pipeline_mode = #tpu.pipeline_mode<synchronous>, transform_indices = @transform_16, window_bounds = array<i64: 128, 128>}, {pipeline_mode = #tpu.pipeline_mode<synchronous>, transform_indices = @transform_17, window_bounds = array<i64: 1, 128>}, {pipeline_mode = #tpu.pipeline_mode<synchronous>, transform_indices = @transform_18, window_bounds = array<i64: 128, 128>}, {pipeline_mode = #tpu.pipeline_mode<synchronous>, transform_indices = @transform_19, window_bounds = array<i64: 1, 128>}, {pipeline_mode = #tpu.pipeline_mode<synchronous>, transform_indices = @transform_20, window_bounds = array<i64: 128, 128>}, {pipeline_mode = #tpu.pipeline_mode<synchronous>, transform_indices = @transform_21, window_bounds = array<i64: 1, 128>}, {pipeline_mode = #tpu.pipeline_mode<synchronous>, transform_indices = @transform_22, window_bounds = array<i64: 1, 128>}, {pipeline_mode = #tpu.pipeline_mode<synchronous>, transform_indices = @transform_23, window_bounds = array<i64: 1, 128>}, {pipeline_mode = #tpu.pipeline_mode<synchronous>, transform_indices = @transform_24, window_bounds = array<i64: 128, 256>}, {pipeline_mode = #tpu.pipeline_mode<synchronous>, transform_indices = @transform_25, window_bounds = array<i64: 1, 256>}, {pipeline_mode = #tpu.pipeline_mode<synchronous>, transform_indices = @transform_26, window_bounds = array<i64: 256, 128>}, {pipeline_mode = #tpu.pipeline_mode<synchronous>, transform_indices = @transform_27, window_bounds = array<i64: 1, 128>}, {pipeline_mode = #tpu.pipeline_mode<synchronous>, transform_indices = @transform_28, window_bounds = array<i64: 1, 128>}, {pipeline_mode = #tpu.pipeline_mode<synchronous>, transform_indices = @transform_29, window_bounds = array<i64: 1, 128>}, {transform_indices = @transform_30, window_bounds = array<i64: 1, 8, 128>}]} {
    %c0 = arith.constant 0 : index
    %c0_0 = arith.constant 0 : index
    %c0_1 = arith.constant 0 : index
    %0 = vector.load %arg1[%c0, %c0_0, %c0_1] : memref<1x8x128xf32, #tpu.memory_space<vmem>>, vector<1x8x128xf32>
    %1 = vector.shape_cast %0 : vector<1x8x128xf32> to vector<8x128xf32>
    %c0_2 = arith.constant 0 : index
    %c0_3 = arith.constant 0 : index
    %c0_4 = arith.constant 0 : index
    %2 = vector.load %arg2[%c0_2, %c0_3, %c0_4] : memref<1x16x128xf32, #tpu.memory_space<vmem>>, vector<1x16x128xf32>
    %3 = vector.shape_cast %2 : vector<1x16x128xf32> to vector<16x128xf32>
    %c0_5 = arith.constant 0 : index
    %c0_6 = arith.constant 0 : index
    %c0_7 = arith.constant 0 : index
    %4 = vector.load %arg3[%c0_5, %c0_6, %c0_7] : memref<1x1x16xf32, #tpu.memory_space<vmem>>, vector<1x1x16xf32>
    %c0_8 = arith.constant 0 : index
    %c0_9 = arith.constant 0 : index
    %5 = vector.load %arg5[%c0_8, %c0_9] : memref<128x128xbf16, #tpu.memory_space<vmem>>, vector<128x128xbf16>
    %c0_10 = arith.constant 0 : index
    %c0_11 = arith.constant 0 : index
    %6 = vector.load %arg6[%c0_10, %c0_11] : memref<1x128xf32, #tpu.memory_space<vmem>>, vector<1x128xf32>
    %c0_12 = arith.constant 0 : index
    %c0_13 = arith.constant 0 : index
    %7 = vector.load %arg7[%c0_12, %c0_13] : memref<128x128xbf16, #tpu.memory_space<vmem>>, vector<128x128xbf16>
    %c0_14 = arith.constant 0 : index
    %c0_15 = arith.constant 0 : index
    %8 = vector.load %arg8[%c0_14, %c0_15] : memref<1x128xf32, #tpu.memory_space<vmem>>, vector<1x128xf32>
    %c0_16 = arith.constant 0 : index
    %c0_17 = arith.constant 0 : index
    %9 = vector.load %arg9[%c0_16, %c0_17] : memref<128x128xbf16, #tpu.memory_space<vmem>>, vector<128x128xbf16>
    %c0_18 = arith.constant 0 : index
    %c0_19 = arith.constant 0 : index
    %10 = vector.load %arg10[%c0_18, %c0_19] : memref<1x128xf32, #tpu.memory_space<vmem>>, vector<1x128xf32>
    %c0_20 = arith.constant 0 : index
    %c0_21 = arith.constant 0 : index
    %11 = vector.load %arg11[%c0_20, %c0_21] : memref<128x128xbf16, #tpu.memory_space<vmem>>, vector<128x128xbf16>
    %c0_22 = arith.constant 0 : index
    %c0_23 = arith.constant 0 : index
    %12 = vector.load %arg12[%c0_22, %c0_23] : memref<1x128xf32, #tpu.memory_space<vmem>>, vector<1x128xf32>
    %c0_24 = arith.constant 0 : index
    %c0_25 = arith.constant 0 : index
    %13 = vector.load %arg13[%c0_24, %c0_25] : memref<1x128xf32, #tpu.memory_space<vmem>>, vector<1x128xf32>
    %c0_26 = arith.constant 0 : index
    %c0_27 = arith.constant 0 : index
    %14 = vector.load %arg14[%c0_26, %c0_27] : memref<1x128xf32, #tpu.memory_space<vmem>>, vector<1x128xf32>
    %15 = arith.truncf %1 : vector<8x128xf32> to vector<8x128xbf16>
    %16 = arith.truncf %3 : vector<16x128xf32> to vector<16x128xbf16>
    %cst = arith.constant dense<0.000000e+00> : vector<8x128xf32>
    %17 = tpu.matmul %15, %5, %cst {dimension_numbers = #tpu.dot_dimension_numbers<[1], [0], [0], [1], [0, 0, 1, 1], [], []>} : vector<8x128xbf16>, vector<128x128xbf16>, vector<8x128xf32> -> vector<8x128xf32>
    %18 = vector.broadcast %6 : vector<1x128xf32> to vector<8x128xf32>
    %19 = arith.addf %17, %18 : vector<8x128xf32>
    %20 = arith.truncf %19 : vector<8x128xf32> to vector<8x128xbf16>
    %cst_28 = arith.constant dense<0.000000e+00> : vector<16x128xf32>
    %21 = tpu.matmul %16, %7, %cst_28 {dimension_numbers = #tpu.dot_dimension_numbers<[1], [0], [0], [1], [0, 0, 1, 1], [], []>} : vector<16x128xbf16>, vector<128x128xbf16>, vector<16x128xf32> -> vector<16x128xf32>
    %22 = vector.broadcast %8 : vector<1x128xf32> to vector<16x128xf32>
    %23 = arith.addf %21, %22 : vector<16x128xf32>
    %24 = arith.truncf %23 : vector<16x128xf32> to vector<16x128xbf16>
    %cst_29 = arith.constant dense<0.000000e+00> : vector<16x128xf32>
    %25 = tpu.matmul %16, %9, %cst_29 {dimension_numbers = #tpu.dot_dimension_numbers<[1], [0], [0], [1], [0, 0, 1, 1], [], []>} : vector<16x128xbf16>, vector<128x128xbf16>, vector<16x128xf32> -> vector<16x128xf32>
    %26 = vector.broadcast %10 : vector<1x128xf32> to vector<16x128xf32>
    %27 = arith.addf %25, %26 : vector<16x128xf32>
    %28 = arith.truncf %27 : vector<16x128xf32> to vector<16x128xbf16>
    %29 = vector.shape_cast %4 : vector<1x1x16xf32> to vector<1x1x16xf32>
    %30 = vector.broadcast %29 : vector<1x1x16xf32> to vector<1x8x16xf32>
    %31 = vector.extract_strided_slice %20 {offsets = [0, 0], sizes = [8, 32], strides = [1, 1]} : vector<8x128xbf16> to vector<8x32xbf16>
    %32 = vector.shape_cast %31 : vector<8x32xbf16> to vector<1x8x32xbf16>
    %33 = vector.extract_strided_slice %24 {offsets = [0, 0], sizes = [16, 32], strides = [1, 1]} : vector<16x128xbf16> to vector<16x32xbf16>
    %34 = vector.shape_cast %33 : vector<16x32xbf16> to vector<1x16x32xbf16>
    %35 = vector.extract_strided_slice %28 {offsets = [0, 0], sizes = [16, 32], strides = [1, 1]} : vector<16x128xbf16> to vector<16x32xbf16>
    %36 = vector.shape_cast %35 : vector<16x32xbf16> to vector<1x16x32xbf16>
    "tpu.trace_start"() <{level = 10 : i32, message = "bqd,bkd->bqk"}> : () -> ()
    %cst_30 = arith.constant dense<0.000000e+00> : vector<1x8x16xf32>
    %37 = tpu.matmul %32, %34, %cst_30 {dimension_numbers = #tpu.dot_dimension_numbers<[2], [2], [1], [1], [0, 0, 0, 1, 1, 1], [0], [0]>} : vector<1x8x32xbf16>, vector<1x16x32xbf16>, vector<1x8x16xf32> -> vector<1x8x16xf32>
    "tpu.trace_stop"() : () -> ()
    %38 = arith.addf %37, %30 : vector<1x8x16xf32>
    %cst_31 = arith.constant dense<0xFF800000> : vector<1x8xf32>
    %39 = vector.multi_reduction <maximumf>, %38, %cst_31 [2] : vector<1x8x16xf32> to vector<1x8xf32>
    %40 = vector.shape_cast %39 : vector<1x8xf32> to vector<1x8x1xf32>
    %41 = vector.broadcast %40 : vector<1x8x1xf32> to vector<1x8x16xf32>
    %42 = arith.subf %38, %41 : vector<1x8x16xf32>
    %43 = math.exp %42 : vector<1x8x16xf32>
    %cst_32 = arith.constant dense<0.000000e+00> : vector<1x8xf32>
    %44 = vector.multi_reduction <add>, %43, %cst_32 [2] : vector<1x8x16xf32> to vector<1x8xf32>
    %45 = vector.shape_cast %44 : vector<1x8xf32> to vector<1x8x1xf32>
    %46 = vector.broadcast %45 : vector<1x8x1xf32> to vector<1x8x16xf32>
    %47 = arith.divf %43, %46 : vector<1x8x16xf32>
    %48 = arith.truncf %47 : vector<1x8x16xf32> to vector<1x8x16xbf16>
    "tpu.trace_start"() <{level = 10 : i32, message = "bqk,bkd->bqd"}> : () -> ()
    %cst_33 = arith.constant dense<0.000000e+00> : vector<1x8x32xf32>
    %49 = tpu.matmul %48, %36, %cst_33 {dimension_numbers = #tpu.dot_dimension_numbers<[2], [1], [1], [2], [0, 0, 0, 1, 1, 2], [0], [0]>} : vector<1x8x16xbf16>, vector<1x16x32xbf16>, vector<1x8x32xf32> -> vector<1x8x32xf32>
    "tpu.trace_stop"() : () -> ()
    %50 = vector.extract_strided_slice %20 {offsets = [0, 32], sizes = [8, 32], strides = [1, 1]} : vector<8x128xbf16> to vector<8x32xbf16>
    %51 = vector.shape_cast %50 : vector<8x32xbf16> to vector<1x8x32xbf16>
    %52 = vector.extract_strided_slice %24 {offsets = [0, 32], sizes = [16, 32], strides = [1, 1]} : vector<16x128xbf16> to vector<16x32xbf16>
    %53 = vector.shape_cast %52 : vector<16x32xbf16> to vector<1x16x32xbf16>
    %54 = vector.extract_strided_slice %28 {offsets = [0, 32], sizes = [16, 32], strides = [1, 1]} : vector<16x128xbf16> to vector<16x32xbf16>
    %55 = vector.shape_cast %54 : vector<16x32xbf16> to vector<1x16x32xbf16>
    "tpu.trace_start"() <{level = 10 : i32, message = "bqd,bkd->bqk"}> : () -> ()
    %cst_34 = arith.constant dense<0.000000e+00> : vector<1x8x16xf32>
    %56 = tpu.matmul %51, %53, %cst_34 {dimension_numbers = #tpu.dot_dimension_numbers<[2], [2], [1], [1], [0, 0, 0, 1, 1, 1], [0], [0]>} : vector<1x8x32xbf16>, vector<1x16x32xbf16>, vector<1x8x16xf32> -> vector<1x8x16xf32>
    "tpu.trace_stop"() : () -> ()
    %57 = arith.addf %56, %30 : vector<1x8x16xf32>
    %cst_35 = arith.constant dense<0xFF800000> : vector<1x8xf32>
    %58 = vector.multi_reduction <maximumf>, %57, %cst_35 [2] : vector<1x8x16xf32> to vector<1x8xf32>
    %59 = vector.shape_cast %58 : vector<1x8xf32> to vector<1x8x1xf32>
    %60 = vector.broadcast %59 : vector<1x8x1xf32> to vector<1x8x16xf32>
    %61 = arith.subf %57, %60 : vector<1x8x16xf32>
    %62 = math.exp %61 : vector<1x8x16xf32>
    %cst_36 = arith.constant dense<0.000000e+00> : vector<1x8xf32>
    %63 = vector.multi_reduction <add>, %62, %cst_36 [2] : vector<1x8x16xf32> to vector<1x8xf32>
    %64 = vector.shape_cast %63 : vector<1x8xf32> to vector<1x8x1xf32>
    %65 = vector.broadcast %64 : vector<1x8x1xf32> to vector<1x8x16xf32>
    %66 = arith.divf %62, %65 : vector<1x8x16xf32>
    %67 = arith.truncf %66 : vector<1x8x16xf32> to vector<1x8x16xbf16>
    "tpu.trace_start"() <{level = 10 : i32, message = "bqk,bkd->bqd"}> : () -> ()
    %cst_37 = arith.constant dense<0.000000e+00> : vector<1x8x32xf32>
    %68 = tpu.matmul %67, %55, %cst_37 {dimension_numbers = #tpu.dot_dimension_numbers<[2], [1], [1], [2], [0, 0, 0, 1, 1, 2], [0], [0]>} : vector<1x8x16xbf16>, vector<1x16x32xbf16>, vector<1x8x32xf32> -> vector<1x8x32xf32>
    "tpu.trace_stop"() : () -> ()
    %69 = vector.extract_strided_slice %20 {offsets = [0, 64], sizes = [8, 32], strides = [1, 1]} : vector<8x128xbf16> to vector<8x32xbf16>
    %70 = vector.shape_cast %69 : vector<8x32xbf16> to vector<1x8x32xbf16>
    %71 = vector.extract_strided_slice %24 {offsets = [0, 64], sizes = [16, 32], strides = [1, 1]} : vector<16x128xbf16> to vector<16x32xbf16>
    %72 = vector.shape_cast %71 : vector<16x32xbf16> to vector<1x16x32xbf16>
    %73 = vector.extract_strided_slice %28 {offsets = [0, 64], sizes = [16, 32], strides = [1, 1]} : vector<16x128xbf16> to vector<16x32xbf16>
    %74 = vector.shape_cast %73 : vector<16x32xbf16> to vector<1x16x32xbf16>
    "tpu.trace_start"() <{level = 10 : i32, message = "bqd,bkd->bqk"}> : () -> ()
    %cst_38 = arith.constant dense<0.000000e+00> : vector<1x8x16xf32>
    %75 = tpu.matmul %70, %72, %cst_38 {dimension_numbers = #tpu.dot_dimension_numbers<[2], [2], [1], [1], [0, 0, 0, 1, 1, 1], [0], [0]>} : vector<1x8x32xbf16>, vector<1x16x32xbf16>, vector<1x8x16xf32> -> vector<1x8x16xf32>
    "tpu.trace_stop"() : () -> ()
    %76 = arith.addf %75, %30 : vector<1x8x16xf32>
    %cst_39 = arith.constant dense<0xFF800000> : vector<1x8xf32>
    %77 = vector.multi_reduction <maximumf>, %76, %cst_39 [2] : vector<1x8x16xf32> to vector<1x8xf32>
    %78 = vector.shape_cast %77 : vector<1x8xf32> to vector<1x8x1xf32>
    %79 = vector.broadcast %78 : vector<1x8x1xf32> to vector<1x8x16xf32>
    %80 = arith.subf %76, %79 : vector<1x8x16xf32>
    %81 = math.exp %80 : vector<1x8x16xf32>
    %cst_40 = arith.constant dense<0.000000e+00> : vector<1x8xf32>
    %82 = vector.multi_reduction <add>, %81, %cst_40 [2] : vector<1x8x16xf32> to vector<1x8xf32>
    %83 = vector.shape_cast %82 : vector<1x8xf32> to vector<1x8x1xf32>
    %84 = vector.broadcast %83 : vector<1x8x1xf32> to vector<1x8x16xf32>
    %85 = arith.divf %81, %84 : vector<1x8x16xf32>
    %86 = arith.truncf %85 : vector<1x8x16xf32> to vector<1x8x16xbf16>
    "tpu.trace_start"() <{level = 10 : i32, message = "bqk,bkd->bqd"}> : () -> ()
    %cst_41 = arith.constant dense<0.000000e+00> : vector<1x8x32xf32>
    %87 = tpu.matmul %86, %74, %cst_41 {dimension_numbers = #tpu.dot_dimension_numbers<[2], [1], [1], [2], [0, 0, 0, 1, 1, 2], [0], [0]>} : vector<1x8x16xbf16>, vector<1x16x32xbf16>, vector<1x8x32xf32> -> vector<1x8x32xf32>
    "tpu.trace_stop"() : () -> ()
    %88 = vector.extract_strided_slice %20 {offsets = [0, 96], sizes = [8, 32], strides = [1, 1]} : vector<8x128xbf16> to vector<8x32xbf16>
    %89 = vector.shape_cast %88 : vector<8x32xbf16> to vector<1x8x32xbf16>
    %90 = vector.extract_strided_slice %24 {offsets = [0, 96], sizes = [16, 32], strides = [1, 1]} : vector<16x128xbf16> to vector<16x32xbf16>
    %91 = vector.shape_cast %90 : vector<16x32xbf16> to vector<1x16x32xbf16>
    %92 = vector.extract_strided_slice %28 {offsets = [0, 96], sizes = [16, 32], strides = [1, 1]} : vector<16x128xbf16> to vector<16x32xbf16>
    %93 = vector.shape_cast %92 : vector<16x32xbf16> to vector<1x16x32xbf16>
    "tpu.trace_start"() <{level = 10 : i32, message = "bqd,bkd->bqk"}> : () -> ()
    %cst_42 = arith.constant dense<0.000000e+00> : vector<1x8x16xf32>
    %94 = tpu.matmul %89, %91, %cst_42 {dimension_numbers = #tpu.dot_dimension_numbers<[2], [2], [1], [1], [0, 0, 0, 1, 1, 1], [0], [0]>} : vector<1x8x32xbf16>, vector<1x16x32xbf16>, vector<1x8x16xf32> -> vector<1x8x16xf32>
    "tpu.trace_stop"() : () -> ()
    %95 = arith.addf %94, %30 : vector<1x8x16xf32>
    %cst_43 = arith.constant dense<0xFF800000> : vector<1x8xf32>
    %96 = vector.multi_reduction <maximumf>, %95, %cst_43 [2] : vector<1x8x16xf32> to vector<1x8xf32>
    %97 = vector.shape_cast %96 : vector<1x8xf32> to vector<1x8x1xf32>
    %98 = vector.broadcast %97 : vector<1x8x1xf32> to vector<1x8x16xf32>
    %99 = arith.subf %95, %98 : vector<1x8x16xf32>
    %100 = math.exp %99 : vector<1x8x16xf32>
    %cst_44 = arith.constant dense<0.000000e+00> : vector<1x8xf32>
    %101 = vector.multi_reduction <add>, %100, %cst_44 [2] : vector<1x8x16xf32> to vector<1x8xf32>
    %102 = vector.shape_cast %101 : vector<1x8xf32> to vector<1x8x1xf32>
    %103 = vector.broadcast %102 : vector<1x8x1xf32> to vector<1x8x16xf32>
    %104 = arith.divf %100, %103 : vector<1x8x16xf32>
    %105 = arith.truncf %104 : vector<1x8x16xf32> to vector<1x8x16xbf16>
    "tpu.trace_start"() <{level = 10 : i32, message = "bqk,bkd->bqd"}> : () -> ()
    %cst_45 = arith.constant dense<0.000000e+00> : vector<1x8x32xf32>
    %106 = tpu.matmul %105, %93, %cst_45 {dimension_numbers = #tpu.dot_dimension_numbers<[2], [1], [1], [2], [0, 0, 0, 1, 1, 2], [0], [0]>} : vector<1x8x16xbf16>, vector<1x16x32xbf16>, vector<1x8x32xf32> -> vector<1x8x32xf32>
    "tpu.trace_stop"() : () -> ()
    %107 = tpu.concatenate %49, %68, %87, %106 in 2 : vector<1x8x32xf32>, vector<1x8x32xf32>, vector<1x8x32xf32>, vector<1x8x32xf32> -> vector<1x8x128xf32>
    %108 = vector.shape_cast %107 : vector<1x8x128xf32> to vector<8x128xf32>
    %109 = arith.truncf %108 : vector<8x128xf32> to vector<8x128xbf16>
    %cst_46 = arith.constant dense<0.000000e+00> : vector<8x128xf32>
    %110 = tpu.matmul %109, %11, %cst_46 {dimension_numbers = #tpu.dot_dimension_numbers<[1], [0], [0], [1], [0, 0, 1, 1], [], []>} : vector<8x128xbf16>, vector<128x128xbf16>, vector<8x128xf32> -> vector<8x128xf32>
    %111 = vector.broadcast %12 : vector<1x128xf32> to vector<8x128xf32>
    %112 = arith.addf %110, %111 : vector<8x128xf32>
    %113 = arith.addf %112, %1 : vector<8x128xf32>
    %cst_47 = arith.constant dense<0.000000e+00> : vector<8xf32>
    %114 = vector.multi_reduction <add>, %113, %cst_47 [1] : vector<8x128xf32> to vector<8xf32>
    %115 = vector.shape_cast %114 : vector<8xf32> to vector<8x1xf32>
    %cst_48 = arith.constant 1.280000e+02 : f32
    %116 = vector.broadcast %cst_48 : f32 to vector<8x1xf32>
    %117 = arith.divf %115, %116 : vector<8x1xf32>
    %118 = vector.broadcast %117 : vector<8x1xf32> to vector<8x128xf32>
    %119 = arith.subf %113, %118 : vector<8x128xf32>
    %120 = arith.mulf %119, %119 : vector<8x128xf32>
    %cst_49 = arith.constant dense<0.000000e+00> : vector<8xf32>
    %121 = vector.multi_reduction <add>, %120, %cst_49 [1] : vector<8x128xf32> to vector<8xf32>
    %122 = vector.shape_cast %121 : vector<8xf32> to vector<8x1xf32>
    %cst_50 = arith.constant 1.280000e+02 : f32
    %123 = vector.broadcast %cst_50 : f32 to vector<8x1xf32>
    %124 = arith.divf %122, %123 : vector<8x1xf32>
    %125 = vector.broadcast %117 : vector<8x1xf32> to vector<8x128xf32>
    %126 = arith.subf %113, %125 : vector<8x128xf32>
    %cst_51 = arith.constant 9.99999996E-13 : f32
    %127 = vector.broadcast %cst_51 : f32 to vector<8x1xf32>
    %128 = arith.addf %124, %127 : vector<8x1xf32>
    %129 = math.rsqrt %128 : vector<8x1xf32>
    %130 = vector.broadcast %129 : vector<8x1xf32> to vector<8x128xf32>
    %131 = arith.mulf %126, %130 : vector<8x128xf32>
    %132 = vector.broadcast %13 : vector<1x128xf32> to vector<8x128xf32>
    %133 = arith.mulf %131, %132 : vector<8x128xf32>
    %134 = vector.broadcast %14 : vector<1x128xf32> to vector<8x128xf32>
    %135 = arith.addf %133, %134 : vector<8x128xf32>
    %c0_52 = arith.constant 0 : index
    %c0_53 = arith.constant 0 : index
    %c0_54 = arith.constant 0 : index
    %136 = vector.load %arg4[%c0_52, %c0_53, %c0_54] : memref<1x1x8xf32, #tpu.memory_space<vmem>>, vector<1x1x8xf32>
    %c0_55 = arith.constant 0 : index
    %c0_56 = arith.constant 0 : index
    %137 = vector.load %arg15[%c0_55, %c0_56] : memref<128x128xbf16, #tpu.memory_space<vmem>>, vector<128x128xbf16>
    %c0_57 = arith.constant 0 : index
    %c0_58 = arith.constant 0 : index
    %138 = vector.load %arg16[%c0_57, %c0_58] : memref<1x128xf32, #tpu.memory_space<vmem>>, vector<1x128xf32>
    %c0_59 = arith.constant 0 : index
    %c0_60 = arith.constant 0 : index
    %139 = vector.load %arg17[%c0_59, %c0_60] : memref<128x128xbf16, #tpu.memory_space<vmem>>, vector<128x128xbf16>
    %c0_61 = arith.constant 0 : index
    %c0_62 = arith.constant 0 : index
    %140 = vector.load %arg18[%c0_61, %c0_62] : memref<1x128xf32, #tpu.memory_space<vmem>>, vector<1x128xf32>
    %c0_63 = arith.constant 0 : index
    %c0_64 = arith.constant 0 : index
    %141 = vector.load %arg19[%c0_63, %c0_64] : memref<128x128xbf16, #tpu.memory_space<vmem>>, vector<128x128xbf16>
    %c0_65 = arith.constant 0 : index
    %c0_66 = arith.constant 0 : index
    %142 = vector.load %arg20[%c0_65, %c0_66] : memref<1x128xf32, #tpu.memory_space<vmem>>, vector<1x128xf32>
    %c0_67 = arith.constant 0 : index
    %c0_68 = arith.constant 0 : index
    %143 = vector.load %arg21[%c0_67, %c0_68] : memref<128x128xbf16, #tpu.memory_space<vmem>>, vector<128x128xbf16>
    %c0_69 = arith.constant 0 : index
    %c0_70 = arith.constant 0 : index
    %144 = vector.load %arg22[%c0_69, %c0_70] : memref<1x128xf32, #tpu.memory_space<vmem>>, vector<1x128xf32>
    %c0_71 = arith.constant 0 : index
    %c0_72 = arith.constant 0 : index
    %145 = vector.load %arg23[%c0_71, %c0_72] : memref<1x128xf32, #tpu.memory_space<vmem>>, vector<1x128xf32>
    %c0_73 = arith.constant 0 : index
    %c0_74 = arith.constant 0 : index
    %146 = vector.load %arg24[%c0_73, %c0_74] : memref<1x128xf32, #tpu.memory_space<vmem>>, vector<1x128xf32>
    %147 = arith.truncf %135 : vector<8x128xf32> to vector<8x128xbf16>
    %148 = arith.truncf %135 : vector<8x128xf32> to vector<8x128xbf16>
    %cst_75 = arith.constant dense<0.000000e+00> : vector<8x128xf32>
    %149 = tpu.matmul %147, %137, %cst_75 {dimension_numbers = #tpu.dot_dimension_numbers<[1], [0], [0], [1], [0, 0, 1, 1], [], []>} : vector<8x128xbf16>, vector<128x128xbf16>, vector<8x128xf32> -> vector<8x128xf32>
    %150 = vector.broadcast %138 : vector<1x128xf32> to vector<8x128xf32>
    %151 = arith.addf %149, %150 : vector<8x128xf32>
    %152 = arith.truncf %151 : vector<8x128xf32> to vector<8x128xbf16>
    %cst_76 = arith.constant dense<0.000000e+00> : vector<8x128xf32>
    %153 = tpu.matmul %148, %139, %cst_76 {dimension_numbers = #tpu.dot_dimension_numbers<[1], [0], [0], [1], [0, 0, 1, 1], [], []>} : vector<8x128xbf16>, vector<128x128xbf16>, vector<8x128xf32> -> vector<8x128xf32>
    %154 = vector.broadcast %140 : vector<1x128xf32> to vector<8x128xf32>
    %155 = arith.addf %153, %154 : vector<8x128xf32>
    %156 = arith.truncf %155 : vector<8x128xf32> to vector<8x128xbf16>
    %cst_77 = arith.constant dense<0.000000e+00> : vector<8x128xf32>
    %157 = tpu.matmul %148, %141, %cst_77 {dimension_numbers = #tpu.dot_dimension_numbers<[1], [0], [0], [1], [0, 0, 1, 1], [], []>} : vector<8x128xbf16>, vector<128x128xbf16>, vector<8x128xf32> -> vector<8x128xf32>
    %158 = vector.broadcast %142 : vector<1x128xf32> to vector<8x128xf32>
    %159 = arith.addf %157, %158 : vector<8x128xf32>
    %160 = arith.truncf %159 : vector<8x128xf32> to vector<8x128xbf16>
    %161 = vector.shape_cast %136 : vector<1x1x8xf32> to vector<1x1x8xf32>
    %162 = vector.broadcast %161 : vector<1x1x8xf32> to vector<1x8x8xf32>
    %163 = vector.extract_strided_slice %152 {offsets = [0, 0], sizes = [8, 32], strides = [1, 1]} : vector<8x128xbf16> to vector<8x32xbf16>
    %164 = vector.shape_cast %163 : vector<8x32xbf16> to vector<1x8x32xbf16>
    %165 = vector.extract_strided_slice %156 {offsets = [0, 0], sizes = [8, 32], strides = [1, 1]} : vector<8x128xbf16> to vector<8x32xbf16>
    %166 = vector.shape_cast %165 : vector<8x32xbf16> to vector<1x8x32xbf16>
    %167 = vector.extract_strided_slice %160 {offsets = [0, 0], sizes = [8, 32], strides = [1, 1]} : vector<8x128xbf16> to vector<8x32xbf16>
    %168 = vector.shape_cast %167 : vector<8x32xbf16> to vector<1x8x32xbf16>
    "tpu.trace_start"() <{level = 10 : i32, message = "bqd,bkd->bqk"}> : () -> ()
    %cst_78 = arith.constant dense<0.000000e+00> : vector<1x8x8xf32>
    %169 = tpu.matmul %164, %166, %cst_78 {dimension_numbers = #tpu.dot_dimension_numbers<[2], [2], [1], [1], [0, 0, 0, 1, 1, 1], [0], [0]>} : vector<1x8x32xbf16>, vector<1x8x32xbf16>, vector<1x8x8xf32> -> vector<1x8x8xf32>
    "tpu.trace_stop"() : () -> ()
    %170 = arith.addf %169, %162 : vector<1x8x8xf32>
    %cst_79 = arith.constant dense<0xFF800000> : vector<1x8xf32>
    %171 = vector.multi_reduction <maximumf>, %170, %cst_79 [2] : vector<1x8x8xf32> to vector<1x8xf32>
    %172 = vector.shape_cast %171 : vector<1x8xf32> to vector<1x8x1xf32>
    %173 = vector.broadcast %172 : vector<1x8x1xf32> to vector<1x8x8xf32>
    %174 = arith.subf %170, %173 : vector<1x8x8xf32>
    %175 = math.exp %174 : vector<1x8x8xf32>
    %cst_80 = arith.constant dense<0.000000e+00> : vector<1x8xf32>
    %176 = vector.multi_reduction <add>, %175, %cst_80 [2] : vector<1x8x8xf32> to vector<1x8xf32>
    %177 = vector.shape_cast %176 : vector<1x8xf32> to vector<1x8x1xf32>
    %178 = vector.broadcast %177 : vector<1x8x1xf32> to vector<1x8x8xf32>
    %179 = arith.divf %175, %178 : vector<1x8x8xf32>
    %180 = arith.truncf %179 : vector<1x8x8xf32> to vector<1x8x8xbf16>
    "tpu.trace_start"() <{level = 10 : i32, message = "bqk,bkd->bqd"}> : () -> ()
    %cst_81 = arith.constant dense<0.000000e+00> : vector<1x8x32xf32>
    %181 = tpu.matmul %180, %168, %cst_81 {dimension_numbers = #tpu.dot_dimension_numbers<[2], [1], [1], [2], [0, 0, 0, 1, 1, 2], [0], [0]>} : vector<1x8x8xbf16>, vector<1x8x32xbf16>, vector<1x8x32xf32> -> vector<1x8x32xf32>
    "tpu.trace_stop"() : () -> ()
    %182 = vector.extract_strided_slice %152 {offsets = [0, 32], sizes = [8, 32], strides = [1, 1]} : vector<8x128xbf16> to vector<8x32xbf16>
    %183 = vector.shape_cast %182 : vector<8x32xbf16> to vector<1x8x32xbf16>
    %184 = vector.extract_strided_slice %156 {offsets = [0, 32], sizes = [8, 32], strides = [1, 1]} : vector<8x128xbf16> to vector<8x32xbf16>
    %185 = vector.shape_cast %184 : vector<8x32xbf16> to vector<1x8x32xbf16>
    %186 = vector.extract_strided_slice %160 {offsets = [0, 32], sizes = [8, 32], strides = [1, 1]} : vector<8x128xbf16> to vector<8x32xbf16>
    %187 = vector.shape_cast %186 : vector<8x32xbf16> to vector<1x8x32xbf16>
    "tpu.trace_start"() <{level = 10 : i32, message = "bqd,bkd->bqk"}> : () -> ()
    %cst_82 = arith.constant dense<0.000000e+00> : vector<1x8x8xf32>
    %188 = tpu.matmul %183, %185, %cst_82 {dimension_numbers = #tpu.dot_dimension_numbers<[2], [2], [1], [1], [0, 0, 0, 1, 1, 1], [0], [0]>} : vector<1x8x32xbf16>, vector<1x8x32xbf16>, vector<1x8x8xf32> -> vector<1x8x8xf32>
    "tpu.trace_stop"() : () -> ()
    %189 = arith.addf %188, %162 : vector<1x8x8xf32>
    %cst_83 = arith.constant dense<0xFF800000> : vector<1x8xf32>
    %190 = vector.multi_reduction <maximumf>, %189, %cst_83 [2] : vector<1x8x8xf32> to vector<1x8xf32>
    %191 = vector.shape_cast %190 : vector<1x8xf32> to vector<1x8x1xf32>
    %192 = vector.broadcast %191 : vector<1x8x1xf32> to vector<1x8x8xf32>
    %193 = arith.subf %189, %192 : vector<1x8x8xf32>
    %194 = math.exp %193 : vector<1x8x8xf32>
    %cst_84 = arith.constant dense<0.000000e+00> : vector<1x8xf32>
    %195 = vector.multi_reduction <add>, %194, %cst_84 [2] : vector<1x8x8xf32> to vector<1x8xf32>
    %196 = vector.shape_cast %195 : vector<1x8xf32> to vector<1x8x1xf32>
    %197 = vector.broadcast %196 : vector<1x8x1xf32> to vector<1x8x8xf32>
    %198 = arith.divf %194, %197 : vector<1x8x8xf32>
    %199 = arith.truncf %198 : vector<1x8x8xf32> to vector<1x8x8xbf16>
    "tpu.trace_start"() <{level = 10 : i32, message = "bqk,bkd->bqd"}> : () -> ()
    %cst_85 = arith.constant dense<0.000000e+00> : vector<1x8x32xf32>
    %200 = tpu.matmul %199, %187, %cst_85 {dimension_numbers = #tpu.dot_dimension_numbers<[2], [1], [1], [2], [0, 0, 0, 1, 1, 2], [0], [0]>} : vector<1x8x8xbf16>, vector<1x8x32xbf16>, vector<1x8x32xf32> -> vector<1x8x32xf32>
    "tpu.trace_stop"() : () -> ()
    %201 = vector.extract_strided_slice %152 {offsets = [0, 64], sizes = [8, 32], strides = [1, 1]} : vector<8x128xbf16> to vector<8x32xbf16>
    %202 = vector.shape_cast %201 : vector<8x32xbf16> to vector<1x8x32xbf16>
    %203 = vector.extract_strided_slice %156 {offsets = [0, 64], sizes = [8, 32], strides = [1, 1]} : vector<8x128xbf16> to vector<8x32xbf16>
    %204 = vector.shape_cast %203 : vector<8x32xbf16> to vector<1x8x32xbf16>
    %205 = vector.extract_strided_slice %160 {offsets = [0, 64], sizes = [8, 32], strides = [1, 1]} : vector<8x128xbf16> to vector<8x32xbf16>
    %206 = vector.shape_cast %205 : vector<8x32xbf16> to vector<1x8x32xbf16>
    "tpu.trace_start"() <{level = 10 : i32, message = "bqd,bkd->bqk"}> : () -> ()
    %cst_86 = arith.constant dense<0.000000e+00> : vector<1x8x8xf32>
    %207 = tpu.matmul %202, %204, %cst_86 {dimension_numbers = #tpu.dot_dimension_numbers<[2], [2], [1], [1], [0, 0, 0, 1, 1, 1], [0], [0]>} : vector<1x8x32xbf16>, vector<1x8x32xbf16>, vector<1x8x8xf32> -> vector<1x8x8xf32>
    "tpu.trace_stop"() : () -> ()
    %208 = arith.addf %207, %162 : vector<1x8x8xf32>
    %cst_87 = arith.constant dense<0xFF800000> : vector<1x8xf32>
    %209 = vector.multi_reduction <maximumf>, %208, %cst_87 [2] : vector<1x8x8xf32> to vector<1x8xf32>
    %210 = vector.shape_cast %209 : vector<1x8xf32> to vector<1x8x1xf32>
    %211 = vector.broadcast %210 : vector<1x8x1xf32> to vector<1x8x8xf32>
    %212 = arith.subf %208, %211 : vector<1x8x8xf32>
    %213 = math.exp %212 : vector<1x8x8xf32>
    %cst_88 = arith.constant dense<0.000000e+00> : vector<1x8xf32>
    %214 = vector.multi_reduction <add>, %213, %cst_88 [2] : vector<1x8x8xf32> to vector<1x8xf32>
    %215 = vector.shape_cast %214 : vector<1x8xf32> to vector<1x8x1xf32>
    %216 = vector.broadcast %215 : vector<1x8x1xf32> to vector<1x8x8xf32>
    %217 = arith.divf %213, %216 : vector<1x8x8xf32>
    %218 = arith.truncf %217 : vector<1x8x8xf32> to vector<1x8x8xbf16>
    "tpu.trace_start"() <{level = 10 : i32, message = "bqk,bkd->bqd"}> : () -> ()
    %cst_89 = arith.constant dense<0.000000e+00> : vector<1x8x32xf32>
    %219 = tpu.matmul %218, %206, %cst_89 {dimension_numbers = #tpu.dot_dimension_numbers<[2], [1], [1], [2], [0, 0, 0, 1, 1, 2], [0], [0]>} : vector<1x8x8xbf16>, vector<1x8x32xbf16>, vector<1x8x32xf32> -> vector<1x8x32xf32>
    "tpu.trace_stop"() : () -> ()
    %220 = vector.extract_strided_slice %152 {offsets = [0, 96], sizes = [8, 32], strides = [1, 1]} : vector<8x128xbf16> to vector<8x32xbf16>
    %221 = vector.shape_cast %220 : vector<8x32xbf16> to vector<1x8x32xbf16>
    %222 = vector.extract_strided_slice %156 {offsets = [0, 96], sizes = [8, 32], strides = [1, 1]} : vector<8x128xbf16> to vector<8x32xbf16>
    %223 = vector.shape_cast %222 : vector<8x32xbf16> to vector<1x8x32xbf16>
    %224 = vector.extract_strided_slice %160 {offsets = [0, 96], sizes = [8, 32], strides = [1, 1]} : vector<8x128xbf16> to vector<8x32xbf16>
    %225 = vector.shape_cast %224 : vector<8x32xbf16> to vector<1x8x32xbf16>
    "tpu.trace_start"() <{level = 10 : i32, message = "bqd,bkd->bqk"}> : () -> ()
    %cst_90 = arith.constant dense<0.000000e+00> : vector<1x8x8xf32>
    %226 = tpu.matmul %221, %223, %cst_90 {dimension_numbers = #tpu.dot_dimension_numbers<[2], [2], [1], [1], [0, 0, 0, 1, 1, 1], [0], [0]>} : vector<1x8x32xbf16>, vector<1x8x32xbf16>, vector<1x8x8xf32> -> vector<1x8x8xf32>
    "tpu.trace_stop"() : () -> ()
    %227 = arith.addf %226, %162 : vector<1x8x8xf32>
    %cst_91 = arith.constant dense<0xFF800000> : vector<1x8xf32>
    %228 = vector.multi_reduction <maximumf>, %227, %cst_91 [2] : vector<1x8x8xf32> to vector<1x8xf32>
    %229 = vector.shape_cast %228 : vector<1x8xf32> to vector<1x8x1xf32>
    %230 = vector.broadcast %229 : vector<1x8x1xf32> to vector<1x8x8xf32>
    %231 = arith.subf %227, %230 : vector<1x8x8xf32>
    %232 = math.exp %231 : vector<1x8x8xf32>
    %cst_92 = arith.constant dense<0.000000e+00> : vector<1x8xf32>
    %233 = vector.multi_reduction <add>, %232, %cst_92 [2] : vector<1x8x8xf32> to vector<1x8xf32>
    %234 = vector.shape_cast %233 : vector<1x8xf32> to vector<1x8x1xf32>
    %235 = vector.broadcast %234 : vector<1x8x1xf32> to vector<1x8x8xf32>
    %236 = arith.divf %232, %235 : vector<1x8x8xf32>
    %237 = arith.truncf %236 : vector<1x8x8xf32> to vector<1x8x8xbf16>
    "tpu.trace_start"() <{level = 10 : i32, message = "bqk,bkd->bqd"}> : () -> ()
    %cst_93 = arith.constant dense<0.000000e+00> : vector<1x8x32xf32>
    %238 = tpu.matmul %237, %225, %cst_93 {dimension_numbers = #tpu.dot_dimension_numbers<[2], [1], [1], [2], [0, 0, 0, 1, 1, 2], [0], [0]>} : vector<1x8x8xbf16>, vector<1x8x32xbf16>, vector<1x8x32xf32> -> vector<1x8x32xf32>
    "tpu.trace_stop"() : () -> ()
    %239 = tpu.concatenate %181, %200, %219, %238 in 2 : vector<1x8x32xf32>, vector<1x8x32xf32>, vector<1x8x32xf32>, vector<1x8x32xf32> -> vector<1x8x128xf32>
    %240 = vector.shape_cast %239 : vector<1x8x128xf32> to vector<8x128xf32>
    %241 = arith.truncf %240 : vector<8x128xf32> to vector<8x128xbf16>
    %cst_94 = arith.constant dense<0.000000e+00> : vector<8x128xf32>
    %242 = tpu.matmul %241, %143, %cst_94 {dimension_numbers = #tpu.dot_dimension_numbers<[1], [0], [0], [1], [0, 0, 1, 1], [], []>} : vector<8x128xbf16>, vector<128x128xbf16>, vector<8x128xf32> -> vector<8x128xf32>
    %243 = vector.broadcast %144 : vector<1x128xf32> to vector<8x128xf32>
    %244 = arith.addf %242, %243 : vector<8x128xf32>
    %245 = arith.addf %244, %135 : vector<8x128xf32>
    %cst_95 = arith.constant dense<0.000000e+00> : vector<8xf32>
    %246 = vector.multi_reduction <add>, %245, %cst_95 [1] : vector<8x128xf32> to vector<8xf32>
    %247 = vector.shape_cast %246 : vector<8xf32> to vector<8x1xf32>
    %cst_96 = arith.constant 1.280000e+02 : f32
    %248 = vector.broadcast %cst_96 : f32 to vector<8x1xf32>
    %249 = arith.divf %247, %248 : vector<8x1xf32>
    %250 = vector.broadcast %249 : vector<8x1xf32> to vector<8x128xf32>
    %251 = arith.subf %245, %250 : vector<8x128xf32>
    %252 = arith.mulf %251, %251 : vector<8x128xf32>
    %cst_97 = arith.constant dense<0.000000e+00> : vector<8xf32>
    %253 = vector.multi_reduction <add>, %252, %cst_97 [1] : vector<8x128xf32> to vector<8xf32>
    %254 = vector.shape_cast %253 : vector<8xf32> to vector<8x1xf32>
    %cst_98 = arith.constant 1.280000e+02 : f32
    %255 = vector.broadcast %cst_98 : f32 to vector<8x1xf32>
    %256 = arith.divf %254, %255 : vector<8x1xf32>
    %257 = vector.broadcast %249 : vector<8x1xf32> to vector<8x128xf32>
    %258 = arith.subf %245, %257 : vector<8x128xf32>
    %cst_99 = arith.constant 9.99999996E-13 : f32
    %259 = vector.broadcast %cst_99 : f32 to vector<8x1xf32>
    %260 = arith.addf %256, %259 : vector<8x1xf32>
    %261 = math.rsqrt %260 : vector<8x1xf32>
    %262 = vector.broadcast %261 : vector<8x1xf32> to vector<8x128xf32>
    %263 = arith.mulf %258, %262 : vector<8x128xf32>
    %264 = vector.broadcast %145 : vector<1x128xf32> to vector<8x128xf32>
    %265 = arith.mulf %263, %264 : vector<8x128xf32>
    %266 = vector.broadcast %146 : vector<1x128xf32> to vector<8x128xf32>
    %267 = arith.addf %265, %266 : vector<8x128xf32>
    %c0_100 = arith.constant 0 : index
    %c0_101 = arith.constant 0 : index
    %268 = vector.load %arg25[%c0_100, %c0_101] : memref<128x256xbf16, #tpu.memory_space<vmem>>, vector<128x256xbf16>
    %c0_102 = arith.constant 0 : index
    %c0_103 = arith.constant 0 : index
    %269 = vector.load %arg26[%c0_102, %c0_103] : memref<1x256xf32, #tpu.memory_space<vmem>>, vector<1x256xf32>
    %c0_104 = arith.constant 0 : index
    %c0_105 = arith.constant 0 : index
    %270 = vector.load %arg27[%c0_104, %c0_105] : memref<256x128xbf16, #tpu.memory_space<vmem>>, vector<256x128xbf16>
    %c0_106 = arith.constant 0 : index
    %c0_107 = arith.constant 0 : index
    %271 = vector.load %arg28[%c0_106, %c0_107] : memref<1x128xf32, #tpu.memory_space<vmem>>, vector<1x128xf32>
    %c0_108 = arith.constant 0 : index
    %c0_109 = arith.constant 0 : index
    %272 = vector.load %arg29[%c0_108, %c0_109] : memref<1x128xf32, #tpu.memory_space<vmem>>, vector<1x128xf32>
    %c0_110 = arith.constant 0 : index
    %c0_111 = arith.constant 0 : index
    %273 = vector.load %arg30[%c0_110, %c0_111] : memref<1x128xf32, #tpu.memory_space<vmem>>, vector<1x128xf32>
    %274 = arith.truncf %267 : vector<8x128xf32> to vector<8x128xbf16>
    %cst_112 = arith.constant dense<0.000000e+00> : vector<8x256xf32>
    %275 = tpu.matmul %274, %268, %cst_112 {dimension_numbers = #tpu.dot_dimension_numbers<[1], [0], [0], [1], [0, 0, 1, 1], [], []>} : vector<8x128xbf16>, vector<128x256xbf16>, vector<8x256xf32> -> vector<8x256xf32>
    %276 = vector.broadcast %269 : vector<1x256xf32> to vector<8x256xf32>
    %277 = arith.addf %275, %276 : vector<8x256xf32>
    %cst_113 = arith.constant 5.000000e-01 : f32
    %278 = vector.broadcast %cst_113 : f32 to vector<8x256xf32>
    %279 = arith.mulf %278, %277 : vector<8x256xf32>
    %cst_114 = arith.constant 4.471500e-02 : f32
    %280 = vector.broadcast %cst_114 : f32 to vector<8x256xf32>
    %281 = arith.mulf %280, %277 : vector<8x256xf32>
    %282 = arith.mulf %281, %277 : vector<8x256xf32>
    %283 = arith.mulf %282, %277 : vector<8x256xf32>
    %284 = arith.addf %277, %283 : vector<8x256xf32>
    %cst_115 = arith.constant 0.797884583 : f32
    %285 = vector.broadcast %cst_115 : f32 to vector<8x256xf32>
    %286 = arith.mulf %285, %284 : vector<8x256xf32>
    %287 = math.tanh %286 : vector<8x256xf32>
    %cst_116 = arith.constant 1.000000e+00 : f32
    %288 = vector.broadcast %cst_116 : f32 to vector<8x256xf32>
    %289 = arith.addf %288, %287 : vector<8x256xf32>
    %290 = arith.mulf %279, %289 : vector<8x256xf32>
    %291 = arith.truncf %290 : vector<8x256xf32> to vector<8x256xbf16>
    %cst_117 = arith.constant dense<0.000000e+00> : vector<8x128xf32>
    %292 = tpu.matmul %291, %270, %cst_117 {dimension_numbers = #tpu.dot_dimension_numbers<[1], [0], [0], [1], [0, 0, 1, 1], [], []>} : vector<8x256xbf16>, vector<256x128xbf16>, vector<8x128xf32> -> vector<8x128xf32>
    %293 = vector.broadcast %271 : vector<1x128xf32> to vector<8x128xf32>
    %294 = arith.addf %292, %293 : vector<8x128xf32>
    %295 = arith.addf %294, %267 : vector<8x128xf32>
    %cst_118 = arith.constant dense<0.000000e+00> : vector<8xf32>
    %296 = vector.multi_reduction <add>, %295, %cst_118 [1] : vector<8x128xf32> to vector<8xf32>
    %297 = vector.shape_cast %296 : vector<8xf32> to vector<8x1xf32>
    %cst_119 = arith.constant 1.280000e+02 : f32
    %298 = vector.broadcast %cst_119 : f32 to vector<8x1xf32>
    %299 = arith.divf %297, %298 : vector<8x1xf32>
    %300 = vector.broadcast %299 : vector<8x1xf32> to vector<8x128xf32>
    %301 = arith.subf %295, %300 : vector<8x128xf32>
    %302 = arith.mulf %301, %301 : vector<8x128xf32>
    %cst_120 = arith.constant dense<0.000000e+00> : vector<8xf32>
    %303 = vector.multi_reduction <add>, %302, %cst_120 [1] : vector<8x128xf32> to vector<8xf32>
    %304 = vector.shape_cast %303 : vector<8xf32> to vector<8x1xf32>
    %cst_121 = arith.constant 1.280000e+02 : f32
    %305 = vector.broadcast %cst_121 : f32 to vector<8x1xf32>
    %306 = arith.divf %304, %305 : vector<8x1xf32>
    %307 = vector.broadcast %299 : vector<8x1xf32> to vector<8x128xf32>
    %308 = arith.subf %295, %307 : vector<8x128xf32>
    %cst_122 = arith.constant 9.99999996E-13 : f32
    %309 = vector.broadcast %cst_122 : f32 to vector<8x1xf32>
    %310 = arith.addf %306, %309 : vector<8x1xf32>
    %311 = math.rsqrt %310 : vector<8x1xf32>
    %312 = vector.broadcast %311 : vector<8x1xf32> to vector<8x128xf32>
    %313 = arith.mulf %308, %312 : vector<8x128xf32>
    %314 = vector.broadcast %272 : vector<1x128xf32> to vector<8x128xf32>
    %315 = arith.mulf %313, %314 : vector<8x128xf32>
    %316 = vector.broadcast %273 : vector<1x128xf32> to vector<8x128xf32>
    %317 = arith.addf %315, %316 : vector<8x128xf32>
    %318 = vector.shape_cast %317 : vector<8x128xf32> to vector<1x8x128xf32>
    %c0_123 = arith.constant 0 : index
    %c0_124 = arith.constant 0 : index
    %c0_125 = arith.constant 0 : index
    %319 = vector.load %arg31[%c0_123, %c0_124, %c0_125] : memref<1x8x128xf32, #tpu.memory_space<vmem>>, vector<1x8x128xf32>
    tpu.vector_store %arg31[%c0_123, %c0_124, %c0_125], %318 {strides = array<i32>} : memref<1x8x128xf32, #tpu.memory_space<vmem>>, vector<1x8x128xf32>,
    return
  }
  func.func @transform_0(%arg0: i32) -> (i32, i32, i32) {
    %c0_i32 = arith.constant 0 : i32
    %c0_i32_0 = arith.constant 0 : i32
    %c0_i32_1 = arith.constant 0 : i32
    return %arg0, %c0_i32, %c0_i32_0 : i32, i32, i32
  }
  func.func @transform_1(%arg0: i32) -> (i32, i32, i32) {
    %c0_i32 = arith.constant 0 : i32
    %c0_i32_0 = arith.constant 0 : i32
    %c0_i32_1 = arith.constant 0 : i32
    return %arg0, %c0_i32, %c0_i32_0 : i32, i32, i32
  }
  func.func @transform_2(%arg0: i32) -> (i32, i32, i32) {
    %c0_i32 = arith.constant 0 : i32
    %c0_i32_0 = arith.constant 0 : i32
    %c0_i32_1 = arith.constant 0 : i32
    return %arg0, %c0_i32, %c0_i32_0 : i32, i32, i32
  }
  func.func @transform_3(%arg0: i32) -> (i32, i32, i32) {
    %c0_i32 = arith.constant 0 : i32
    %c0_i32_0 = arith.constant 0 : i32
    %c0_i32_1 = arith.constant 0 : i32
    return %arg0, %c0_i32, %c0_i32_0 : i32, i32, i32
  }
  func.func @transform_4(%arg0: i32) -> (i32, i32) {
    %c0_i32 = arith.constant 0 : i32
    %c0_i32_0 = arith.constant 0 : i32
    %c0_i32_1 = arith.constant 0 : i32
    return %c0_i32, %c0_i32_0 : i32, i32
  }
  func.func @transform_5(%arg0: i32) -> (i32, i32) {
    %c0_i32 = arith.constant 0 : i32
    %c0_i32_0 = arith.constant 0 : i32
    %c0_i32_1 = arith.constant 0 : i32
    return %c0_i32, %c0_i32_0 : i32, i32
  }
  func.func @transform_6(%arg0: i32) -> (i32, i32) {
    %c0_i32 = arith.constant 0 : i32
    %c0_i32_0 = arith.constant 0 : i32
    %c0_i32_1 = arith.constant 0 : i32
    return %c0_i32, %c0_i32_0 : i32, i32
  }
  func.func @transform_7(%arg0: i32) -> (i32, i32) {
    %c0_i32 = arith.constant 0 : i32
    %c0_i32_0 = arith.constant 0 : i32
    %c0_i32_1 = arith.constant 0 : i32
    return %c0_i32, %c0_i32_0 : i32, i32
  }
  func.func @transform_8(%arg0: i32) -> (i32, i32) {
    %c0_i32 = arith.constant 0 : i32
    %c0_i32_0 = arith.constant 0 : i32
    %c0_i32_1 = arith.constant 0 : i32
    return %c0_i32, %c0_i32_0 : i32, i32
  }
  func.func @transform_9(%arg0: i32) -> (i32, i32) {
    %c0_i32 = arith.constant 0 : i32
    %c0_i32_0 = arith.constant 0 : i32
    %c0_i32_1 = arith.constant 0 : i32
    return %c0_i32, %c0_i32_0 : i32, i32
  }
  func.func @transform_10(%arg0: i32) -> (i32, i32) {
    %c0_i32 = arith.constant 0 : i32
    %c0_i32_0 = arith.constant 0 : i32
    %c0_i32_1 = arith.constant 0 : i32
    return %c0_i32, %c0_i32_0 : i32, i32
  }
  func.func @transform_11(%arg0: i32) -> (i32, i32) {
    %c0_i32 = arith.constant 0 : i32
    %c0_i32_0 = arith.constant 0 : i32
    %c0_i32_1 = arith.constant 0 : i32
    return %c0_i32, %c0_i32_0 : i32, i32
  }
  func.func @transform_12(%arg0: i32) -> (i32, i32) {
    %c0_i32 = arith.constant 0 : i32
    %c0_i32_0 = arith.constant 0 : i32
    %c0_i32_1 = arith.constant 0 : i32
    return %c0_i32, %c0_i32_0 : i32, i32
  }
  func.func @transform_13(%arg0: i32) -> (i32, i32) {
    %c0_i32 = arith.constant 0 : i32
    %c0_i32_0 = arith.constant 0 : i32
    %c0_i32_1 = arith.constant 0 : i32
    return %c0_i32, %c0_i32_0 : i32, i32
  }
  func.func @transform_14(%arg0: i32) -> (i32, i32) {
    %c0_i32 = arith.constant 0 : i32
    %c0_i32_0 = arith.constant 0 : i32
    %c0_i32_1 = arith.constant 0 : i32
    return %c0_i32, %c0_i32_0 : i32, i32
  }
  func.func @transform_15(%arg0: i32) -> (i32, i32) {
    %c0_i32 = arith.constant 0 : i32
    %c0_i32_0 = arith.constant 0 : i32
    %c0_i32_1 = arith.constant 0 : i32
    return %c0_i32, %c0_i32_0 : i32, i32
  }
  func.func @transform_16(%arg0: i32) -> (i32, i32) {
    %c0_i32 = arith.constant 0 : i32
    %c0_i32_0 = arith.constant 0 : i32
    %c0_i32_1 = arith.constant 0 : i32
    return %c0_i32, %c0_i32_0 : i32, i32
  }
  func.func @transform_17(%arg0: i32) -> (i32, i32) {
    %c0_i32 = arith.constant 0 : i32
    %c0_i32_0 = arith.constant 0 : i32
    %c0_i32_1 = arith.constant 0 : i32
    return %c0_i32, %c0_i32_0 : i32, i32
  }
  func.func @transform_18(%arg0: i32) -> (i32, i32) {
    %c0_i32 = arith.constant 0 : i32
    %c0_i32_0 = arith.constant 0 : i32
    %c0_i32_1 = arith.constant 0 : i32
    return %c0_i32, %c0_i32_0 : i32, i32
  }
  func.func @transform_19(%arg0: i32) -> (i32, i32) {
    %c0_i32 = arith.constant 0 : i32
    %c0_i32_0 = arith.constant 0 : i32
    %c0_i32_1 = arith.constant 0 : i32
    return %c0_i32, %c0_i32_0 : i32, i32
  }
  func.func @transform_20(%arg0: i32) -> (i32, i32) {
    %c0_i32 = arith.constant 0 : i32
    %c0_i32_0 = arith.constant 0 : i32
    %c0_i32_1 = arith.constant 0 : i32
    return %c0_i32, %c0_i32_0 : i32, i32
  }
  func.func @transform_21(%arg0: i32) -> (i32, i32) {
    %c0_i32 = arith.constant 0 : i32
    %c0_i32_0 = arith.constant 0 : i32
    %c0_i32_1 = arith.constant 0 : i32
    return %c0_i32, %c0_i32_0 : i32, i32
  }
  func.func @transform_22(%arg0: i32) -> (i32, i32) {
    %c0_i32 = arith.constant 0 : i32
    %c0_i32_0 = arith.constant 0 : i32
    %c0_i32_1 = arith.constant 0 : i32
    return %c0_i32, %c0_i32_0 : i32, i32
  }
  func.func @transform_23(%arg0: i32) -> (i32, i32) {
    %c0_i32 = arith.constant 0 : i32
    %c0_i32_0 = arith.constant 0 : i32
    %c0_i32_1 = arith.constant 0 : i32
    return %c0_i32, %c0_i32_0 : i32, i32
  }
  func.func @transform_24(%arg0: i32) -> (i32, i32) {
    %c0_i32 = arith.constant 0 : i32
    %c0_i32_0 = arith.constant 0 : i32
    %c0_i32_1 = arith.constant 0 : i32
    return %c0_i32, %c0_i32_0 : i32, i32
  }
  func.func @transform_25(%arg0: i32) -> (i32, i32) {
    %c0_i32 = arith.constant 0 : i32
    %c0_i32_0 = arith.constant 0 : i32
    %c0_i32_1 = arith.constant 0 : i32
    return %c0_i32, %c0_i32_0 : i32, i32
  }
  func.func @transform_26(%arg0: i32) -> (i32, i32) {
    %c0_i32 = arith.constant 0 : i32
    %c0_i32_0 = arith.constant 0 : i32
    %c0_i32_1 = arith.constant 0 : i32
    return %c0_i32, %c0_i32_0 : i32, i32
  }
  func.func @transform_27(%arg0: i32) -> (i32, i32) {
    %c0_i32 = arith.constant 0 : i32
    %c0_i32_0 = arith.constant 0 : i32
    %c0_i32_1 = arith.constant 0 : i32
    return %c0_i32, %c0_i32_0 : i32, i32
  }
  func.func @transform_28(%arg0: i32) -> (i32, i32) {
    %c0_i32 = arith.constant 0 : i32
    %c0_i32_0 = arith.constant 0 : i32
    %c0_i32_1 = arith.constant 0 : i32
    return %c0_i32, %c0_i32_0 : i32, i32
  }
  func.func @transform_29(%arg0: i32) -> (i32, i32) {
    %c0_i32 = arith.constant 0 : i32
    %c0_i32_0 = arith.constant 0 : i32
    %c0_i32_1 = arith.constant 0 : i32
    return %c0_i32, %c0_i32_0 : i32, i32
  }
  func.func @transform_30(%arg0: i32) -> (i32, i32, i32) {
    %c0_i32 = arith.constant 0 : i32
    %c0_i32_0 = arith.constant 0 : i32
    %c0_i32_1 = arith.constant 0 : i32
    return %arg0, %c0_i32, %c0_i32_0 : i32, i32, i32
  }
}

</mosaic_0001>

<llo_original>
// kernel: tpu_custom_call.1
$region0: #{tpu_custom_call.1}
  #allocation0 [shape = 'u32[]', space=smem, size = 0x4, offset = 0x4, fixed_abs, tag = 'smem constant byte address 0x4 - core index']
  #allocation1 [shape = 'u32[144,128]{1,0:T(1,128)}', space=vmem, size = 0x12000, scoped, tag = 'internal scratch']
  %s0 = inlined_call_operand.smem [shape: u32[31], index: -1, kind: input, shape index: {}]
  %s1 = sld [smem:[%s0]]
  %s2 = scalar_lea.smem %s0, 1
  %s3 = sld [smem:[%s2]]
  %s4 = scalar_lea.smem %s0, 2
  %s5 = sld [smem:[%s4]]
  %s6 = scalar_lea.smem %s0, 3
  %s7 = sld [smem:[%s6]]
  %s8 = scalar_lea.smem %s0, 4
  %s9 = sld [smem:[%s8]]
  %s10 = scalar_lea.smem %s0, 5
  %s11 = sld [smem:[%s10]]
  %s12 = scalar_lea.smem %s0, 6
  %s13 = sld [smem:[%s12]]
  %s14 = scalar_lea.smem %s0, 7
  %s15 = sld [smem:[%s14]]
  %s16 = scalar_lea.smem %s0, 8
  %s17 = sld [smem:[%s16]]
  %s18 = scalar_lea.smem %s0, 9
  %s19 = sld [smem:[%s18]]
  %s20 = scalar_lea.smem %s0, 10
  %s21 = sld [smem:[%s20]]
  %s22 = scalar_lea.smem %s0, 11
  %s23 = sld [smem:[%s22]]
  %s24 = scalar_lea.smem %s0, 12
  %s25 = sld [smem:[%s24]]
  %s26 = scalar_lea.smem %s0, 13
  %s27 = sld [smem:[%s26]]
  %s28 = scalar_lea.smem %s0, 14
  %s29 = sld [smem:[%s28]]
  %s30 = scalar_lea.smem %s0, 15
  %s31 = sld [smem:[%s30]]
  %s32 = scalar_lea.smem %s0, 16
  %s33 = sld [smem:[%s32]]
  %s34 = scalar_lea.smem %s0, 17
  %s35 = sld [smem:[%s34]]
  %s36 = scalar_lea.smem %s0, 18
  %s37 = sld [smem:[%s36]]
  %s38 = scalar_lea.smem %s0, 19
  %s39 = sld [smem:[%s38]]
  %s40 = scalar_lea.smem %s0, 20
  %s41 = sld [smem:[%s40]]
  %s42 = scalar_lea.smem %s0, 21
  %s43 = sld [smem:[%s42]]
  %s44 = scalar_lea.smem %s0, 22
  %s45 = sld [smem:[%s44]]
  %s46 = scalar_lea.smem %s0, 23
  %s47 = sld [smem:[%s46]]
  %s48 = scalar_lea.smem %s0, 24
  %s49 = sld [smem:[%s48]]
  %s50 = scalar_lea.smem %s0, 25
  %s51 = sld [smem:[%s50]]
  %s52 = scalar_lea.smem %s0, 26
  %s53 = sld [smem:[%s52]]
  %s54 = scalar_lea.smem %s0, 27
  %s55 = sld [smem:[%s54]]
  %s56 = scalar_lea.smem %s0, 28
  %s57 = sld [smem:[%s56]]
  %s58 = scalar_lea.smem %s0, 29
  %s59 = sld [smem:[%s58]]
  %s60 = scalar_lea.smem %s0, 30
  %s61 = sld [smem:[%s60]]
  %s62 = sld [smem:[#allocation0]]
  $region273: #{tpu_custom_call.1} parent=0
    _
  %s64 = ssub.s32 1, %s62
  %s65 = scalar_select 0, %s64, %s62
  $region1: #{tpu_custom_call.1} parent=0
    #allocation2 [shape = 'u8[8192]{0}', space=vmem, size = 0x2000, scoped, tag = 'input window, operand 0']
    #allocation3 [shape = 's32[2]{0}', space=sflag, size = 0x8, scoped, tag = 'scoped memory for tpu_custom_call.1']
    #allocation4 [shape = 's32[2]{0}', space=sflag, size = 0x8, scoped, tag = 'scoped memory for tpu_custom_call.1']
    #allocation5 [shape = 'u8[16384]{0}', space=vmem, size = 0x4000, scoped, tag = 'input window, operand 1']
    #allocation6 [shape = 's32[2]{0}', space=sflag, size = 0x8, scoped, tag = 'scoped memory for tpu_custom_call.1']
    #allocation7 [shape = 'u8[1024]{0}', space=vmem, size = 0x400, scoped, tag = 'input window, operand 2']
    #allocation8 [shape = 'u8[1024]{0}', space=vmem, size = 0x400, scoped, tag = 'input window, operand 3']
    #allocation9 [shape = 's32[2]{0}', space=sflag, size = 0x8, scoped, tag = 'scoped memory for tpu_custom_call.1']
    #allocation10 [shape = 'u8[32768]{0}', space=vmem, size = 0x8000, scoped, tag = 'input window, operand 4, single buffered']
    #allocation11 [shape = 'u8[512]{0}', space=vmem, size = 0x400, scoped, tag = 'input window, operand 5, single buffered']
    #allocation12 [shape = 's32[1]{0}', space=sflag, size = 0x4, scoped, tag = 'scoped memory for tpu_custom_call.1']
    #allocation13 [shape = 'u8[32768]{0}', space=vmem, size = 0x8000, scoped, tag = 'input window, operand 6, single buffered']
    #allocation14 [shape = 'u8[512]{0}', space=vmem, size = 0x400, scoped, tag = 'input window, operand 7, single buffered']
    #allocation15 [shape = 's32[1]{0}', space=sflag, size = 0x4, scoped, tag = 'scoped memory for tpu_custom_call.1']
    #allocation16 [shape = 'u8[32768]{0}', space=vmem, size = 0x8000, scoped, tag = 'input window, operand 8, single buffered']
    #allocation17 [shape = 'u8[512]{0}', space=vmem, size = 0x400, scoped, tag = 'input window, operand 9, single buffered']
    #allocation18 [shape = 's32[1]{0}', space=sflag, size = 0x4, scoped, tag = 'scoped memory for tpu_custom_call.1']
    #allocation19 [shape = 'u8[32768]{0}', space=vmem, size = 0x8000, scoped, tag = 'input window, operand 10, single buffered']
    #allocation20 [shape = 'u8[512]{0}', space=vmem, size = 0x400, scoped, tag = 'input window, operand 11, single buffered']
    #allocation21 [shape = 's32[1]{0}', space=sflag, size = 0x4, scoped, tag = 'scoped memory for tpu_custom_call.1']
    #allocation22 [shape = 'u8[512]{0}', space=vmem, size = 0x400, scoped, tag = 'input window, operand 12, single buffered']
    #allocation23 [shape = 'u8[512]{0}', space=vmem, size = 0x400, scoped, tag = 'input window, operand 13, single buffered']
    #allocation24 [shape = 's32[1]{0}', space=sflag, size = 0x4, scoped, tag = 'scoped memory for tpu_custom_call.1']
    #allocation25 [shape = 'u8[32768]{0}', space=vmem, size = 0x8000, scoped, tag = 'input window, operand 14, single buffered']
    #allocation26 [shape = 'u8[512]{0}', space=vmem, size = 0x400, scoped, tag = 'input window, operand 15, single buffered']
    #allocation27 [shape = 's32[1]{0}', space=sflag, size = 0x4, scoped, tag = 'scoped memory for tpu_custom_call.1']
    #allocation28 [shape = 'u8[32768]{0}', space=vmem, size = 0x8000, scoped, tag = 'input window, operand 16, single buffered']
    #allocation29 [shape = 'u8[512]{0}', space=vmem, size = 0x400, scoped, tag = 'input window, operand 17, single buffered']
    #allocation30 [shape = 's32[1]{0}', space=sflag, size = 0x4, scoped, tag = 'scoped memory for tpu_custom_call.1']
    #allocation31 [shape = 'u8[32768]{0}', space=vmem, size = 0x8000, scoped, tag = 'input window, operand 18, single buffered']
    #allocation32 [shape = 'u8[512]{0}', space=vmem, size = 0x400, scoped, tag = 'input window, operand 19, single buffered']
    #allocation33 [shape = 's32[1]{0}', space=sflag, size = 0x4, scoped, tag = 'scoped memory for tpu_custom_call.1']
    #allocation34 [shape = 'u8[32768]{0}', space=vmem, size = 0x8000, scoped, tag = 'input window, operand 20, single buffered']
    #allocation35 [shape = 'u8[512]{0}', space=vmem, size = 0x400, scoped, tag = 'input window, operand 21, single buffered']
    #allocation36 [shape = 's32[1]{0}', space=sflag, size = 0x4, scoped, tag = 'scoped memory for tpu_custom_call.1']
    #allocation37 [shape = 'u8[512]{0}', space=vmem, size = 0x400, scoped, tag = 'input window, operand 22, single buffered']
    #allocation38 [shape = 'u8[512]{0}', space=vmem, size = 0x400, scoped, tag = 'input window, operand 23, single buffered']
    #allocation39 [shape = 's32[1]{0}', space=sflag, size = 0x4, scoped, tag = 'scoped memory for tpu_custom_call.1']
    #allocation40 [shape = 'u8[65536]{0}', space=vmem, size = 0x10000, scoped, tag = 'input window, operand 24, single buffered']
    #allocation41 [shape = 'u8[1024]{0}', space=vmem, size = 0x400, scoped, tag = 'input window, operand 25, single buffered']
    #allocation42 [shape = 's32[1]{0}', space=sflag, size = 0x4, scoped, tag = 'scoped memory for tpu_custom_call.1']
    #allocation43 [shape = 'u8[65536]{0}', space=vmem, size = 0x10000, scoped, tag = 'input window, operand 26, single buffered']
    #allocation44 [shape = 'u8[512]{0}', space=vmem, size = 0x400, scoped, tag = 'input window, operand 27, single buffered']
    #allocation45 [shape = 's32[1]{0}', space=sflag, size = 0x4, scoped, tag = 'scoped memory for tpu_custom_call.1']
    #allocation46 [shape = 'u8[512]{0}', space=vmem, size = 0x400, scoped, tag = 'input window, operand 28, single buffered']
    #allocation47 [shape = 'u8[512]{0}', space=vmem, size = 0x400, scoped, tag = 'input window, operand 29, single buffered']
    #allocation48 [shape = 's32[1]{0}', space=sflag, size = 0x4, scoped, tag = 'scoped memory for tpu_custom_call.1']
    #allocation49 [shape = 'u8[8192]{0}', space=vmem, size = 0x2000, scoped, tag = 'output window, operand 0']
    %66 = vsyncpa [#allocation3], 0
    %s67 = scalar_lea.sflag [#allocation3], 1
    %68 = vsyncpa %s67, 0
    %69 = vsyncpa [#allocation6], 0
    %s70 = scalar_lea.sflag [#allocation6], 1
    %71 = vsyncpa %s70, 0
    %72 = vsyncpa [#allocation9], 0
    %s73 = scalar_lea.sflag [#allocation9], 1
    %74 = vsyncpa %s73, 0
    %75 = vsyncpa [#allocation12], 0
    %76 = vsyncpa [#allocation15], 0
    %77 = vsyncpa [#allocation18], 0
    %78 = vsyncpa [#allocation21], 0
    %79 = vsyncpa [#allocation24], 0
    %80 = vsyncpa [#allocation27], 0
    %81 = vsyncpa [#allocation30], 0
    %82 = vsyncpa [#allocation33], 0
    %83 = vsyncpa [#allocation36], 0
    %84 = vsyncpa [#allocation39], 0
    %85 = vsyncpa [#allocation42], 0
    %86 = vsyncpa [#allocation45], 0
    %87 = vsyncpa [#allocation48], 0
    %88 = vsyncpa [#allocation4], 0
    %s89 = scalar_lea.sflag [#allocation4], 1
    %90 = vsyncpa %s89, 0
    loop: start=0, step=1, limit=4
    $region2: #{tpu_custom_call.1} parent=1 // loop_pre_header
      _
    $region3: #{tpu_custom_call.1} parent=1 // loop_header
      %s92 = sphi 0, %s96
      %p93 = scmp.ge.s32.totalorder %s92, 4
      %s102 = sphi 0, %s104
      %s105 = sphi 0, %s102
      %s106 = sphi 0, %s105
      %s122 = sphi 0, %s106
      %s128 = sphi 0, %s130
      %s131 = sphi 0, %s128
      %s132 = sphi 0, %s131
      %s148 = sphi 0, %s132
      %s154 = sphi 0, %s156
      %s157 = sphi 0, %s154
      %s158 = sphi 0, %s157
      %s174 = sphi 0, %s158
      %s180 = sphi 0, %s182
      %s183 = sphi 0, %s180
      %s184 = sphi 0, %s183
      %s200 = sphi 0, %s184
      %s204 = sphi 0, %s204
      %s206 = sphi 0, %s204
      %s207 = sphi 0, %s206
      %s221 = sphi 0, %s207
      %s225 = sphi 0, %s225
      %s227 = sphi 0, %s225
      %s228 = sphi 0, %s227
      %s242 = sphi 0, %s228
      %s246 = sphi 0, %s246
      %s248 = sphi 0, %s246
      %s249 = sphi 0, %s248
      %s263 = sphi 0, %s249
      %s267 = sphi 0, %s267
      %s269 = sphi 0, %s267
      %s270 = sphi 0, %s269
      %s284 = sphi 0, %s270
      %s288 = sphi 0, %s288
      %s290 = sphi 0, %s288
      %s291 = sphi 0, %s290
      %s305 = sphi 0, %s291
      %s309 = sphi 0, %s309
      %s311 = sphi 0, %s309
      %s312 = sphi 0, %s311
      %s326 = sphi 0, %s312
      %s330 = sphi 0, %s330
      %s332 = sphi 0, %s330
      %s333 = sphi 0, %s332
      %s347 = sphi 0, %s333
      %s351 = sphi 0, %s351
      %s353 = sphi 0, %s351
      %s354 = sphi 0, %s353
      %s368 = sphi 0, %s354
      %s372 = sphi 0, %s372
      %s374 = sphi 0, %s372
      %s375 = sphi 0, %s374
      %s389 = sphi 0, %s375
      %s393 = sphi 0, %s393
      %s395 = sphi 0, %s393
      %s396 = sphi 0, %s395
      %s410 = sphi 0, %s396
      %s414 = sphi 0, %s414
      %s416 = sphi 0, %s414
      %s417 = sphi 0, %s416
      %s431 = sphi 0, %s417
      %s435 = sphi 0, %s435
      %s437 = sphi 0, %s435
      %s438 = sphi 0, %s437
      %s452 = sphi 0, %s438
      %s456 = sphi 0, %s456
      %s458 = sphi 0, %s456
      %s459 = sphi 0, %s458
      %s473 = sphi 0, %s459
      %s477 = sphi 0, %s477
      %s479 = sphi 0, %s477
      %s480 = sphi 0, %s479
      %s494 = sphi 0, %s480
      %s498 = sphi 0, %s498
      %s500 = sphi 0, %s498
      %s501 = sphi 0, %s500
      %s515 = sphi 0, %s501
      %s519 = sphi 0, %s519
      %s521 = sphi 0, %s519
      %s522 = sphi 0, %s521
      %s536 = sphi 0, %s522
      %s540 = sphi 0, %s540
      %s542 = sphi 0, %s540
      %s543 = sphi 0, %s542
      %s557 = sphi 0, %s543
      %s561 = sphi 0, %s561
      %s563 = sphi 0, %s561
      %s564 = sphi 0, %s563
      %s578 = sphi 0, %s564
      %s582 = sphi 0, %s582
      %s584 = sphi 0, %s582
      %s585 = sphi 0, %s584
      %s599 = sphi 0, %s585
      %s603 = sphi 0, %s603
      %s605 = sphi 0, %s603
      %s606 = sphi 0, %s605
      %s620 = sphi 0, %s606
      %s624 = sphi 0, %s624
      %s626 = sphi 0, %s624
      %s627 = sphi 0, %s626
      %s641 = sphi 0, %s627
      %s645 = sphi 0, %s645
      %s647 = sphi 0, %s645
      %s648 = sphi 0, %s647
      %s662 = sphi 0, %s648
      %s666 = sphi 0, %s666
      %s668 = sphi 0, %s666
      %s669 = sphi 0, %s668
      %s683 = sphi 0, %s669
      %s687 = sphi 0, %s687
      %s689 = sphi 0, %s687
      %s690 = sphi 0, %s689
      %s704 = sphi 0, %s690
      %s708 = sphi 0, %s708
      %s710 = sphi 0, %s708
      %s711 = sphi 0, %s710
      %s725 = sphi 0, %s711
      %s729 = sphi 0, %s729
      %s731 = sphi 0, %s729
      %s732 = sphi 0, %s731
      %s746 = sphi 0, %s732
      %s752 = sphi 0, %s754
      %s755 = sphi 0, %s752
      %s756 = sphi 0, %s755
      %s772 = sphi 0, %s756
    $region4: #{tpu_custom_call.1} parent=1 // loop_header_branch
      %95 = sbr.rel (%p93) target = $region8
    $region5: #{tpu_custom_call.1} parent=1 // loop_body
      %s97 = ssub.s32 %s92, 1
      %s98 = ssub.s32 %s92, 2
      %s99 = sadd.s32 %s92, 1
      %s100 = ssub.s32 %s92, %s99
      %p101 = scmp.eq.s32.totalorder %s100, 0
      %s103 = sadd.s32 %s102, 1
      %s104 = scalar_select %p101, %s102, %s103
      %p107 = pneg %p101
      %p108 = scmp.eq.s32.totalorder %s92, 1
      %p109 = por %p107, %p108
      %p110 = scmp.ne.s32.totalorder %s102, %s105
      %p111 = scmp.eq.s32.totalorder %s92, 0
      %p112 = por %p110, %p111
      %p113 = scmp.ne.s32.totalorder %s102, %s105
      %p114 = scmp.eq.s32.totalorder %s97, 1
      %p115 = por %p113, %p114
      %p116 = scmp.ne.s32.totalorder %s105, %s106
      %p117 = scmp.eq.s32.totalorder %s97, 0
      %p118 = por %p116, %p117
      %p119 = scmp.ne.s32.totalorder %s105, %s106
      %p120 = scmp.eq.s32.totalorder %s98, 1
      %p121 = por %p119, %p120
      %p123 = scmp.ne.s32.totalorder %s106, %s122
      %p124 = scmp.eq.s32.totalorder %s98, 0
      %p125 = por %p123, %p124
      %s126 = ssub.s32 %s92, %s99
      %p127 = scmp.eq.s32.totalorder %s126, 0
      %s129 = sadd.s32 %s128, 1
      %s130 = scalar_select %p127, %s128, %s129
      %p133 = pneg %p127
      %p134 = scmp.eq.s32.totalorder %s92, 1
      %p135 = por %p133, %p134
      %p136 = scmp.ne.s32.totalorder %s128, %s131
      %p137 = scmp.eq.s32.totalorder %s92, 0
      %p138 = por %p136, %p137
      %p139 = scmp.ne.s32.totalorder %s128, %s131
      %p140 = scmp.eq.s32.totalorder %s97, 1
      %p141 = por %p139, %p140
      %p142 = scmp.ne.s32.totalorder %s131, %s132
      %p143 = scmp.eq.s32.totalorder %s97, 0
      %p144 = por %p142, %p143
      %p145 = scmp.ne.s32.totalorder %s131, %s132
      %p146 = scmp.eq.s32.totalorder %s98, 1
      %p147 = por %p145, %p146
      %p149 = scmp.ne.s32.totalorder %s132, %s148
      %p150 = scmp.eq.s32.totalorder %s98, 0
      %p151 = por %p149, %p150
      %s152 = ssub.s32 %s92, %s99
      %p153 = scmp.eq.s32.totalorder %s152, 0
      %s155 = sadd.s32 %s154, 1
      %s156 = scalar_select %p153, %s154, %s155
      %p159 = pneg %p153
      %p160 = scmp.eq.s32.totalorder %s92, 1
      %p161 = por %p159, %p160
      %p162 = scmp.ne.s32.totalorder %s154, %s157
      %p163 = scmp.eq.s32.totalorder %s92, 0
      %p164 = por %p162, %p163
      %p165 = scmp.ne.s32.totalorder %s154, %s157
      %p166 = scmp.eq.s32.totalorder %s97, 1
      %p167 = por %p165, %p166
      %p168 = scmp.ne.s32.totalorder %s157, %s158
      %p169 = scmp.eq.s32.totalorder %s97, 0
      %p170 = por %p168, %p169
      %p171 = scmp.ne.s32.totalorder %s157, %s158
      %p172 = scmp.eq.s32.totalorder %s98, 1
      %p173 = por %p171, %p172
      %p175 = scmp.ne.s32.totalorder %s158, %s174
      %p176 = scmp.eq.s32.totalorder %s98, 0
      %p177 = por %p175, %p176
      %s178 = ssub.s32 %s92, %s99
      %p179 = scmp.eq.s32.totalorder %s178, 0
      %s181 = sadd.s32 %s180, 1
      %s182 = scalar_select %p179, %s180, %s181
      %p185 = pneg %p179
      %p186 = scmp.eq.s32.totalorder %s92, 1
      %p187 = por %p185, %p186
      %p188 = scmp.ne.s32.totalorder %s180, %s183
      %p189 = scmp.eq.s32.totalorder %s92, 0
      %p190 = por %p188, %p189
      %p191 = scmp.ne.s32.totalorder %s180, %s183
      %p192 = scmp.eq.s32.totalorder %s97, 1
      %p193 = por %p191, %p192
      %p194 = scmp.ne.s32.totalorder %s183, %s184
      %p195 = scmp.eq.s32.totalorder %s97, 0
      %p196 = por %p194, %p195
      %p197 = scmp.ne.s32.totalorder %s183, %s184
      %p198 = scmp.eq.s32.totalorder %s98, 1
      %p199 = por %p197, %p198
      %p201 = scmp.ne.s32.totalorder %s184, %s200
      %p202 = scmp.eq.s32.totalorder %s98, 0
      %p203 = por %p201, %p202
      %s205 = sadd.s32 %s204, 1
      %p208 = scmp.eq.s32.totalorder %s92, 1
      %p209 = scmp.ne.s32.totalorder %s204, %s206
      %p210 = scmp.eq.s32.totalorder %s92, 0
      %p211 = por %p209, %p210
      %p212 = scmp.ne.s32.totalorder %s204, %s206
      %p213 = scmp.eq.s32.totalorder %s97, 1
      %p214 = por %p212, %p213
      %p215 = scmp.ne.s32.totalorder %s206, %s207
      %p216 = scmp.eq.s32.totalorder %s97, 0
      %p217 = por %p215, %p216
      %p218 = scmp.ne.s32.totalorder %s206, %s207
      %p219 = scmp.eq.s32.totalorder %s98, 1
      %p220 = por %p218, %p219
      %p222 = scmp.ne.s32.totalorder %s207, %s221
      %p223 = scmp.eq.s32.totalorder %s98, 0
      %p224 = por %p222, %p223
      %s226 = sadd.s32 %s225, 1
      %p229 = scmp.eq.s32.totalorder %s92, 1
      %p230 = scmp.ne.s32.totalorder %s225, %s227
      %p231 = scmp.eq.s32.totalorder %s92, 0
      %p232 = por %p230, %p231
      %p233 = scmp.ne.s32.totalorder %s225, %s227
      %p234 = scmp.eq.s32.totalorder %s97, 1
      %p235 = por %p233, %p234
      %p236 = scmp.ne.s32.totalorder %s227, %s228
      %p237 = scmp.eq.s32.totalorder %s97, 0
      %p238 = por %p236, %p237
      %p239 = scmp.ne.s32.totalorder %s227, %s228
      %p240 = scmp.eq.s32.totalorder %s98, 1
      %p241 = por %p239, %p240
      %p243 = scmp.ne.s32.totalorder %s228, %s242
      %p244 = scmp.eq.s32.totalorder %s98, 0
      %p245 = por %p243, %p244
      %s247 = sadd.s32 %s246, 1
      %p250 = scmp.eq.s32.totalorder %s92, 1
      %p251 = scmp.ne.s32.totalorder %s246, %s248
      %p252 = scmp.eq.s32.totalorder %s92, 0
      %p253 = por %p251, %p252
      %p254 = scmp.ne.s32.totalorder %s246, %s248
      %p255 = scmp.eq.s32.totalorder %s97, 1
      %p256 = por %p254, %p255
      %p257 = scmp.ne.s32.totalorder %s248, %s249
      %p258 = scmp.eq.s32.totalorder %s97, 0
      %p259 = por %p257, %p258
      %p260 = scmp.ne.s32.totalorder %s248, %s249
      %p261 = scmp.eq.s32.totalorder %s98, 1
      %p262 = por %p260, %p261
      %p264 = scmp.ne.s32.totalorder %s249, %s263
      %p265 = scmp.eq.s32.totalorder %s98, 0
      %p266 = por %p264, %p265
      %s268 = sadd.s32 %s267, 1
      %p271 = scmp.eq.s32.totalorder %s92, 1
      %p272 = scmp.ne.s32.totalorder %s267, %s269
      %p273 = scmp.eq.s32.totalorder %s92, 0
      %p274 = por %p272, %p273
      %p275 = scmp.ne.s32.totalorder %s267, %s269
      %p276 = scmp.eq.s32.totalorder %s97, 1
      %p277 = por %p275, %p276
      %p278 = scmp.ne.s32.totalorder %s269, %s270
      %p279 = scmp.eq.s32.totalorder %s97, 0
      %p280 = por %p278, %p279
      %p281 = scmp.ne.s32.totalorder %s269, %s270
      %p282 = scmp.eq.s32.totalorder %s98, 1
      %p283 = por %p281, %p282
      %p285 = scmp.ne.s32.totalorder %s270, %s284
      %p286 = scmp.eq.s32.totalorder %s98, 0
      %p287 = por %p285, %p286
      %s289 = sadd.s32 %s288, 1
      %p292 = scmp.eq.s32.totalorder %s92, 1
      %p293 = scmp.ne.s32.totalorder %s288, %s290
      %p294 = scmp.eq.s32.totalorder %s92, 0
      %p295 = por %p293, %p294
      %p296 = scmp.ne.s32.totalorder %s288, %s290
      %p297 = scmp.eq.s32.totalorder %s97, 1
      %p298 = por %p296, %p297
      %p299 = scmp.ne.s32.totalorder %s290, %s291
      %p300 = scmp.eq.s32.totalorder %s97, 0
      %p301 = por %p299, %p300
      %p302 = scmp.ne.s32.totalorder %s290, %s291
      %p303 = scmp.eq.s32.totalorder %s98, 1
      %p304 = por %p302, %p303
      %p306 = scmp.ne.s32.totalorder %s291, %s305
      %p307 = scmp.eq.s32.totalorder %s98, 0
      %p308 = por %p306, %p307
      %s310 = sadd.s32 %s309, 1
      %p313 = scmp.eq.s32.totalorder %s92, 1
      %p314 = scmp.ne.s32.totalorder %s309, %s311
      %p315 = scmp.eq.s32.totalorder %s92, 0
      %p316 = por %p314, %p315
      %p317 = scmp.ne.s32.totalorder %s309, %s311
      %p318 = scmp.eq.s32.totalorder %s97, 1
      %p319 = por %p317, %p318
      %p320 = scmp.ne.s32.totalorder %s311, %s312
      %p321 = scmp.eq.s32.totalorder %s97, 0
      %p322 = por %p320, %p321
      %p323 = scmp.ne.s32.totalorder %s311, %s312
      %p324 = scmp.eq.s32.totalorder %s98, 1
      %p325 = por %p323, %p324
      %p327 = scmp.ne.s32.totalorder %s312, %s326
      %p328 = scmp.eq.s32.totalorder %s98, 0
      %p329 = por %p327, %p328
      %s331 = sadd.s32 %s330, 1
      %p334 = scmp.eq.s32.totalorder %s92, 1
      %p335 = scmp.ne.s32.totalorder %s330, %s332
      %p336 = scmp.eq.s32.totalorder %s92, 0
      %p337 = por %p335, %p336
      %p338 = scmp.ne.s32.totalorder %s330, %s332
      %p339 = scmp.eq.s32.totalorder %s97, 1
      %p340 = por %p338, %p339
      %p341 = scmp.ne.s32.totalorder %s332, %s333
      %p342 = scmp.eq.s32.totalorder %s97, 0
      %p343 = por %p341, %p342
      %p344 = scmp.ne.s32.totalorder %s332, %s333
      %p345 = scmp.eq.s32.totalorder %s98, 1
      %p346 = por %p344, %p345
      %p348 = scmp.ne.s32.totalorder %s333, %s347
      %p349 = scmp.eq.s32.totalorder %s98, 0
      %p350 = por %p348, %p349
      %s352 = sadd.s32 %s351, 1
      %p355 = scmp.eq.s32.totalorder %s92, 1
      %p356 = scmp.ne.s32.totalorder %s351, %s353
      %p357 = scmp.eq.s32.totalorder %s92, 0
      %p358 = por %p356, %p357
      %p359 = scmp.ne.s32.totalorder %s351, %s353
      %p360 = scmp.eq.s32.totalorder %s97, 1
      %p361 = por %p359, %p360
      %p362 = scmp.ne.s32.totalorder %s353, %s354
      %p363 = scmp.eq.s32.totalorder %s97, 0
      %p364 = por %p362, %p363
      %p365 = scmp.ne.s32.totalorder %s353, %s354
      %p366 = scmp.eq.s32.totalorder %s98, 1
      %p367 = por %p365, %p366
      %p369 = scmp.ne.s32.totalorder %s354, %s368
      %p370 = scmp.eq.s32.totalorder %s98, 0
      %p371 = por %p369, %p370
      %s373 = sadd.s32 %s372, 1
      %p376 = scmp.eq.s32.totalorder %s92, 1
      %p377 = scmp.ne.s32.totalorder %s372, %s374
      %p378 = scmp.eq.s32.totalorder %s92, 0
      %p379 = por %p377, %p378
      %p380 = scmp.ne.s32.totalorder %s372, %s374
      %p381 = scmp.eq.s32.totalorder %s97, 1
      %p382 = por %p380, %p381
      %p383 = scmp.ne.s32.totalorder %s374, %s375
      %p384 = scmp.eq.s32.totalorder %s97, 0
      %p385 = por %p383, %p384
      %p386 = scmp.ne.s32.totalorder %s374, %s375
      %p387 = scmp.eq.s32.totalorder %s98, 1
      %p388 = por %p386, %p387
      %p390 = scmp.ne.s32.totalorder %s375, %s389
      %p391 = scmp.eq.s32.totalorder %s98, 0
      %p392 = por %p390, %p391
      %s394 = sadd.s32 %s393, 1
      %p397 = scmp.eq.s32.totalorder %s92, 1
      %p398 = scmp.ne.s32.totalorder %s393, %s395
      %p399 = scmp.eq.s32.totalorder %s92, 0
      %p400 = por %p398, %p399
      %p401 = scmp.ne.s32.totalorder %s393, %s395
      %p402 = scmp.eq.s32.totalorder %s97, 1
      %p403 = por %p401, %p402
      %p404 = scmp.ne.s32.totalorder %s395, %s396
      %p405 = scmp.eq.s32.totalorder %s97, 0
      %p406 = por %p404, %p405
      %p407 = scmp.ne.s32.totalorder %s395, %s396
      %p408 = scmp.eq.s32.totalorder %s98, 1
      %p409 = por %p407, %p408
      %p411 = scmp.ne.s32.totalorder %s396, %s410
      %p412 = scmp.eq.s32.totalorder %s98, 0
      %p413 = por %p411, %p412
      %s415 = sadd.s32 %s414, 1
      %p418 = scmp.eq.s32.totalorder %s92, 1
      %p419 = scmp.ne.s32.totalorder %s414, %s416
      %p420 = scmp.eq.s32.totalorder %s92, 0
      %p421 = por %p419, %p420
      %p422 = scmp.ne.s32.totalorder %s414, %s416
      %p423 = scmp.eq.s32.totalorder %s97, 1
      %p424 = por %p422, %p423
      %p425 = scmp.ne.s32.totalorder %s416, %s417
      %p426 = scmp.eq.s32.totalorder %s97, 0
      %p427 = por %p425, %p426
      %p428 = scmp.ne.s32.totalorder %s416, %s417
      %p429 = scmp.eq.s32.totalorder %s98, 1
      %p430 = por %p428, %p429
      %p432 = scmp.ne.s32.totalorder %s417, %s431
      %p433 = scmp.eq.s32.totalorder %s98, 0
      %p434 = por %p432, %p433
      %s436 = sadd.s32 %s435, 1
      %p439 = scmp.eq.s32.totalorder %s92, 1
      %p440 = scmp.ne.s32.totalorder %s435, %s437
      %p441 = scmp.eq.s32.totalorder %s92, 0
      %p442 = por %p440, %p441
      %p443 = scmp.ne.s32.totalorder %s435, %s437
      %p444 = scmp.eq.s32.totalorder %s97, 1
      %p445 = por %p443, %p444
      %p446 = scmp.ne.s32.totalorder %s437, %s438
      %p447 = scmp.eq.s32.totalorder %s97, 0
      %p448 = por %p446, %p447
      %p449 = scmp.ne.s32.totalorder %s437, %s438
      %p450 = scmp.eq.s32.totalorder %s98, 1
      %p451 = por %p449, %p450
      %p453 = scmp.ne.s32.totalorder %s438, %s452
      %p454 = scmp.eq.s32.totalorder %s98, 0
      %p455 = por %p453, %p454
      %s457 = sadd.s32 %s456, 1
      %p460 = scmp.eq.s32.totalorder %s92, 1
      %p461 = scmp.ne.s32.totalorder %s456, %s458
      %p462 = scmp.eq.s32.totalorder %s92, 0
      %p463 = por %p461, %p462
      %p464 = scmp.ne.s32.totalorder %s456, %s458
      %p465 = scmp.eq.s32.totalorder %s97, 1
      %p466 = por %p464, %p465
      %p467 = scmp.ne.s32.totalorder %s458, %s459
      %p468 = scmp.eq.s32.totalorder %s97, 0
      %p469 = por %p467, %p468
      %p470 = scmp.ne.s32.totalorder %s458, %s459
      %p471 = scmp.eq.s32.totalorder %s98, 1
      %p472 = por %p470, %p471
      %p474 = scmp.ne.s32.totalorder %s459, %s473
      %p475 = scmp.eq.s32.totalorder %s98, 0
      %p476 = por %p474, %p475
      %s478 = sadd.s32 %s477, 1
      %p481 = scmp.eq.s32.totalorder %s92, 1
      %p482 = scmp.ne.s32.totalorder %s477, %s479
      %p483 = scmp.eq.s32.totalorder %s92, 0
      %p484 = por %p482, %p483
      %p485 = scmp.ne.s32.totalorder %s477, %s479
      %p486 = scmp.eq.s32.totalorder %s97, 1
      %p487 = por %p485, %p486
      %p488 = scmp.ne.s32.totalorder %s479, %s480
      %p489 = scmp.eq.s32.totalorder %s97, 0
      %p490 = por %p488, %p489
      %p491 = scmp.ne.s32.totalorder %s479, %s480
      %p492 = scmp.eq.s32.totalorder %s98, 1
      %p493 = por %p491, %p492
      %p495 = scmp.ne.s32.totalorder %s480, %s494
      %p496 = scmp.eq.s32.totalorder %s98, 0
      %p497 = por %p495, %p496
      %s499 = sadd.s32 %s498, 1
      %p502 = scmp.eq.s32.totalorder %s92, 1
      %p503 = scmp.ne.s32.totalorder %s498, %s500
      %p504 = scmp.eq.s32.totalorder %s92, 0
      %p505 = por %p503, %p504
      %p506 = scmp.ne.s32.totalorder %s498, %s500
      %p507 = scmp.eq.s32.totalorder %s97, 1
      %p508 = por %p506, %p507
      %p509 = scmp.ne.s32.totalorder %s500, %s501
      %p510 = scmp.eq.s32.totalorder %s97, 0
      %p511 = por %p509, %p510
      %p512 = scmp.ne.s32.totalorder %s500, %s501
      %p513 = scmp.eq.s32.totalorder %s98, 1
      %p514 = por %p512, %p513
      %p516 = scmp.ne.s32.totalorder %s501, %s515
      %p517 = scmp.eq.s32.totalorder %s98, 0
      %p518 = por %p516, %p517
      %s520 = sadd.s32 %s519, 1
      %p523 = scmp.eq.s32.totalorder %s92, 1
      %p524 = scmp.ne.s32.totalorder %s519, %s521
      %p525 = scmp.eq.s32.totalorder %s92, 0
      %p526 = por %p524, %p525
      %p527 = scmp.ne.s32.totalorder %s519, %s521
      %p528 = scmp.eq.s32.totalorder %s97, 1
      %p529 = por %p527, %p528
      %p530 = scmp.ne.s32.totalorder %s521, %s522
      %p531 = scmp.eq.s32.totalorder %s97, 0
      %p532 = por %p530, %p531
      %p533 = scmp.ne.s32.totalorder %s521, %s522
      %p534 = scmp.eq.s32.totalorder %s98, 1
      %p535 = por %p533, %p534
      %p537 = scmp.ne.s32.totalorder %s522, %s536
      %p538 = scmp.eq.s32.totalorder %s98, 0
      %p539 = por %p537, %p538
      %s541 = sadd.s32 %s540, 1
      %p544 = scmp.eq.s32.totalorder %s92, 1
      %p545 = scmp.ne.s32.totalorder %s540, %s542
      %p546 = scmp.eq.s32.totalorder %s92, 0
      %p547 = por %p545, %p546
      %p548 = scmp.ne.s32.totalorder %s540, %s542
      %p549 = scmp.eq.s32.totalorder %s97, 1
      %p550 = por %p548, %p549
      %p551 = scmp.ne.s32.totalorder %s542, %s543
      %p552 = scmp.eq.s32.totalorder %s97, 0
      %p553 = por %p551, %p552
      %p554 = scmp.ne.s32.totalorder %s542, %s543
      %p555 = scmp.eq.s32.totalorder %s98, 1
      %p556 = por %p554, %p555
      %p558 = scmp.ne.s32.totalorder %s543, %s557
      %p559 = scmp.eq.s32.totalorder %s98, 0
      %p560 = por %p558, %p559
      %s562 = sadd.s32 %s561, 1
      %p565 = scmp.eq.s32.totalorder %s92, 1
      %p566 = scmp.ne.s32.totalorder %s561, %s563
      %p567 = scmp.eq.s32.totalorder %s92, 0
      %p568 = por %p566, %p567
      %p569 = scmp.ne.s32.totalorder %s561, %s563
      %p570 = scmp.eq.s32.totalorder %s97, 1
      %p571 = por %p569, %p570
      %p572 = scmp.ne.s32.totalorder %s563, %s564
      %p573 = scmp.eq.s32.totalorder %s97, 0
      %p574 = por %p572, %p573
      %p575 = scmp.ne.s32.totalorder %s563, %s564
      %p576 = scmp.eq.s32.totalorder %s98, 1
      %p577 = por %p575, %p576
      %p579 = scmp.ne.s32.totalorder %s564, %s578
      %p580 = scmp.eq.s32.totalorder %s98, 0
      %p581 = por %p579, %p580
      %s583 = sadd.s32 %s582, 1
      %p586 = scmp.eq.s32.totalorder %s92, 1
      %p587 = scmp.ne.s32.totalorder %s582, %s584
      %p588 = scmp.eq.s32.totalorder %s92, 0
      %p589 = por %p587, %p588
      %p590 = scmp.ne.s32.totalorder %s582, %s584
      %p591 = scmp.eq.s32.totalorder %s97, 1
      %p592 = por %p590, %p591
      %p593 = scmp.ne.s32.totalorder %s584, %s585
      %p594 = scmp.eq.s32.totalorder %s97, 0
      %p595 = por %p593, %p594
      %p596 = scmp.ne.s32.totalorder %s584, %s585
      %p597 = scmp.eq.s32.totalorder %s98, 1
      %p598 = por %p596, %p597
      %p600 = scmp.ne.s32.totalorder %s585, %s599
      %p601 = scmp.eq.s32.totalorder %s98, 0
      %p602 = por %p600, %p601
      %s604 = sadd.s32 %s603, 1
      %p607 = scmp.eq.s32.totalorder %s92, 1
      %p608 = scmp.ne.s32.totalorder %s603, %s605
      %p609 = scmp.eq.s32.totalorder %s92, 0
      %p610 = por %p608, %p609
      %p611 = scmp.ne.s32.totalorder %s603, %s605
      %p612 = scmp.eq.s32.totalorder %s97, 1
      %p613 = por %p611, %p612
      %p614 = scmp.ne.s32.totalorder %s605, %s606
      %p615 = scmp.eq.s32.totalorder %s97, 0
      %p616 = por %p614, %p615
      %p617 = scmp.ne.s32.totalorder %s605, %s606
      %p618 = scmp.eq.s32.totalorder %s98, 1
      %p619 = por %p617, %p618
      %p621 = scmp.ne.s32.totalorder %s606, %s620
      %p622 = scmp.eq.s32.totalorder %s98, 0
      %p623 = por %p621, %p622
      %s625 = sadd.s32 %s624, 1
      %p628 = scmp.eq.s32.totalorder %s92, 1
      %p629 = scmp.ne.s32.totalorder %s624, %s626
      %p630 = scmp.eq.s32.totalorder %s92, 0
      %p631 = por %p629, %p630
      %p632 = scmp.ne.s32.totalorder %s624, %s626
      %p633 = scmp.eq.s32.totalorder %s97, 1
      %p634 = por %p632, %p633
      %p635 = scmp.ne.s32.totalorder %s626, %s627
      %p636 = scmp.eq.s32.totalorder %s97, 0
      %p637 = por %p635, %p636
      %p638 = scmp.ne.s32.totalorder %s626, %s627
      %p639 = scmp.eq.s32.totalorder %s98, 1
      %p640 = por %p638, %p639
      %p642 = scmp.ne.s32.totalorder %s627, %s641
      %p643 = scmp.eq.s32.totalorder %s98, 0
      %p644 = por %p642, %p643
      %s646 = sadd.s32 %s645, 1
      %p649 = scmp.eq.s32.totalorder %s92, 1
      %p650 = scmp.ne.s32.totalorder %s645, %s647
      %p651 = scmp.eq.s32.totalorder %s92, 0
      %p652 = por %p650, %p651
      %p653 = scmp.ne.s32.totalorder %s645, %s647
      %p654 = scmp.eq.s32.totalorder %s97, 1
      %p655 = por %p653, %p654
      %p656 = scmp.ne.s32.totalorder %s647, %s648
      %p657 = scmp.eq.s32.totalorder %s97, 0
      %p658 = por %p656, %p657
      %p659 = scmp.ne.s32.totalorder %s647, %s648
      %p660 = scmp.eq.s32.totalorder %s98, 1
      %p661 = por %p659, %p660
      %p663 = scmp.ne.s32.totalorder %s648, %s662
      %p664 = scmp.eq.s32.totalorder %s98, 0
      %p665 = por %p663, %p664
      %s667 = sadd.s32 %s666, 1
      %p670 = scmp.eq.s32.totalorder %s92, 1
      %p671 = scmp.ne.s32.totalorder %s666, %s668
      %p672 = scmp.eq.s32.totalorder %s92, 0
      %p673 = por %p671, %p672
      %p674 = scmp.ne.s32.totalorder %s666, %s668
      %p675 = scmp.eq.s32.totalorder %s97, 1
      %p676 = por %p674, %p675
      %p677 = scmp.ne.s32.totalorder %s668, %s669
      %p678 = scmp.eq.s32.totalorder %s97, 0
      %p679 = por %p677, %p678
      %p680 = scmp.ne.s32.totalorder %s668, %s669
      %p681 = scmp.eq.s32.totalorder %s98, 1
      %p682 = por %p680, %p681
      %p684 = scmp.ne.s32.totalorder %s669, %s683
      %p685 = scmp.eq.s32.totalorder %s98, 0
      %p686 = por %p684, %p685
      %s688 = sadd.s32 %s687, 1
      %p691 = scmp.eq.s32.totalorder %s92, 1
      %p692 = scmp.ne.s32.totalorder %s687, %s689
      %p693 = scmp.eq.s32.totalorder %s92, 0
      %p694 = por %p692, %p693
      %p695 = scmp.ne.s32.totalorder %s687, %s689
      %p696 = scmp.eq.s32.totalorder %s97, 1
      %p697 = por %p695, %p696
      %p698 = scmp.ne.s32.totalorder %s689, %s690
      %p699 = scmp.eq.s32.totalorder %s97, 0
      %p700 = por %p698, %p699
      %p701 = scmp.ne.s32.totalorder %s689, %s690
      %p702 = scmp.eq.s32.totalorder %s98, 1
      %p703 = por %p701, %p702
      %p705 = scmp.ne.s32.totalorder %s690, %s704
      %p706 = scmp.eq.s32.totalorder %s98, 0
      %p707 = por %p705, %p706
      %s709 = sadd.s32 %s708, 1
      %p712 = scmp.eq.s32.totalorder %s92, 1
      %p713 = scmp.ne.s32.totalorder %s708, %s710
      %p714 = scmp.eq.s32.totalorder %s92, 0
      %p715 = por %p713, %p714
      %p716 = scmp.ne.s32.totalorder %s708, %s710
      %p717 = scmp.eq.s32.totalorder %s97, 1
      %p718 = por %p716, %p717
      %p719 = scmp.ne.s32.totalorder %s710, %s711
      %p720 = scmp.eq.s32.totalorder %s97, 0
      %p721 = por %p719, %p720
      %p722 = scmp.ne.s32.totalorder %s710, %s711
      %p723 = scmp.eq.s32.totalorder %s98, 1
      %p724 = por %p722, %p723
      %p726 = scmp.ne.s32.totalorder %s711, %s725
      %p727 = scmp.eq.s32.totalorder %s98, 0
      %p728 = por %p726, %p727
      %s730 = sadd.s32 %s729, 1
      %p733 = scmp.eq.s32.totalorder %s92, 1
      %p734 = scmp.ne.s32.totalorder %s729, %s731
      %p735 = scmp.eq.s32.totalorder %s92, 0
      %p736 = por %p734, %p735
      %p737 = scmp.ne.s32.totalorder %s729, %s731
      %p738 = scmp.eq.s32.totalorder %s97, 1
      %p739 = por %p737, %p738
      %p740 = scmp.ne.s32.totalorder %s731, %s732
      %p741 = scmp.eq.s32.totalorder %s97, 0
      %p742 = por %p740, %p741
      %p743 = scmp.ne.s32.totalorder %s731, %s732
      %p744 = scmp.eq.s32.totalorder %s98, 1
      %p745 = por %p743, %p744
      %p747 = scmp.ne.s32.totalorder %s732, %s746
      %p748 = scmp.eq.s32.totalorder %s98, 0
      %p749 = por %p747, %p748
      %s750 = ssub.s32 %s92, %s99
      %p751 = scmp.eq.s32.totalorder %s750, 0
      %s753 = sadd.s32 %s752, 1
      %s754 = scalar_select %p751, %s752, %s753
      %p757 = pneg %p751
      %p758 = scmp.eq.s32.totalorder %s92, 1
      %p759 = por %p757, %p758
      %p760 = scmp.ne.s32.totalorder %s752, %s755
      %p761 = scmp.eq.s32.totalorder %s92, 0
      %p762 = por %p760, %p761
      %p763 = scmp.ne.s32.totalorder %s752, %s755
      %p764 = scmp.eq.s32.totalorder %s97, 1
      %p765 = por %p763, %p764
      %p766 = scmp.ne.s32.totalorder %s755, %s756
      %p767 = scmp.eq.s32.totalorder %s97, 0
      %p768 = por %p766, %p767
      %p769 = scmp.ne.s32.totalorder %s755, %s756
      %p770 = scmp.eq.s32.totalorder %s98, 1
      %p771 = por %p769, %p770
      %p773 = scmp.ne.s32.totalorder %s756, %s772
      %p774 = scmp.eq.s32.totalorder %s98, 0
      %p775 = por %p773, %p774
      %p776 = scmp.le.s32.totalorder 1, %s92
      %p777 = scmp.lt.s32.totalorder %s92, 3
      %p778 = pnand %p776, %p777
      %p779 = pneg %p778
      // Predicated region
      $region9: #{tpu_custom_call.1} parent=5 // pred_check
        _
      $region10: #{tpu_custom_call.1} parent=5 // pred_check_branch
        %781 = sbr.rel (%p778) target = $region12
      $region11: #{tpu_custom_call.1} parent=5 // pred_region
        %s782 = ssub.s32 %s92, 1
        // Predicated region
        $region13: #{tpu_custom_call.1} parent=11 // pred_check
          %p783 = pneg %p217
        $region14: #{tpu_custom_call.1} parent=11 // pred_check_branch
          %785 = sbr.rel (%p783) target = $region16
        $region15: #{tpu_custom_call.1} parent=11 // pred_region
          %s787 = ssub.s32 1024, 1024
          %788 = vsyncadd [#allocation9], %s787
          %s789 = sshll.u32 [#allocation10], 4
          %s790 = int_to_ptr.vmem [resolvable:$true] %s789
          %795 = dma.hbm_to_vmem [thread:$0]  %s9, 1024, %s790, [#allocation9], 64, 64, 4
        $region16: #{tpu_custom_call.1} parent=11 // pred_fallthru
          _
        // Predicated region
        $region17: #{tpu_custom_call.1} parent=11 // pred_check
          %p796 = pneg %p238
        $region18: #{tpu_custom_call.1} parent=11 // pred_check_branch
          %798 = sbr.rel (%p796) target = $region20
        $region19: #{tpu_custom_call.1} parent=11 // pred_region
          %s800 = ssub.s32 16, 16
          %801 = vsyncadd [#allocation12], %s800
          %s803 = sshll.u32 [#allocation11], 4
          %s804 = int_to_ptr.vmem [resolvable:$true] %s803
          %806 = dma.hbm_to_vmem [thread:$0]  %s11, 16, %s804, [#allocation12]
        $region20: #{tpu_custom_call.1} parent=11 // pred_fallthru
          _
        // Predicated region
        $region21: #{tpu_custom_call.1} parent=11 // pred_check
          %p807 = pneg %p259
        $region22: #{tpu_custom_call.1} parent=11 // pred_check_branch
          %809 = sbr.rel (%p807) target = $region24
        $region23: #{tpu_custom_call.1} parent=11 // pred_region
          %s811 = ssub.s32 1024, 1024
          %812 = vsyncadd [#allocation12], %s811
          %s813 = sshll.u32 [#allocation13], 4
          %s814 = int_to_ptr.vmem [resolvable:$true] %s813
          %819 = dma.hbm_to_vmem [thread:$0]  %s13, 1024, %s814, [#allocation12], 64, 64, 4
        $region24: #{tpu_custom_call.1} parent=11 // pred_fallthru
          _
        // Predicated region
        $region25: #{tpu_custom_call.1} parent=11 // pred_check
          %p820 = pneg %p280
        $region26: #{tpu_custom_call.1} parent=11 // pred_check_branch
          %822 = sbr.rel (%p820) target = $region28
        $region27: #{tpu_custom_call.1} parent=11 // pred_region
          %s824 = ssub.s32 16, 16
          %825 = vsyncadd [#allocation15], %s824
          %s827 = sshll.u32 [#allocation14], 4
          %s828 = int_to_ptr.vmem [resolvable:$true] %s827
          %830 = dma.hbm_to_vmem [thread:$0]  %s15, 16, %s828, [#allocation15]
        $region28: #{tpu_custom_call.1} parent=11 // pred_fallthru
          _
        // Predicated region
        $region29: #{tpu_custom_call.1} parent=11 // pred_check
          %p831 = pneg %p301
        $region30: #{tpu_custom_call.1} parent=11 // pred_check_branch
          %833 = sbr.rel (%p831) target = $region32
        $region31: #{tpu_custom_call.1} parent=11 // pred_region
          %s835 = ssub.s32 1024, 1024
          %836 = vsyncadd [#allocation15], %s835
          %s837 = sshll.u32 [#allocation16], 4
          %s838 = int_to_ptr.vmem [resolvable:$true] %s837
          %843 = dma.hbm_to_vmem [thread:$0]  %s17, 1024, %s838, [#allocation15], 64, 64, 4
        $region32: #{tpu_custom_call.1} parent=11 // pred_fallthru
          _
        // Predicated region
        $region33: #{tpu_custom_call.1} parent=11 // pred_check
          %p844 = pneg %p322
        $region34: #{tpu_custom_call.1} parent=11 // pred_check_branch
          %846 = sbr.rel (%p844) target = $region36
        $region35: #{tpu_custom_call.1} parent=11 // pred_region
          %s848 = ssub.s32 16, 16
          %849 = vsyncadd [#allocation18], %s848
          %s851 = sshll.u32 [#allocation17], 4
          %s852 = int_to_ptr.vmem [resolvable:$true] %s851
          %854 = dma.hbm_to_vmem [thread:$0]  %s19, 16, %s852, [#allocation18]
        $region36: #{tpu_custom_call.1} parent=11 // pred_fallthru
          _
        // Predicated region
        $region37: #{tpu_custom_call.1} parent=11 // pred_check
          %p855 = pneg %p343
        $region38: #{tpu_custom_call.1} parent=11 // pred_check_branch
          %857 = sbr.rel (%p855) target = $region40
        $region39: #{tpu_custom_call.1} parent=11 // pred_region
          %s859 = ssub.s32 1024, 1024
          %860 = vsyncadd [#allocation18], %s859
          %s861 = sshll.u32 [#allocation19], 4
          %s862 = int_to_ptr.vmem [resolvable:$true] %s861
          %867 = dma.hbm_to_vmem [thread:$0]  %s21, 1024, %s862, [#allocation18], 64, 64, 4
        $region40: #{tpu_custom_call.1} parent=11 // pred_fallthru
          _
        // Predicated region
        $region41: #{tpu_custom_call.1} parent=11 // pred_check
          %p868 = pneg %p364
        $region42: #{tpu_custom_call.1} parent=11 // pred_check_branch
          %870 = sbr.rel (%p868) target = $region44
        $region43: #{tpu_custom_call.1} parent=11 // pred_region
          %s872 = ssub.s32 16, 16
          %873 = vsyncadd [#allocation21], %s872
          %s875 = sshll.u32 [#allocation20], 4
          %s876 = int_to_ptr.vmem [resolvable:$true] %s875
          %878 = dma.hbm_to_vmem [thread:$0]  %s23, 16, %s876, [#allocation21]
        $region44: #{tpu_custom_call.1} parent=11 // pred_fallthru
          _
        // Predicated region
        $region45: #{tpu_custom_call.1} parent=11 // pred_check
          %p879 = pneg %p385
        $region46: #{tpu_custom_call.1} parent=11 // pred_check_branch
          %881 = sbr.rel (%p879) target = $region48
        $region47: #{tpu_custom_call.1} parent=11 // pred_region
          %s883 = ssub.s32 16, 16
          %884 = vsyncadd [#allocation21], %s883
          %s886 = sshll.u32 [#allocation22], 4
          %s887 = int_to_ptr.vmem [resolvable:$true] %s886
          %889 = dma.hbm_to_vmem [thread:$0]  %s25, 16, %s887, [#allocation21]
        $region48: #{tpu_custom_call.1} parent=11 // pred_fallthru
          _
        // Predicated region
        $region49: #{tpu_custom_call.1} parent=11 // pred_check
          %p890 = pneg %p406
        $region50: #{tpu_custom_call.1} parent=11 // pred_check_branch
          %892 = sbr.rel (%p890) target = $region52
        $region51: #{tpu_custom_call.1} parent=11 // pred_region
          %s894 = ssub.s32 16, 16
          %895 = vsyncadd [#allocation24], %s894
          %s897 = sshll.u32 [#allocation23], 4
          %s898 = int_to_ptr.vmem [resolvable:$true] %s897
          %900 = dma.hbm_to_vmem [thread:$0]  %s27, 16, %s898, [#allocation24]
        $region52: #{tpu_custom_call.1} parent=11 // pred_fallthru
          _
        // Predicated region
        $region53: #{tpu_custom_call.1} parent=11 // pred_check
          %p901 = pneg %p427
        $region54: #{tpu_custom_call.1} parent=11 // pred_check_branch
          %903 = sbr.rel (%p901) target = $region56
        $region55: #{tpu_custom_call.1} parent=11 // pred_region
          %s905 = ssub.s32 1024, 1024
          %906 = vsyncadd [#allocation24], %s905
          %s907 = sshll.u32 [#allocation25], 4
          %s908 = int_to_ptr.vmem [resolvable:$true] %s907
          %913 = dma.hbm_to_vmem [thread:$0]  %s29, 1024, %s908, [#allocation24], 64, 64, 4
        $region56: #{tpu_custom_call.1} parent=11 // pred_fallthru
          _
        // Predicated region
        $region57: #{tpu_custom_call.1} parent=11 // pred_check
          %p914 = pneg %p448
        $region58: #{tpu_custom_call.1} parent=11 // pred_check_branch
          %916 = sbr.rel (%p914) target = $region60
        $region59: #{tpu_custom_call.1} parent=11 // pred_region
          %s918 = ssub.s32 16, 16
          %919 = vsyncadd [#allocation27], %s918
          %s921 = sshll.u32 [#allocation26], 4
          %s922 = int_to_ptr.vmem [resolvable:$true] %s921
          %924 = dma.hbm_to_vmem [thread:$0]  %s31, 16, %s922, [#allocation27]
        $region60: #{tpu_custom_call.1} parent=11 // pred_fallthru
          _
        // Predicated region
        $region61: #{tpu_custom_call.1} parent=11 // pred_check
          %p925 = pneg %p469
        $region62: #{tpu_custom_call.1} parent=11 // pred_check_branch
          %927 = sbr.rel (%p925) target = $region64
        $region63: #{tpu_custom_call.1} parent=11 // pred_region
          %s929 = ssub.s32 1024, 1024
          %930 = vsyncadd [#allocation27], %s929
          %s931 = sshll.u32 [#allocation28], 4
          %s932 = int_to_ptr.vmem [resolvable:$true] %s931
          %937 = dma.hbm_to_vmem [thread:$0]  %s33, 1024, %s932, [#allocation27], 64, 64, 4
        $region64: #{tpu_custom_call.1} parent=11 // pred_fallthru
          _
        // Predicated region
        $region65: #{tpu_custom_call.1} parent=11 // pred_check
          %p938 = pneg %p490
        $region66: #{tpu_custom_call.1} parent=11 // pred_check_branch
          %940 = sbr.rel (%p938) target = $region68
        $region67: #{tpu_custom_call.1} parent=11 // pred_region
          %s942 = ssub.s32 16, 16
          %943 = vsyncadd [#allocation30], %s942
          %s945 = sshll.u32 [#allocation29], 4
          %s946 = int_to_ptr.vmem [resolvable:$true] %s945
          %948 = dma.hbm_to_vmem [thread:$0]  %s35, 16, %s946, [#allocation30]
        $region68: #{tpu_custom_call.1} parent=11 // pred_fallthru
          _
        // Predicated region
        $region69: #{tpu_custom_call.1} parent=11 // pred_check
          %p949 = pneg %p511
        $region70: #{tpu_custom_call.1} parent=11 // pred_check_branch
          %951 = sbr.rel (%p949) target = $region72
        $region71: #{tpu_custom_call.1} parent=11 // pred_region
          %s953 = ssub.s32 1024, 1024
          %954 = vsyncadd [#allocation30], %s953
          %s955 = sshll.u32 [#allocation31], 4
          %s956 = int_to_ptr.vmem [resolvable:$true] %s955
          %961 = dma.hbm_to_vmem [thread:$0]  %s37, 1024, %s956, [#allocation30], 64, 64, 4
        $region72: #{tpu_custom_call.1} parent=11 // pred_fallthru
          _
        // Predicated region
        $region73: #{tpu_custom_call.1} parent=11 // pred_check
          %p962 = pneg %p532
        $region74: #{tpu_custom_call.1} parent=11 // pred_check_branch
          %964 = sbr.rel (%p962) target = $region76
        $region75: #{tpu_custom_call.1} parent=11 // pred_region
          %s966 = ssub.s32 16, 16
          %967 = vsyncadd [#allocation33], %s966
          %s969 = sshll.u32 [#allocation32], 4
          %s970 = int_to_ptr.vmem [resolvable:$true] %s969
          %972 = dma.hbm_to_vmem [thread:$0]  %s39, 16, %s970, [#allocation33]
        $region76: #{tpu_custom_call.1} parent=11 // pred_fallthru
          _
        // Predicated region
        $region77: #{tpu_custom_call.1} parent=11 // pred_check
          %p973 = pneg %p553
        $region78: #{tpu_custom_call.1} parent=11 // pred_check_branch
          %975 = sbr.rel (%p973) target = $region80
        $region79: #{tpu_custom_call.1} parent=11 // pred_region
          %s977 = ssub.s32 1024, 1024
          %978 = vsyncadd [#allocation33], %s977
          %s979 = sshll.u32 [#allocation34], 4
          %s980 = int_to_ptr.vmem [resolvable:$true] %s979
          %985 = dma.hbm_to_vmem [thread:$0]  %s41, 1024, %s980, [#allocation33], 64, 64, 4
        $region80: #{tpu_custom_call.1} parent=11 // pred_fallthru
          _
        // Predicated region
        $region81: #{tpu_custom_call.1} parent=11 // pred_check
          %p986 = pneg %p574
        $region82: #{tpu_custom_call.1} parent=11 // pred_check_branch
          %988 = sbr.rel (%p986) target = $region84
        $region83: #{tpu_custom_call.1} parent=11 // pred_region
          %s990 = ssub.s32 16, 16
          %991 = vsyncadd [#allocation36], %s990
          %s993 = sshll.u32 [#allocation35], 4
          %s994 = int_to_ptr.vmem [resolvable:$true] %s993
          %996 = dma.hbm_to_vmem [thread:$0]  %s43, 16, %s994, [#allocation36]
        $region84: #{tpu_custom_call.1} parent=11 // pred_fallthru
          _
        // Predicated region
        $region85: #{tpu_custom_call.1} parent=11 // pred_check
          %p997 = pneg %p595
        $region86: #{tpu_custom_call.1} parent=11 // pred_check_branch
          %999 = sbr.rel (%p997) target = $region88
        $region87: #{tpu_custom_call.1} parent=11 // pred_region
          %s1001 = ssub.s32 16, 16
          %1002 = vsyncadd [#allocation36], %s1001
          %s1004 = sshll.u32 [#allocation37], 4
          %s1005 = int_to_ptr.vmem [resolvable:$true] %s1004
          %1007 = dma.hbm_to_vmem [thread:$0]  %s45, 16, %s1005, [#allocation36]
        $region88: #{tpu_custom_call.1} parent=11 // pred_fallthru
          _
        // Predicated region
        $region89: #{tpu_custom_call.1} parent=11 // pred_check
          %p1008 = pneg %p616
        $region90: #{tpu_custom_call.1} parent=11 // pred_check_branch
          %1010 = sbr.rel (%p1008) target = $region92
        $region91: #{tpu_custom_call.1} parent=11 // pred_region
          %s1012 = ssub.s32 16, 16
          %1013 = vsyncadd [#allocation39], %s1012
          %s1015 = sshll.u32 [#allocation38], 4
          %s1016 = int_to_ptr.vmem [resolvable:$true] %s1015
          %1018 = dma.hbm_to_vmem [thread:$0]  %s47, 16, %s1016, [#allocation39]
        $region92: #{tpu_custom_call.1} parent=11 // pred_fallthru
          _
        // Predicated region
        $region93: #{tpu_custom_call.1} parent=11 // pred_check
          %p1019 = pneg %p637
        $region94: #{tpu_custom_call.1} parent=11 // pred_check_branch
          %1021 = sbr.rel (%p1019) target = $region96
        $region95: #{tpu_custom_call.1} parent=11 // pred_region
          %s1023 = ssub.s32 2048, 2048
          %1024 = vsyncadd [#allocation39], %s1023
          %s1025 = sshll.u32 [#allocation40], 4
          %s1026 = int_to_ptr.vmem [resolvable:$true] %s1025
          %1031 = dma.hbm_to_vmem [thread:$0]  %s49, 2048, %s1026, [#allocation39], 128, 128, 8
        $region96: #{tpu_custom_call.1} parent=11 // pred_fallthru
          _
        // Predicated region
        $region97: #{tpu_custom_call.1} parent=11 // pred_check
          %p1032 = pneg %p658
        $region98: #{tpu_custom_call.1} parent=11 // pred_check_branch
          %1034 = sbr.rel (%p1032) target = $region100
        $region99: #{tpu_custom_call.1} parent=11 // pred_region
          %s1036 = ssub.s32 32, 32
          %1037 = vsyncadd [#allocation42], %s1036
          %s1039 = sshll.u32 [#allocation41], 4
          %s1040 = int_to_ptr.vmem [resolvable:$true] %s1039
          %1042 = dma.hbm_to_vmem [thread:$0]  %s51, 32, %s1040, [#allocation42]
        $region100: #{tpu_custom_call.1} parent=11 // pred_fallthru
          _
        // Predicated region
        $region101: #{tpu_custom_call.1} parent=11 // pred_check
          %p1043 = pneg %p679
        $region102: #{tpu_custom_call.1} parent=11 // pred_check_branch
          %1045 = sbr.rel (%p1043) target = $region104
        $region103: #{tpu_custom_call.1} parent=11 // pred_region
          %s1047 = ssub.s32 2048, 2048
          %1048 = vsyncadd [#allocation42], %s1047
          %s1049 = sshll.u32 [#allocation43], 4
          %s1050 = int_to_ptr.vmem [resolvable:$true] %s1049
          %1055 = dma.hbm_to_vmem [thread:$0]  %s53, 2048, %s1050, [#allocation42], 64, 64, 4
        $region104: #{tpu_custom_call.1} parent=11 // pred_fallthru
          _
        // Predicated region
        $region105: #{tpu_custom_call.1} parent=11 // pred_check
          %p1056 = pneg %p700
        $region106: #{tpu_custom_call.1} parent=11 // pred_check_branch
          %1058 = sbr.rel (%p1056) target = $region108
        $region107: #{tpu_custom_call.1} parent=11 // pred_region
          %s1060 = ssub.s32 16, 16
          %1061 = vsyncadd [#allocation45], %s1060
          %s1063 = sshll.u32 [#allocation44], 4
          %s1064 = int_to_ptr.vmem [resolvable:$true] %s1063
          %1066 = dma.hbm_to_vmem [thread:$0]  %s55, 16, %s1064, [#allocation45]
        $region108: #{tpu_custom_call.1} parent=11 // pred_fallthru
          _
        // Predicated region
        $region109: #{tpu_custom_call.1} parent=11 // pred_check
          %p1067 = pneg %p721
        $region110: #{tpu_custom_call.1} parent=11 // pred_check_branch
          %1069 = sbr.rel (%p1067) target = $region112
        $region111: #{tpu_custom_call.1} parent=11 // pred_region
          %s1071 = ssub.s32 16, 16
          %1072 = vsyncadd [#allocation45], %s1071
          %s1074 = sshll.u32 [#allocation46], 4
          %s1075 = int_to_ptr.vmem [resolvable:$true] %s1074
          %1077 = dma.hbm_to_vmem [thread:$0]  %s57, 16, %s1075, [#allocation45]
        $region112: #{tpu_custom_call.1} parent=11 // pred_fallthru
          _
        // Predicated region
        $region113: #{tpu_custom_call.1} parent=11 // pred_check
          %p1078 = pneg %p742
        $region114: #{tpu_custom_call.1} parent=11 // pred_check_branch
          %1080 = sbr.rel (%p1078) target = $region116
        $region115: #{tpu_custom_call.1} parent=11 // pred_region
          %s1082 = ssub.s32 16, 16
          %1083 = vsyncadd [#allocation48], %s1082
          %s1085 = sshll.u32 [#allocation47], 4
          %s1086 = int_to_ptr.vmem [resolvable:$true] %s1085
          %1088 = dma.hbm_to_vmem [thread:$0]  %s59, 16, %s1086, [#allocation48]
        $region116: #{tpu_custom_call.1} parent=11 // pred_fallthru
          _
      $region12: #{tpu_custom_call.1} parent=5 // pred_fallthru
        _
      %p1089 = scmp.lt.s32.totalorder %s92, 2
      // Predicated region
      $region117: #{tpu_custom_call.1} parent=5 // pred_check
        %p1090 = pneg %p1089
      $region118: #{tpu_custom_call.1} parent=5 // pred_check_branch
        %1092 = sbr.rel (%p1090) target = $region120
      $region119: #{tpu_custom_call.1} parent=5 // pred_region
        // Predicated region
        $region121: #{tpu_custom_call.1} parent=119 // pred_check
          %p1093 = pneg %p112
        $region122: #{tpu_custom_call.1} parent=119 // pred_check_branch
          %1095 = sbr.rel (%p1093) target = $region124
        $region123: #{tpu_custom_call.1} parent=119 // pred_region
          %s1096 = sand.u32 %s102, 1
          %s1097 = scalar_lea.sflag [#allocation3], %s1096
          %s1098 = sand.u32 %s102, 1
          %s1099 = smul.addr %s1098, 8
          %s1100 = scalar_lea.vmem [#allocation2], %s1099
          %s1102 = ssub.s32 128, 128
          %1103 = vsyncadd %s1097, %s1102
          %s1104 = smul.addr %s92, 128
          %s1105 = scalar_lea.hbm %s1, %s1104
          %s1107 = sshll.u32 %s1100, 4
          %s1108 = int_to_ptr.vmem [resolvable:$true] %s1107
          %1110 = dma.hbm_to_vmem [thread:$0]  %s1105, 128, %s1108, %s1097
        $region124: #{tpu_custom_call.1} parent=119 // pred_fallthru
          _
        // Predicated region
        $region125: #{tpu_custom_call.1} parent=119 // pred_check
          %p1111 = pneg %p138
        $region126: #{tpu_custom_call.1} parent=119 // pred_check_branch
          %1113 = sbr.rel (%p1111) target = $region128
        $region127: #{tpu_custom_call.1} parent=119 // pred_region
          %s1114 = sand.u32 %s92, 1
          %s1115 = scalar_lea.sflag [#allocation6], %s1114
          %s1116 = sand.u32 %s128, 1
          %s1117 = smul.addr %s1116, 16
          %s1118 = scalar_lea.vmem [#allocation5], %s1117
          %s1120 = ssub.s32 256, 256
          %1121 = vsyncadd %s1115, %s1120
          %s1122 = smul.addr %s92, 2
          %s1123 = smul.addr %s1122, 128
          %s1124 = scalar_lea.hbm %s3, %s1123
          %s1125 = sshll.u32 %s1118, 4
          %s1126 = int_to_ptr.vmem [resolvable:$true] %s1125
          %1131 = dma.hbm_to_vmem [thread:$0]  %s1124, 256, %s1126, %s1115, 128, 128, 8
        $region128: #{tpu_custom_call.1} parent=119 // pred_fallthru
          _
        // Predicated region
        $region129: #{tpu_custom_call.1} parent=119 // pred_check
          %p1132 = pneg %p164
        $region130: #{tpu_custom_call.1} parent=119 // pred_check_branch
          %1134 = sbr.rel (%p1132) target = $region132
        $region131: #{tpu_custom_call.1} parent=119 // pred_region
          %s1135 = sand.u32 %s92, 1
          %s1136 = scalar_lea.sflag [#allocation6], %s1135
          %s1137 = sand.u32 %s154, 1
          %s1138 = scalar_lea.vmem [#allocation7], %s1137
          %s1140 = ssub.s32 16, 16
          %1141 = vsyncadd %s1136, %s1140
          %s1142 = smul.addr %s92, 16
          %s1143 = scalar_lea.hbm %s5, %s1142
          %s1145 = sshll.u32 %s1138, 4
          %s1146 = int_to_ptr.vmem [resolvable:$true] %s1145
          %1148 = dma.hbm_to_vmem [thread:$0]  %s1143, 16, %s1146, %s1136
        $region132: #{tpu_custom_call.1} parent=119 // pred_fallthru
          _
        // Predicated region
        $region133: #{tpu_custom_call.1} parent=119 // pred_check
          %p1149 = pneg %p190
        $region134: #{tpu_custom_call.1} parent=119 // pred_check_branch
          %1151 = sbr.rel (%p1149) target = $region136
        $region135: #{tpu_custom_call.1} parent=119 // pred_region
          %s1152 = sand.u32 %s92, 1
          %s1153 = scalar_lea.sflag [#allocation9], %s1152
          %s1154 = sand.u32 %s180, 1
          %s1155 = scalar_lea.vmem [#allocation8], %s1154
          %s1157 = ssub.s32 16, 16
          %1158 = vsyncadd %s1153, %s1157
          %s1159 = smul.addr %s92, 16
          %s1160 = scalar_lea.hbm %s7, %s1159
          %s1162 = sshll.u32 %s1155, 4
          %s1163 = int_to_ptr.vmem [resolvable:$true] %s1162
          %1165 = dma.hbm_to_vmem [thread:$0]  %s1160, 16, %s1163, %s1153
        $region136: #{tpu_custom_call.1} parent=119 // pred_fallthru
          _
      $region120: #{tpu_custom_call.1} parent=5 // pred_fallthru
        _
      %p1166 = scmp.le.s32.totalorder 1, %s92
      %p1167 = scmp.lt.s32.totalorder %s92, 3
      %p1168 = pnand %p1166, %p1167
      %p1169 = pneg %p1168
      // Predicated region
      $region137: #{tpu_custom_call.1} parent=5 // pred_check
        _
      $region138: #{tpu_custom_call.1} parent=5 // pred_check_branch
        %1171 = sbr.rel (%p1168) target = $region140
      $region139: #{tpu_custom_call.1} parent=5 // pred_region
        %s1172 = ssub.s32 %s92, 1
        %s1173 = sand.u32 %s105, 1
        %s1174 = scalar_lea.sflag [#allocation3], %s1173
        %s1175 = sand.u32 %s105, 1
        %s1176 = smul.addr %s1175, 8
        %s1177 = scalar_lea.vmem [#allocation2], %s1176
        // Predicated region
        $region141: #{tpu_custom_call.1} parent=139 // pred_check
          %p1178 = pneg %p118
        $region142: #{tpu_custom_call.1} parent=139 // pred_check_branch
          %1180 = sbr.rel (%p1178) target = $region144
        $region143: #{tpu_custom_call.1} parent=139 // pred_region
          %1181 = dma.done %s1174, 128
        $region144: #{tpu_custom_call.1} parent=139 // pred_fallthru
          _
        %s1182 = sand.u32 %s97, 1
        %s1183 = scalar_lea.sflag [#allocation6], %s1182
        %s1184 = sand.u32 %s131, 1
        %s1185 = smul.addr %s1184, 16
        %s1186 = scalar_lea.vmem [#allocation5], %s1185
        // Predicated region
        $region145: #{tpu_custom_call.1} parent=139 // pred_check
          %p1187 = pneg %p144
        $region146: #{tpu_custom_call.1} parent=139 // pred_check_branch
          %1189 = sbr.rel (%p1187) target = $region148
        $region147: #{tpu_custom_call.1} parent=139 // pred_region
          %1190 = dma.done %s1183, 256
        $region148: #{tpu_custom_call.1} parent=139 // pred_fallthru
          _
        %s1191 = sand.u32 %s97, 1
        %s1192 = scalar_lea.sflag [#allocation6], %s1191
        %s1193 = sand.u32 %s157, 1
        %s1194 = scalar_lea.vmem [#allocation7], %s1193
        // Predicated region
        $region149: #{tpu_custom_call.1} parent=139 // pred_check
          %p1195 = pneg %p170
        $region150: #{tpu_custom_call.1} parent=139 // pred_check_branch
          %1197 = sbr.rel (%p1195) target = $region152
        $region151: #{tpu_custom_call.1} parent=139 // pred_region
          %1198 = dma.done %s1192, 16
        $region152: #{tpu_custom_call.1} parent=139 // pred_fallthru
          _
        %s1199 = sand.u32 %s97, 1
        %s1200 = scalar_lea.sflag [#allocation9], %s1199
        %s1201 = sand.u32 %s183, 1
        %s1202 = scalar_lea.vmem [#allocation8], %s1201
        // Predicated region
        $region153: #{tpu_custom_call.1} parent=139 // pred_check
          %p1203 = pneg %p196
        $region154: #{tpu_custom_call.1} parent=139 // pred_check_branch
          %1205 = sbr.rel (%p1203) target = $region156
        $region155: #{tpu_custom_call.1} parent=139 // pred_region
          %1206 = dma.done %s1200, 16
        $region156: #{tpu_custom_call.1} parent=139 // pred_fallthru
          _
        // Predicated region
        $region157: #{tpu_custom_call.1} parent=139 // pred_check
          %p1207 = pneg %p217
        $region158: #{tpu_custom_call.1} parent=139 // pred_check_branch
          %1209 = sbr.rel (%p1207) target = $region160
        $region159: #{tpu_custom_call.1} parent=139 // pred_region
          %1210 = dma.done [#allocation9], 1024
        $region160: #{tpu_custom_call.1} parent=139 // pred_fallthru
          _
        // Predicated region
        $region161: #{tpu_custom_call.1} parent=139 // pred_check
          %p1211 = pneg %p238
        $region162: #{tpu_custom_call.1} parent=139 // pred_check_branch
          %1213 = sbr.rel (%p1211) target = $region164
        $region163: #{tpu_custom_call.1} parent=139 // pred_region
          %1214 = dma.done [#allocation12], 16
        $region164: #{tpu_custom_call.1} parent=139 // pred_fallthru
          _
        // Predicated region
        $region165: #{tpu_custom_call.1} parent=139 // pred_check
          %p1215 = pneg %p259
        $region166: #{tpu_custom_call.1} parent=139 // pred_check_branch
          %1217 = sbr.rel (%p1215) target = $region168
        $region167: #{tpu_custom_call.1} parent=139 // pred_region
          %1218 = dma.done [#allocation12], 1024
        $region168: #{tpu_custom_call.1} parent=139 // pred_fallthru
          _
        // Predicated region
        $region169: #{tpu_custom_call.1} parent=139 // pred_check
          %p1219 = pneg %p280
        $region170: #{tpu_custom_call.1} parent=139 // pred_check_branch
          %1221 = sbr.rel (%p1219) target = $region172
        $region171: #{tpu_custom_call.1} parent=139 // pred_region
          %1222 = dma.done [#allocation15], 16
        $region172: #{tpu_custom_call.1} parent=139 // pred_fallthru
          _
        // Predicated region
        $region173: #{tpu_custom_call.1} parent=139 // pred_check
          %p1223 = pneg %p301
        $region174: #{tpu_custom_call.1} parent=139 // pred_check_branch
          %1225 = sbr.rel (%p1223) target = $region176
        $region175: #{tpu_custom_call.1} parent=139 // pred_region
          %1226 = dma.done [#allocation15], 1024
        $region176: #{tpu_custom_call.1} parent=139 // pred_fallthru
          _
        // Predicated region
        $region177: #{tpu_custom_call.1} parent=139 // pred_check
          %p1227 = pneg %p322
        $region178: #{tpu_custom_call.1} parent=139 // pred_check_branch
          %1229 = sbr.rel (%p1227) target = $region180
        $region179: #{tpu_custom_call.1} parent=139 // pred_region
          %1230 = dma.done [#allocation18], 16
        $region180: #{tpu_custom_call.1} parent=139 // pred_fallthru
          _
        // Predicated region
        $region181: #{tpu_custom_call.1} parent=139 // pred_check
          %p1231 = pneg %p343
        $region182: #{tpu_custom_call.1} parent=139 // pred_check_branch
          %1233 = sbr.rel (%p1231) target = $region184
        $region183: #{tpu_custom_call.1} parent=139 // pred_region
          %1234 = dma.done [#allocation18], 1024
        $region184: #{tpu_custom_call.1} parent=139 // pred_fallthru
          _
        // Predicated region
        $region185: #{tpu_custom_call.1} parent=139 // pred_check
          %p1235 = pneg %p364
        $region186: #{tpu_custom_call.1} parent=139 // pred_check_branch
          %1237 = sbr.rel (%p1235) target = $region188
        $region187: #{tpu_custom_call.1} parent=139 // pred_region
          %1238 = dma.done [#allocation21], 16
        $region188: #{tpu_custom_call.1} parent=139 // pred_fallthru
          _
        // Predicated region
        $region189: #{tpu_custom_call.1} parent=139 // pred_check
          %p1239 = pneg %p385
        $region190: #{tpu_custom_call.1} parent=139 // pred_check_branch
          %1241 = sbr.rel (%p1239) target = $region192
        $region191: #{tpu_custom_call.1} parent=139 // pred_region
          %1242 = dma.done [#allocation21], 16
        $region192: #{tpu_custom_call.1} parent=139 // pred_fallthru
          _
        // Predicated region
        $region193: #{tpu_custom_call.1} parent=139 // pred_check
          %p1243 = pneg %p406
        $region194: #{tpu_custom_call.1} parent=139 // pred_check_branch
          %1245 = sbr.rel (%p1243) target = $region196
        $region195: #{tpu_custom_call.1} parent=139 // pred_region
          %1246 = dma.done [#allocation24], 16
        $region196: #{tpu_custom_call.1} parent=139 // pred_fallthru
          _
        // Predicated region
        $region197: #{tpu_custom_call.1} parent=139 // pred_check
          %p1247 = pneg %p427
        $region198: #{tpu_custom_call.1} parent=139 // pred_check_branch
          %1249 = sbr.rel (%p1247) target = $region200
        $region199: #{tpu_custom_call.1} parent=139 // pred_region
          %1250 = dma.done [#allocation24], 1024
        $region200: #{tpu_custom_call.1} parent=139 // pred_fallthru
          _
        // Predicated region
        $region201: #{tpu_custom_call.1} parent=139 // pred_check
          %p1251 = pneg %p448
        $region202: #{tpu_custom_call.1} parent=139 // pred_check_branch
          %1253 = sbr.rel (%p1251) target = $region204
        $region203: #{tpu_custom_call.1} parent=139 // pred_region
          %1254 = dma.done [#allocation27], 16
        $region204: #{tpu_custom_call.1} parent=139 // pred_fallthru
          _
        // Predicated region
        $region205: #{tpu_custom_call.1} parent=139 // pred_check
          %p1255 = pneg %p469
        $region206: #{tpu_custom_call.1} parent=139 // pred_check_branch
          %1257 = sbr.rel (%p1255) target = $region208
        $region207: #{tpu_custom_call.1} parent=139 // pred_region
          %1258 = dma.done [#allocation27], 1024
        $region208: #{tpu_custom_call.1} parent=139 // pred_fallthru
          _
        // Predicated region
        $region209: #{tpu_custom_call.1} parent=139 // pred_check
          %p1259 = pneg %p490
        $region210: #{tpu_custom_call.1} parent=139 // pred_check_branch
          %1261 = sbr.rel (%p1259) target = $region212
        $region211: #{tpu_custom_call.1} parent=139 // pred_region
          %1262 = dma.done [#allocation30], 16
        $region212: #{tpu_custom_call.1} parent=139 // pred_fallthru
          _
        // Predicated region
        $region213: #{tpu_custom_call.1} parent=139 // pred_check
          %p1263 = pneg %p511
        $region214: #{tpu_custom_call.1} parent=139 // pred_check_branch
          %1265 = sbr.rel (%p1263) target = $region216
        $region215: #{tpu_custom_call.1} parent=139 // pred_region
          %1266 = dma.done [#allocation30], 1024
        $region216: #{tpu_custom_call.1} parent=139 // pred_fallthru
          _
        // Predicated region
        $region217: #{tpu_custom_call.1} parent=139 // pred_check
          %p1267 = pneg %p532
        $region218: #{tpu_custom_call.1} parent=139 // pred_check_branch
          %1269 = sbr.rel (%p1267) target = $region220
        $region219: #{tpu_custom_call.1} parent=139 // pred_region
          %1270 = dma.done [#allocation33], 16
        $region220: #{tpu_custom_call.1} parent=139 // pred_fallthru
          _
        // Predicated region
        $region221: #{tpu_custom_call.1} parent=139 // pred_check
          %p1271 = pneg %p553
        $region222: #{tpu_custom_call.1} parent=139 // pred_check_branch
          %1273 = sbr.rel (%p1271) target = $region224
        $region223: #{tpu_custom_call.1} parent=139 // pred_region
          %1274 = dma.done [#allocation33], 1024
        $region224: #{tpu_custom_call.1} parent=139 // pred_fallthru
          _
        // Predicated region
        $region225: #{tpu_custom_call.1} parent=139 // pred_check
          %p1275 = pneg %p574
        $region226: #{tpu_custom_call.1} parent=139 // pred_check_branch
          %1277 = sbr.rel (%p1275) target = $region228
        $region227: #{tpu_custom_call.1} parent=139 // pred_region
          %1278 = dma.done [#allocation36], 16
        $region228: #{tpu_custom_call.1} parent=139 // pred_fallthru
          _
        // Predicated region
        $region229: #{tpu_custom_call.1} parent=139 // pred_check
          %p1279 = pneg %p595
        $region230: #{tpu_custom_call.1} parent=139 // pred_check_branch
          %1281 = sbr.rel (%p1279) target = $region232
        $region231: #{tpu_custom_call.1} parent=139 // pred_region
          %1282 = dma.done [#allocation36], 16
        $region232: #{tpu_custom_call.1} parent=139 // pred_fallthru
          _
        // Predicated region
        $region233: #{tpu_custom_call.1} parent=139 // pred_check
          %p1283 = pneg %p616
        $region234: #{tpu_custom_call.1} parent=139 // pred_check_branch
          %1285 = sbr.rel (%p1283) target = $region236
        $region235: #{tpu_custom_call.1} parent=139 // pred_region
          %1286 = dma.done [#allocation39], 16
        $region236: #{tpu_custom_call.1} parent=139 // pred_fallthru
          _
        // Predicated region
        $region237: #{tpu_custom_call.1} parent=139 // pred_check
          %p1287 = pneg %p637
        $region238: #{tpu_custom_call.1} parent=139 // pred_check_branch
          %1289 = sbr.rel (%p1287) target = $region240
        $region239: #{tpu_custom_call.1} parent=139 // pred_region
          %1290 = dma.done [#allocation39], 2048
        $region240: #{tpu_custom_call.1} parent=139 // pred_fallthru
          _
        // Predicated region
        $region241: #{tpu_custom_call.1} parent=139 // pred_check
          %p1291 = pneg %p658
        $region242: #{tpu_custom_call.1} parent=139 // pred_check_branch
          %1293 = sbr.rel (%p1291) target = $region244
        $region243: #{tpu_custom_call.1} parent=139 // pred_region
          %1294 = dma.done [#allocation42], 32
        $region244: #{tpu_custom_call.1} parent=139 // pred_fallthru
          _
        // Predicated region
        $region245: #{tpu_custom_call.1} parent=139 // pred_check
          %p1295 = pneg %p679
        $region246: #{tpu_custom_call.1} parent=139 // pred_check_branch
          %1297 = sbr.rel (%p1295) target = $region248
        $region247: #{tpu_custom_call.1} parent=139 // pred_region
          %1298 = dma.done [#allocation42], 2048
        $region248: #{tpu_custom_call.1} parent=139 // pred_fallthru
          _
        // Predicated region
        $region249: #{tpu_custom_call.1} parent=139 // pred_check
          %p1299 = pneg %p700
        $region250: #{tpu_custom_call.1} parent=139 // pred_check_branch
          %1301 = sbr.rel (%p1299) target = $region252
        $region251: #{tpu_custom_call.1} parent=139 // pred_region
          %1302 = dma.done [#allocation45], 16
        $region252: #{tpu_custom_call.1} parent=139 // pred_fallthru
          _
        // Predicated region
        $region253: #{tpu_custom_call.1} parent=139 // pred_check
          %p1303 = pneg %p721
        $region254: #{tpu_custom_call.1} parent=139 // pred_check_branch
          %1305 = sbr.rel (%p1303) target = $region256
        $region255: #{tpu_custom_call.1} parent=139 // pred_region
          %1306 = dma.done [#allocation45], 16
        $region256: #{tpu_custom_call.1} parent=139 // pred_fallthru
          _
        // Predicated region
        $region257: #{tpu_custom_call.1} parent=139 // pred_check
          %p1307 = pneg %p742
        $region258: #{tpu_custom_call.1} parent=139 // pred_check_branch
          %1309 = sbr.rel (%p1307) target = $region260
        $region259: #{tpu_custom_call.1} parent=139 // pred_region
          %1310 = dma.done [#allocation48], 16
        $region260: #{tpu_custom_call.1} parent=139 // pred_fallthru
          _
        %s1311 = sand.u32 %s105, 1
        %s1312 = scalar_lea.sflag [#allocation3], %s1311
        %s1313 = sand.u32 %s105, 1
        %s1314 = smul.addr %s1313, 8
        %s1315 = scalar_lea.vmem [#allocation2], %s1314
        %p1316 = pneg %p118
        %p1317 = pneg %p115
        %s1318 = sand.u32 %s97, 1
        %s1319 = scalar_lea.sflag [#allocation6], %s1318
        %s1320 = sand.u32 %s131, 1
        %s1321 = smul.addr %s1320, 16
        %s1322 = scalar_lea.vmem [#allocation5], %s1321
        %p1323 = pneg %p144
        %p1324 = pneg %p141
        %s1325 = sand.u32 %s97, 1
        %s1326 = scalar_lea.sflag [#allocation6], %s1325
        %s1327 = sand.u32 %s157, 1
        %s1328 = scalar_lea.vmem [#allocation7], %s1327
        %p1329 = pneg %p170
        %p1330 = pneg %p167
        %s1331 = sand.u32 %s97, 1
        %s1332 = scalar_lea.sflag [#allocation9], %s1331
        %s1333 = sand.u32 %s183, 1
        %s1334 = scalar_lea.vmem [#allocation8], %s1333
        %p1335 = pneg %p196
        %p1336 = pneg %p193
        %p1337 = pneg %p217
        %p1338 = pneg %p214
        %p1339 = pneg %p238
        %p1340 = pneg %p235
        %p1341 = pneg %p259
        %p1342 = pneg %p256
        %p1343 = pneg %p280
        %p1344 = pneg %p277
        %p1345 = pneg %p301
        %p1346 = pneg %p298
        %p1347 = pneg %p322
        %p1348 = pneg %p319
        %p1349 = pneg %p343
        %p1350 = pneg %p340
        %p1351 = pneg %p364
        %p1352 = pneg %p361
        %p1353 = pneg %p385
        %p1354 = pneg %p382
        %p1355 = pneg %p406
        %p1356 = pneg %p403
        %p1357 = pneg %p427
        %p1358 = pneg %p424
        %p1359 = pneg %p448
        %p1360 = pneg %p445
        %p1361 = pneg %p469
        %p1362 = pneg %p466
        %p1363 = pneg %p490
        %p1364 = pneg %p487
        %p1365 = pneg %p511
        %p1366 = pneg %p508
        %p1367 = pneg %p532
        %p1368 = pneg %p529
        %p1369 = pneg %p553
        %p1370 = pneg %p550
        %p1371 = pneg %p574
        %p1372 = pneg %p571
        %p1373 = pneg %p595
        %p1374 = pneg %p592
        %p1375 = pneg %p616
        %p1376 = pneg %p613
        %p1377 = pneg %p637
        %p1378 = pneg %p634
        %p1379 = pneg %p658
        %p1380 = pneg %p655
        %p1381 = pneg %p679
        %p1382 = pneg %p676
        %p1383 = pneg %p700
        %p1384 = pneg %p697
        %p1385 = pneg %p721
        %p1386 = pneg %p718
        %p1387 = pneg %p742
        %p1388 = pneg %p739
        %p1389 = pneg %p768
        %p1390 = pneg %p765
        %s1391 = sand.u32 %s755, 1
        %s1392 = scalar_lea.sflag [#allocation4], %s1391
        %s1393 = sand.u32 %s755, 1
        %s1394 = smul.addr %s1393, 8
        %s1395 = scalar_lea.vmem [#allocation49], %s1394
        %v1397 = vld [vmem:[%s1177] sm:$0xff]
        %v1398 = vld [vmem:[%s1186] sm:$0xff]
        %v1399 = vld [vmem:[%s1186 + $0x8] sm:$0xff]
        %v1400 = vld [vmem:[%s1194] sm:$0x1]
        %v1401 = vld [vmem:[#allocation10] sm:$0xf]
        %v1402 = vld [vmem:[#allocation10 + $0x4] sm:$0xf]
        %v1403 = vld [vmem:[#allocation10 + $0x8] sm:$0xf]
        %v1404 = vld [vmem:[#allocation10 + $0xc] sm:$0xf]
        %v1405 = vld [vmem:[#allocation10 + $0x10] sm:$0xf]
        %v1406 = vld [vmem:[#allocation10 + $0x14] sm:$0xf]
        %v1407 = vld [vmem:[#allocation10 + $0x18] sm:$0xf]
        %v1408 = vld [vmem:[#allocation10 + $0x1c] sm:$0xf]
        %v1409 = vld [vmem:[#allocation10 + $0x20] sm:$0xf]
        %v1410 = vld [vmem:[#allocation10 + $0x24] sm:$0xf]
        %v1411 = vld [vmem:[#allocation10 + $0x28] sm:$0xf]
        %v1412 = vld [vmem:[#allocation10 + $0x2c] sm:$0xf]
        %v1413 = vld [vmem:[#allocation10 + $0x30] sm:$0xf]
        %v1414 = vld [vmem:[#allocation10 + $0x34] sm:$0xf]
        %v1415 = vld [vmem:[#allocation10 + $0x38] sm:$0xf]
        %v1416 = vld [vmem:[#allocation10 + $0x3c] sm:$0xf]
        %v1417 = vld [vmem:[#allocation11] sm:$0x1]
        %v1418 = vld [vmem:[#allocation13] sm:$0xf]
        %v1419 = vld [vmem:[#allocation13 + $0x4] sm:$0xf]
        %v1420 = vld [vmem:[#allocation13 + $0x8] sm:$0xf]
        %v1421 = vld [vmem:[#allocation13 + $0xc] sm:$0xf]
        %v1422 = vld [vmem:[#allocation13 + $0x10] sm:$0xf]
        %v1423 = vld [vmem:[#allocation13 + $0x14] sm:$0xf]
        %v1424 = vld [vmem:[#allocation13 + $0x18] sm:$0xf]
        %v1425 = vld [vmem:[#allocation13 + $0x1c] sm:$0xf]
        %v1426 = vld [vmem:[#allocation13 + $0x20] sm:$0xf]
        %v1427 = vld [vmem:[#allocation13 + $0x24] sm:$0xf]
        %v1428 = vld [vmem:[#allocation13 + $0x28] sm:$0xf]
        %v1429 = vld [vmem:[#allocation13 + $0x2c] sm:$0xf]
        %v1430 = vld [vmem:[#allocation13 + $0x30] sm:$0xf]
        %v1431 = vld [vmem:[#allocation13 + $0x34] sm:$0xf]
        %v1432 = vld [vmem:[#allocation13 + $0x38] sm:$0xf]
        %v1433 = vld [vmem:[#allocation13 + $0x3c] sm:$0xf]
        %v1434 = vld [vmem:[#allocation14] sm:$0x1]
        %v1435 = vld [vmem:[#allocation16] sm:$0xf]
        %v1436 = vld [vmem:[#allocation16 + $0x4] sm:$0xf]
        %v1437 = vld [vmem:[#allocation16 + $0x8] sm:$0xf]
        %v1438 = vld [vmem:[#allocation16 + $0xc] sm:$0xf]
        %v1439 = vld [vmem:[#allocation16 + $0x10] sm:$0xf]
        %v1440 = vld [vmem:[#allocation16 + $0x14] sm:$0xf]
        %v1441 = vld [vmem:[#allocation16 + $0x18] sm:$0xf]
        %v1442 = vld [vmem:[#allocation16 + $0x1c] sm:$0xf]
        %v1443 = vld [vmem:[#allocation16 + $0x20] sm:$0xf]
        %v1444 = vld [vmem:[#allocation16 + $0x24] sm:$0xf]
        %v1445 = vld [vmem:[#allocation16 + $0x28] sm:$0xf]
        %v1446 = vld [vmem:[#allocation16 + $0x2c] sm:$0xf]
        %v1447 = vld [vmem:[#allocation16 + $0x30] sm:$0xf]
        %v1448 = vld [vmem:[#allocation16 + $0x34] sm:$0xf]
        %v1449 = vld [vmem:[#allocation16 + $0x38] sm:$0xf]
        %v1450 = vld [vmem:[#allocation16 + $0x3c] sm:$0xf]
        %v1451 = vld [vmem:[#allocation17] sm:$0x1]
        %v1452 = vld [vmem:[#allocation19] sm:$0xf]
        %v1453 = vld [vmem:[#allocation19 + $0x4] sm:$0xf]
        %v1454 = vld [vmem:[#allocation19 + $0x8] sm:$0xf]
        %v1455 = vld [vmem:[#allocation19 + $0xc] sm:$0xf]
        %v1456 = vld [vmem:[#allocation19 + $0x10] sm:$0xf]
        %v1457 = vld [vmem:[#allocation19 + $0x14] sm:$0xf]
        %v1458 = vld [vmem:[#allocation19 + $0x18] sm:$0xf]
        %v1459 = vld [vmem:[#allocation19 + $0x1c] sm:$0xf]
        %v1460 = vld [vmem:[#allocation19 + $0x20] sm:$0xf]
        %v1461 = vld [vmem:[#allocation19 + $0x24] sm:$0xf]
        %v1462 = vld [vmem:[#allocation19 + $0x28] sm:$0xf]
        %v1463 = vld [vmem:[#allocation19 + $0x2c] sm:$0xf]
        %v1464 = vld [vmem:[#allocation19 + $0x30] sm:$0xf]
        %v1465 = vld [vmem:[#allocation19 + $0x34] sm:$0xf]
        %v1466 = vld [vmem:[#allocation19 + $0x38] sm:$0xf]
        %v1467 = vld [vmem:[#allocation19 + $0x3c] sm:$0xf]
        %v1468 = vld [vmem:[#allocation20] sm:$0x1]
        %v1469 = vld [vmem:[#allocation22] sm:$0x1]
        %v1470 = vld [vmem:[#allocation23] sm:$0x1]
        %v1471 = vpack.c.bf16 %v1397, %v1397
        %v1472 = vpack.c.bf16 %v1399, %v1398
        %v1474 = vlaneseq
        %v1475 = vshrl.u32 %v1474, 7
        %v1476 = vsub.s32 0, %v1475
        %v1477 = vrot.slane %v1417, %v1476
        %v1495 = vunpack.c.l.b16 %v1401
        %v1496 = vunpack.c.l.b16 %v1402
        %v1497 = vunpack.c.l.b16 %v1403
        %v1498 = vunpack.c.l.b16 %v1404
        %v1499 = vunpack.c.l.b16 %v1405
        %v1500 = vunpack.c.l.b16 %v1406
        %v1501 = vunpack.c.l.b16 %v1407
        %v1502 = vunpack.c.l.b16 %v1408
        %v1503 = vunpack.c.l.b16 %v1409
        %v1504 = vunpack.c.l.b16 %v1410
        %v1505 = vunpack.c.l.b16 %v1411
        %v1506 = vunpack.c.l.b16 %v1412
        %v1507 = vunpack.c.l.b16 %v1413
        %v1508 = vunpack.c.l.b16 %v1414
        %v1509 = vunpack.c.l.b16 %v1415
        %v1510 = vunpack.c.l.b16 %v1416
        %v1511 = vpack.c.b16 %v1496, %v1495
        %v1512 = vpack.c.b16 %v1498, %v1497
        %v1513 = vpack.c.b16 %v1500, %v1499
        %v1514 = vpack.c.b16 %v1502, %v1501
        %v1515 = vpack.c.b16 %v1504, %v1503
        %v1516 = vpack.c.b16 %v1506, %v1505
        %v1517 = vpack.c.b16 %v1508, %v1507
        %v1518 = vpack.c.b16 %v1510, %v1509
        %1527 = vmatprep.subr.bf16.mxu0 0
        %1528 = vmatpush1.bf16.msra.mxu0 %v1511
        %1529 = vmatprep.subr.bf16.mxu0 0
        %1530 = vmatpush1.bf16.msra.mxu0 %v1512
        %1531 = vmatprep.subr.bf16.mxu0 0
        %1532 = vmatpush1.bf16.msra.mxu0 %v1513
        %1533 = vmatprep.subr.bf16.mxu0 0
        %1534 = vmatpush1.bf16.msra.mxu0 %v1514
        %1535 = vmatprep.subr.bf16.mxu0 0
        %1536 = vmatpush1.bf16.msra.mxu0 %v1515
        %1537 = vmatprep.subr.bf16.mxu0 0
        %1538 = vmatpush1.bf16.msra.mxu0 %v1516
        %1539 = vmatprep.subr.bf16.mxu0 0
        %1540 = vmatpush1.bf16.msra.mxu0 %v1517
        %1541 = vmatprep.subr.bf16.mxu0 0
        %1542 = vmatpush1.bf16.msra.mxu0 %v1518
        %1543 = vmatprep.subr.bf16.mxu0 0
        %1544 = vmatpush1.bf16.msra.mxu0 0
        %1545 = vmatprep.subr.bf16.mxu0 0
        %1546 = vmatpush1.bf16.msra.mxu0 0
        %1547 = vmatprep.subr.bf16.mxu0 0
        %1548 = vmatpush1.bf16.msra.mxu0 0
        %1549 = vmatprep.subr.bf16.mxu0 0
        %1550 = vmatpush1.bf16.msra.mxu0 0
        %1551 = vmatprep.subr.bf16.mxu0 0
        %1552 = vmatpush1.bf16.msra.mxu0 0
        %1553 = vmatprep.subr.bf16.mxu0 0
        %1554 = vmatpush1.bf16.msra.mxu0 0
        %1555 = vmatprep.subr.bf16.mxu0 0
        %1556 = vmatpush1.bf16.msra.mxu0 0
        %1557 = vmatprep.subr.bf16.mxu0 0
        %1558 = vmatpush1.bf16.msra.mxu0 0
        %1559 = vmatprep.mubr.bf16.mxu0 0
        %1560 = vmatmul.mubr.bf16.gmra.mrb[0].mxu0 %v1471
        %v1561 = vpop.f32.mrb[0].mxu0
        %v1562 = vadd.f32 %v1477, %v1561
        %v1563 = vpop.f32.mrb[0].mxu0
        %v1564 = vpop.f32.mrb[0].mxu0
        %v1565 = vpop.f32.mrb[0].mxu0
        %1566 = vdwg.mxu0
        %v1567 = vpack.c.bf16 %v1562, %v1562
        %v1569 = vlaneseq
        %v1570 = vshrl.u32 %v1569, 7
        %v1571 = vsub.s32 0, %v1570
        %v1572 = vrot.slane %v1434, %v1571
        %v1590 = vunpack.c.l.b16 %v1418
        %v1591 = vunpack.c.l.b16 %v1419
        %v1592 = vunpack.c.l.b16 %v1420
        %v1593 = vunpack.c.l.b16 %v1421
        %v1594 = vunpack.c.l.b16 %v1422
        %v1595 = vunpack.c.l.b16 %v1423
        %v1596 = vunpack.c.l.b16 %v1424
        %v1597 = vunpack.c.l.b16 %v1425
        %v1598 = vunpack.c.l.b16 %v1426
        %v1599 = vunpack.c.l.b16 %v1427
        %v1600 = vunpack.c.l.b16 %v1428
        %v1601 = vunpack.c.l.b16 %v1429
        %v1602 = vunpack.c.l.b16 %v1430
        %v1603 = vunpack.c.l.b16 %v1431
        %v1604 = vunpack.c.l.b16 %v1432
        %v1605 = vunpack.c.l.b16 %v1433
        %v1606 = vpack.c.b16 %v1591, %v1590
        %v1607 = vpack.c.b16 %v1593, %v1592
        %v1608 = vpack.c.b16 %v1595, %v1594
        %v1609 = vpack.c.b16 %v1597, %v1596
        %v1610 = vpack.c.b16 %v1599, %v1598
        %v1611 = vpack.c.b16 %v1601, %v1600
        %v1612 = vpack.c.b16 %v1603, %v1602
        %v1613 = vpack.c.b16 %v1605, %v1604
        %1622 = vmatprep.subr.bf16.mxu0 0
        %1623 = vmatpush1.bf16.msra.mxu0 %v1606
        %1624 = vmatprep.subr.bf16.mxu0 0
        %1625 = vmatpush1.bf16.msra.mxu0 %v1607
        %1626 = vmatprep.subr.bf16.mxu0 0
        %1627 = vmatpush1.bf16.msra.mxu0 %v1608
        %1628 = vmatprep.subr.bf16.mxu0 0
        %1629 = vmatpush1.bf16.msra.mxu0 %v1609
        %1630 = vmatprep.subr.bf16.mxu0 0
        %1631 = vmatpush1.bf16.msra.mxu0 %v1610
        %1632 = vmatprep.subr.bf16.mxu0 0
        %1633 = vmatpush1.bf16.msra.mxu0 %v1611
        %1634 = vmatprep.subr.bf16.mxu0 0
        %1635 = vmatpush1.bf16.msra.mxu0 %v1612
        %1636 = vmatprep.subr.bf16.mxu0 0
        %1637 = vmatpush1.bf16.msra.mxu0 %v1613
        %1638 = vmatprep.subr.bf16.mxu0 0
        %1639 = vmatpush1.bf16.msra.mxu0 0
        %1640 = vmatprep.subr.bf16.mxu0 0
        %1641 = vmatpush1.bf16.msra.mxu0 0
        %1642 = vmatprep.subr.bf16.mxu0 0
        %1643 = vmatpush1.bf16.msra.mxu0 0
        %1644 = vmatprep.subr.bf16.mxu0 0
        %1645 = vmatpush1.bf16.msra.mxu0 0
        %1646 = vmatprep.subr.bf16.mxu0 0
        %1647 = vmatpush1.bf16.msra.mxu0 0
        %1648 = vmatprep.subr.bf16.mxu0 0
        %1649 = vmatpush1.bf16.msra.mxu0 0
        %1650 = vmatprep.subr.bf16.mxu0 0
        %1651 = vmatpush1.bf16.msra.mxu0 0
        %1652 = vmatprep.subr.bf16.mxu0 0
        %1653 = vmatpush1.bf16.msra.mxu0 0
        %1654 = vmatprep.mubr.bf16.mxu0 0
        %1655 = vmatmul.mubr.bf16.gmra.mrb[0].mxu0 %v1472
        %v1656 = vpop.f32.mrb[0].mxu0
        %v1657 = vadd.f32 %v1572, %v1656
        %v1658 = vpop.f32.mrb[0].mxu0
        %v1659 = vpop.f32.mrb[0].mxu0
        %v1660 = vadd.f32 %v1572, %v1659
        %v1661 = vpop.f32.mrb[0].mxu0
        %1662 = vdwg.mxu0
        %v1663 = vpack.c.bf16 %v1660, %v1657
        %v1665 = vlaneseq
        %v1666 = vshrl.u32 %v1665, 7
        %v1667 = vsub.s32 0, %v1666
        %v1668 = vrot.slane %v1451, %v1667
        %v1686 = vunpack.c.l.b16 %v1435
        %v1687 = vunpack.c.l.b16 %v1436
        %v1688 = vunpack.c.l.b16 %v1437
        %v1689 = vunpack.c.l.b16 %v1438
        %v1690 = vunpack.c.l.b16 %v1439
        %v1691 = vunpack.c.l.b16 %v1440
        %v1692 = vunpack.c.l.b16 %v1441
        %v1693 = vunpack.c.l.b16 %v1442
        %v1694 = vunpack.c.l.b16 %v1443
        %v1695 = vunpack.c.l.b16 %v1444
        %v1696 = vunpack.c.l.b16 %v1445
        %v1697 = vunpack.c.l.b16 %v1446
        %v1698 = vunpack.c.l.b16 %v1447
        %v1699 = vunpack.c.l.b16 %v1448
        %v1700 = vunpack.c.l.b16 %v1449
        %v1701 = vunpack.c.l.b16 %v1450
        %v1702 = vpack.c.b16 %v1687, %v1686
        %v1703 = vpack.c.b16 %v1689, %v1688
        %v1704 = vpack.c.b16 %v1691, %v1690
        %v1705 = vpack.c.b16 %v1693, %v1692
        %v1706 = vpack.c.b16 %v1695, %v1694
        %v1707 = vpack.c.b16 %v1697, %v1696
        %v1708 = vpack.c.b16 %v1699, %v1698
        %v1709 = vpack.c.b16 %v1701, %v1700
        %1718 = vmatprep.subr.bf16.mxu0 0
        %1719 = vmatpush1.bf16.msra.mxu0 %v1702
        %1720 = vmatprep.subr.bf16.mxu0 0
        %1721 = vmatpush1.bf16.msra.mxu0 %v1703
        %1722 = vmatprep.subr.bf16.mxu0 0
        %1723 = vmatpush1.bf16.msra.mxu0 %v1704
        %1724 = vmatprep.subr.bf16.mxu0 0
        %1725 = vmatpush1.bf16.msra.mxu0 %v1705
        %1726 = vmatprep.subr.bf16.mxu0 0
        %1727 = vmatpush1.bf16.msra.mxu0 %v1706
        %1728 = vmatprep.subr.bf16.mxu0 0
        %1729 = vmatpush1.bf16.msra.mxu0 %v1707
        %1730 = vmatprep.subr.bf16.mxu0 0
        %1731 = vmatpush1.bf16.msra.mxu0 %v1708
        %1732 = vmatprep.subr.bf16.mxu0 0
        %1733 = vmatpush1.bf16.msra.mxu0 %v1709
        %1734 = vmatprep.subr.bf16.mxu0 0
        %1735 = vmatpush1.bf16.msra.mxu0 0
        %1736 = vmatprep.subr.bf16.mxu0 0
        %1737 = vmatpush1.bf16.msra.mxu0 0
        %1738 = vmatprep.subr.bf16.mxu0 0
        %1739 = vmatpush1.bf16.msra.mxu0 0
        %1740 = vmatprep.subr.bf16.mxu0 0
        %1741 = vmatpush1.bf16.msra.mxu0 0
        %1742 = vmatprep.subr.bf16.mxu0 0
        %1743 = vmatpush1.bf16.msra.mxu0 0
        %1744 = vmatprep.subr.bf16.mxu0 0
        %1745 = vmatpush1.bf16.msra.mxu0 0
        %1746 = vmatprep.subr.bf16.mxu0 0
        %1747 = vmatpush1.bf16.msra.mxu0 0
        %1748 = vmatprep.subr.bf16.mxu0 0
        %1749 = vmatpush1.bf16.msra.mxu0 0
        %1750 = vmatprep.mubr.bf16.mxu0 0
        %1751 = vmatmul.mubr.bf16.gmra.mrb[0].mxu0 %v1472
        %v1752 = vpop.f32.mrb[0].mxu0
        %v1753 = vadd.f32 %v1668, %v1752
        %v1754 = vpop.f32.mrb[0].mxu0
        %v1755 = vpop.f32.mrb[0].mxu0
        %v1756 = vadd.f32 %v1668, %v1755
        %v1757 = vpop.f32.mrb[0].mxu0
        %1758 = vdwg.mxu0
        %v1759 = vpack.c.bf16 %v1756, %v1753
        %v1761 = vlaneseq
        %v1762 = vshrl.u32 %v1761, 7
        %v1763 = vsub.s32 0, %v1762
        %v1764 = vrot.slane %v1400, %v1763
        %vm1766 = vcmask 261120
        %v1768 = vsel %vm1766, %v1567, 0
        %v1771 = vsel %vm1766, %v1663, 0
        %1773 = vmatprep.subr.bf16.mxu0 0
        %1774 = vmatpush1.bf16.xpose.msra.mxu0 %v1771
        %1775 = vmatprep.subr.bf16.mxu0 0
        %1776 = vmatpush1.bf16.xpose.msra.mxu0 0
        %1777 = vmatprep.subr.bf16.mxu0 0
        %1778 = vmatpush1.bf16.xpose.msra.mxu0 0
        %1779 = vmatprep.subr.bf16.mxu0 0
        %1780 = vmatpush1.bf16.xpose.msra.mxu0 0
        %1781 = vmatprep.subr.bf16.mxu0 0
        %1782 = vmatpush1.bf16.xpose.msra.mxu0 0
        %1783 = vmatprep.subr.bf16.mxu0 0
        %1784 = vmatpush1.bf16.xpose.msra.mxu0 0
        %1785 = vmatprep.subr.bf16.mxu0 0
        %1786 = vmatpush1.bf16.xpose.msra.mxu0 0
        %1787 = vmatprep.subr.bf16.mxu0 0
        %1788 = vmatpush1.bf16.xpose.msra.mxu0 0
        %1789 = vmatprep.subr.bf16.mxu0 0
        %1790 = vmatpush1.bf16.xpose.msra.mxu0 0
        %1791 = vmatprep.subr.bf16.mxu0 0
        %1792 = vmatpush1.bf16.xpose.msra.mxu0 0
        %1793 = vmatprep.subr.bf16.mxu0 0
        %1794 = vmatpush1.bf16.xpose.msra.mxu0 0
        %1795 = vmatprep.subr.bf16.mxu0 0
        %1796 = vmatpush1.bf16.xpose.msra.mxu0 0
        %1797 = vmatprep.subr.bf16.mxu0 0
        %1798 = vmatpush1.bf16.xpose.msra.mxu0 0
        %1799 = vmatprep.subr.bf16.mxu0 0
        %1800 = vmatpush1.bf16.xpose.msra.mxu0 0
        %1801 = vmatprep.subr.bf16.mxu0 0
        %1802 = vmatpush1.bf16.xpose.msra.mxu0 0
        %1803 = vmatprep.subr.bf16.mxu0 0
        %1804 = vmatpush1.bf16.xpose.msra.mxu0 0
        %1805 = vmatprep.mubr.bf16.mxu0 0
        %1806 = vmatmul.mubr.bf16.gmra.mrb[0].mxu0 %v1768
        %v1807 = vpop.f32.mrb[0].mxu0
        %v1808 = vadd.f32 %v1764, %v1807
        %v1809 = vpop.f32.mrb[0].mxu0
        %v1810 = vpop.f32.mrb[0].mxu0
        %v1811 = vpop.f32.mrb[0].mxu0
        %1812 = vdwg.mxu0
        %vm1813 = vcmask 130048
        %v1814 = vsel %vm1813, %v1808, -inf
        %1815 = vmax.xlane.f32.xlu0 %v1814
        %v1816 = vpop.xlane.xlu0 %1815
        %v1817 = vsub.f32 %v1808, %v1816
        %v1818 = vmul.f32 %v1817, 1.442695
        %v1819 = vpow.pop %v1818
        %v1820 = vsel %vm1813, %v1819, 0.0
        %1821 = vadd.xlane.f32.xlu0 %v1820
        %v1822 = vpop.xlane.xlu0 %1821
        %v1823 = vrcp.pop %v1822
        %v1824 = vmul.f32 %v1819, %v1823
        %v1825 = vpack.c.bf16 %v1824, %v1824
        %v1827 = vsel %vm1813, %v1825, 0
        %1829 = vmatprep.subr.bf16.mxu0 0
        %1830 = vmatpush1.bf16.msra.mxu0 %v1759
        %1831 = vmatprep.subr.bf16.mxu0 0
        %1832 = vmatpush1.bf16.msra.mxu0 0
        %1833 = vmatprep.subr.bf16.mxu0 0
        %1834 = vmatpush1.bf16.msra.mxu0 0
        %1835 = vmatprep.subr.bf16.mxu0 0
        %1836 = vmatpush1.bf16.msra.mxu0 0
        %1837 = vmatprep.subr.bf16.mxu0 0
        %1838 = vmatpush1.bf16.msra.mxu0 0
        %1839 = vmatprep.subr.bf16.mxu0 0
        %1840 = vmatpush1.bf16.msra.mxu0 0
        %1841 = vmatprep.subr.bf16.mxu0 0
        %1842 = vmatpush1.bf16.msra.mxu0 0
        %1843 = vmatprep.subr.bf16.mxu0 0
        %1844 = vmatpush1.bf16.msra.mxu0 0
        %1845 = vmatprep.subr.bf16.mxu0 0
        %1846 = vmatpush1.bf16.msra.mxu0 0
        %1847 = vmatprep.subr.bf16.mxu0 0
        %1848 = vmatpush1.bf16.msra.mxu0 0
        %1849 = vmatprep.subr.bf16.mxu0 0
        %1850 = vmatpush1.bf16.msra.mxu0 0
        %1851 = vmatprep.subr.bf16.mxu0 0
        %1852 = vmatpush1.bf16.msra.mxu0 0
        %1853 = vmatprep.subr.bf16.mxu0 0
        %1854 = vmatpush1.bf16.msra.mxu0 0
        %1855 = vmatprep.subr.bf16.mxu0 0
        %1856 = vmatpush1.bf16.msra.mxu0 0
        %1857 = vmatprep.subr.bf16.mxu0 0
        %1858 = vmatpush1.bf16.msra.mxu0 0
        %1859 = vmatprep.subr.bf16.mxu0 0
        %1860 = vmatpush1.bf16.msra.mxu0 0
        %1861 = vmatprep.mubr.bf16.mxu0 0
        %1862 = vmatmul.mubr.bf16.gmra.mrb[0].mxu0 %v1827
        %v1863 = vpop.f32.mrb[0].mxu0
        %v1864 = vadd.f32 0.0, %v1863
        %v1865 = vpop.f32.mrb[0].mxu0
        %v1866 = vpop.f32.mrb[0].mxu0
        %v1867 = vpop.f32.mrb[0].mxu0
        %1868 = vdwg.mxu0
        %1870 = vrot.lane.b32.xlu0 %v1567, 96
        %v1871 = vpop.permute.xlu0 %1870
        %1873 = vrot.lane.b32.xlu0 %v1663, 96
        %v1874 = vpop.permute.xlu0 %1873
        %v1876 = vsel %vm1766, %v1871, 0
        %v1879 = vsel %vm1766, %v1874, 0
        %1881 = vmatprep.subr.bf16.mxu0 0
        %1882 = vmatpush1.bf16.xpose.msra.mxu0 %v1879
        %1883 = vmatprep.subr.bf16.mxu0 0
        %1884 = vmatpush1.bf16.xpose.msra.mxu0 0
        %1885 = vmatprep.subr.bf16.mxu0 0
        %1886 = vmatpush1.bf16.xpose.msra.mxu0 0
        %1887 = vmatprep.subr.bf16.mxu0 0
        %1888 = vmatpush1.bf16.xpose.msra.mxu0 0
        %1889 = vmatprep.subr.bf16.mxu0 0
        %1890 = vmatpush1.bf16.xpose.msra.mxu0 0
        %1891 = vmatprep.subr.bf16.mxu0 0
        %1892 = vmatpush1.bf16.xpose.msra.mxu0 0
        %1893 = vmatprep.subr.bf16.mxu0 0
        %1894 = vmatpush1.bf16.xpose.msra.mxu0 0
        %1895 = vmatprep.subr.bf16.mxu0 0
        %1896 = vmatpush1.bf16.xpose.msra.mxu0 0
        %1897 = vmatprep.subr.bf16.mxu0 0
        %1898 = vmatpush1.bf16.xpose.msra.mxu0 0
        %1899 = vmatprep.subr.bf16.mxu0 0
        %1900 = vmatpush1.bf16.xpose.msra.mxu0 0
        %1901 = vmatprep.subr.bf16.mxu0 0
        %1902 = vmatpush1.bf16.xpose.msra.mxu0 0
        %1903 = vmatprep.subr.bf16.mxu0 0
        %1904 = vmatpush1.bf16.xpose.msra.mxu0 0
        %1905 = vmatprep.subr.bf16.mxu0 0
        %1906 = vmatpush1.bf16.xpose.msra.mxu0 0
        %1907 = vmatprep.subr.bf16.mxu0 0
        %1908 = vmatpush1.bf16.xpose.msra.mxu0 0
        %1909 = vmatprep.subr.bf16.mxu0 0
        %1910 = vmatpush1.bf16.xpose.msra.mxu0 0
        %1911 = vmatprep.subr.bf16.mxu0 0
        %1912 = vmatpush1.bf16.xpose.msra.mxu0 0
        %1913 = vmatprep.mubr.bf16.mxu0 0
        %1914 = vmatmul.mubr.bf16.gmra.mrb[0].mxu0 %v1876
        %v1915 = vpop.f32.mrb[0].mxu0
        %v1916 = vadd.f32 %v1764, %v1915
        %v1917 = vpop.f32.mrb[0].mxu0
        %v1918 = vpop.f32.mrb[0].mxu0
        %v1919 = vpop.f32.mrb[0].mxu0
        %1920 = vdwg.mxu0
        %v1921 = vsel %vm1813, %v1916, -inf
        %1922 = vmax.xlane.f32.xlu0 %v1921
        %v1923 = vpop.xlane.xlu0 %1922
        %v1924 = vsub.f32 %v1916, %v1923
        %v1925 = vmul.f32 %v1924, 1.442695
        %v1926 = vpow.pop %v1925
        %v1927 = vsel %vm1813, %v1926, 0.0
        %1928 = vadd.xlane.f32.xlu0 %v1927
        %v1929 = vpop.xlane.xlu0 %1928
        %v1930 = vrcp.pop %v1929
        %v1931 = vmul.f32 %v1926, %v1930
        %v1932 = vpack.c.bf16 %v1931, %v1931
        %1934 = vrot.lane.b32.xlu0 %v1759, 96
        %v1935 = vpop.permute.xlu0 %1934
        %v1938 = vsel %vm1813, %v1932, 0
        %1940 = vmatprep.subr.bf16.mxu0 0
        %1941 = vmatpush1.bf16.msra.mxu0 %v1935
        %1942 = vmatprep.subr.bf16.mxu0 0
        %1943 = vmatpush1.bf16.msra.mxu0 0
        %1944 = vmatprep.subr.bf16.mxu0 0
        %1945 = vmatpush1.bf16.msra.mxu0 0
        %1946 = vmatprep.subr.bf16.mxu0 0
        %1947 = vmatpush1.bf16.msra.mxu0 0
        %1948 = vmatprep.subr.bf16.mxu0 0
        %1949 = vmatpush1.bf16.msra.mxu0 0
        %1950 = vmatprep.subr.bf16.mxu0 0
        %1951 = vmatpush1.bf16.msra.mxu0 0
        %1952 = vmatprep.subr.bf16.mxu0 0
        %1953 = vmatpush1.bf16.msra.mxu0 0
        %1954 = vmatprep.subr.bf16.mxu0 0
        %1955 = vmatpush1.bf16.msra.mxu0 0
        %1956 = vmatprep.subr.bf16.mxu0 0
        %1957 = vmatpush1.bf16.msra.mxu0 0
        %1958 = vmatprep.subr.bf16.mxu0 0
        %1959 = vmatpush1.bf16.msra.mxu0 0
        %1960 = vmatprep.subr.bf16.mxu0 0
        %1961 = vmatpush1.bf16.msra.mxu0 0
        %1962 = vmatprep.subr.bf16.mxu0 0
        %1963 = vmatpush1.bf16.msra.mxu0 0
        %1964 = vmatprep.subr.bf16.mxu0 0
        %1965 = vmatpush1.bf16.msra.mxu0 0
        %1966 = vmatprep.subr.bf16.mxu0 0
        %1967 = vmatpush1.bf16.msra.mxu0 0
        %1968 = vmatprep.subr.bf16.mxu0 0
        %1969 = vmatpush1.bf16.msra.mxu0 0
        %1970 = vmatprep.subr.bf16.mxu0 0
        %1971 = vmatpush1.bf16.msra.mxu0 0
        %1972 = vmatprep.mubr.bf16.mxu0 0
        %1973 = vmatmul.mubr.bf16.gmra.mrb[0].mxu0 %v1938
        %v1974 = vpop.f32.mrb[0].mxu0
        %v1975 = vadd.f32 0.0, %v1974
        %v1976 = vpop.f32.mrb[0].mxu0
        %v1977 = vpop.f32.mrb[0].mxu0
        %v1978 = vpop.f32.mrb[0].mxu0
        %1979 = vdwg.mxu0
        %1980 = vrot.lane.b32.xlu0 %v1567, 64
        %v1981 = vpop.permute.xlu0 %1980
        %1982 = vrot.lane.b32.xlu0 %v1663, 64
        %v1983 = vpop.permute.xlu0 %1982
        %v1985 = vsel %vm1766, %v1981, 0
        %v1988 = vsel %vm1766, %v1983, 0
        %1990 = vmatprep.subr.bf16.mxu0 0
        %1991 = vmatpush1.bf16.xpose.msra.mxu0 %v1988
        %1992 = vmatprep.subr.bf16.mxu0 0
        %1993 = vmatpush1.bf16.xpose.msra.mxu0 0
        %1994 = vmatprep.subr.bf16.mxu0 0
        %1995 = vmatpush1.bf16.xpose.msra.mxu0 0
        %1996 = vmatprep.subr.bf16.mxu0 0
        %1997 = vmatpush1.bf16.xpose.msra.mxu0 0
        %1998 = vmatprep.subr.bf16.mxu0 0
        %1999 = vmatpush1.bf16.xpose.msra.mxu0 0
        %2000 = vmatprep.subr.bf16.mxu0 0
        %2001 = vmatpush1.bf16.xpose.msra.mxu0 0
        %2002 = vmatprep.subr.bf16.mxu0 0
        %2003 = vmatpush1.bf16.xpose.msra.mxu0 0
        %2004 = vmatprep.subr.bf16.mxu0 0
        %2005 = vmatpush1.bf16.xpose.msra.mxu0 0
        %2006 = vmatprep.subr.bf16.mxu0 0
        %2007 = vmatpush1.bf16.xpose.msra.mxu0 0
        %2008 = vmatprep.subr.bf16.mxu0 0
        %2009 = vmatpush1.bf16.xpose.msra.mxu0 0
        %2010 = vmatprep.subr.bf16.mxu0 0
        %2011 = vmatpush1.bf16.xpose.msra.mxu0 0
        %2012 = vmatprep.subr.bf16.mxu0 0
        %2013 = vmatpush1.bf16.xpose.msra.mxu0 0
        %2014 = vmatprep.subr.bf16.mxu0 0
        %2015 = vmatpush1.bf16.xpose.msra.mxu0 0
        %2016 = vmatprep.subr.bf16.mxu0 0
        %2017 = vmatpush1.bf16.xpose.msra.mxu0 0
        %2018 = vmatprep.subr.bf16.mxu0 0
        %2019 = vmatpush1.bf16.xpose.msra.mxu0 0
        %2020 = vmatprep.subr.bf16.mxu0 0
        %2021 = vmatpush1.bf16.xpose.msra.mxu0 0
        %2022 = vmatprep.mubr.bf16.mxu0 0
        %2023 = vmatmul.mubr.bf16.gmra.mrb[0].mxu0 %v1985
        %v2024 = vpop.f32.mrb[0].mxu0
        %v2025 = vadd.f32 %v1764, %v2024
        %v2026 = vpop.f32.mrb[0].mxu0
        %v2027 = vpop.f32.mrb[0].mxu0
        %v2028 = vpop.f32.mrb[0].mxu0
        %2029 = vdwg.mxu0
        %v2030 = vsel %vm1813, %v2025, -inf
        %2031 = vmax.xlane.f32.xlu0 %v2030
        %v2032 = vpop.xlane.xlu0 %2031
        %v2033 = vsub.f32 %v2025, %v2032
        %v2034 = vmul.f32 %v2033, 1.442695
        %v2035 = vpow.pop %v2034
        %v2036 = vsel %vm1813, %v2035, 0.0
        %2037 = vadd.xlane.f32.xlu0 %v2036
        %v2038 = vpop.xlane.xlu0 %2037
        %v2039 = vrcp.pop %v2038
        %v2040 = vmul.f32 %v2035, %v2039
        %v2041 = vpack.c.bf16 %v2040, %v2040
        %2042 = vrot.lane.b32.xlu0 %v1759, 64
        %v2043 = vpop.permute.xlu0 %2042
        %v2046 = vsel %vm1813, %v2041, 0
        %2048 = vmatprep.subr.bf16.mxu0 0
        %2049 = vmatpush1.bf16.msra.mxu0 %v2043
        %2050 = vmatprep.subr.bf16.mxu0 0
        %2051 = vmatpush1.bf16.msra.mxu0 0
        %2052 = vmatprep.subr.bf16.mxu0 0
        %2053 = vmatpush1.bf16.msra.mxu0 0
        %2054 = vmatprep.subr.bf16.mxu0 0
        %2055 = vmatpush1.bf16.msra.mxu0 0
        %2056 = vmatprep.subr.bf16.mxu0 0
        %2057 = vmatpush1.bf16.msra.mxu0 0
        %2058 = vmatprep.subr.bf16.mxu0 0
        %2059 = vmatpush1.bf16.msra.mxu0 0
        %2060 = vmatprep.subr.bf16.mxu0 0
        %2061 = vmatpush1.bf16.msra.mxu0 0
        %2062 = vmatprep.subr.bf16.mxu0 0
        %2063 = vmatpush1.bf16.msra.mxu0 0
        %2064 = vmatprep.subr.bf16.mxu0 0
        %2065 = vmatpush1.bf16.msra.mxu0 0
        %2066 = vmatprep.subr.bf16.mxu0 0
        %2067 = vmatpush1.bf16.msra.mxu0 0
        %2068 = vmatprep.subr.bf16.mxu0 0
        %2069 = vmatpush1.bf16.msra.mxu0 0
        %2070 = vmatprep.subr.bf16.mxu0 0
        %2071 = vmatpush1.bf16.msra.mxu0 0
        %2072 = vmatprep.subr.bf16.mxu0 0
        %2073 = vmatpush1.bf16.msra.mxu0 0
        %2074 = vmatprep.subr.bf16.mxu0 0
        %2075 = vmatpush1.bf16.msra.mxu0 0
        %2076 = vmatprep.subr.bf16.mxu0 0
        %2077 = vmatpush1.bf16.msra.mxu0 0
        %2078 = vmatprep.subr.bf16.mxu0 0
        %2079 = vmatpush1.bf16.msra.mxu0 0
        %2080 = vmatprep.mubr.bf16.mxu0 0
        %2081 = vmatmul.mubr.bf16.gmra.mrb[0].mxu0 %v2046
        %v2082 = vpop.f32.mrb[0].mxu0
        %v2083 = vadd.f32 0.0, %v2082
        %v2084 = vpop.f32.mrb[0].mxu0
        %v2085 = vpop.f32.mrb[0].mxu0
        %v2086 = vpop.f32.mrb[0].mxu0
        %2087 = vdwg.mxu0
        %2088 = vrot.lane.b32.xlu0 %v1567, 32
        %v2089 = vpop.permute.xlu0 %2088
        %2090 = vrot.lane.b32.xlu0 %v1663, 32
        %v2091 = vpop.permute.xlu0 %2090
        %v2093 = vsel %vm1766, %v2089, 0
        %v2096 = vsel %vm1766, %v2091, 0
        %2098 = vmatprep.subr.bf16.mxu0 0
        %2099 = vmatpush1.bf16.xpose.msra.mxu0 %v2096
        %2100 = vmatprep.subr.bf16.mxu0 0
        %2101 = vmatpush1.bf16.xpose.msra.mxu0 0
        %2102 = vmatprep.subr.bf16.mxu0 0
        %2103 = vmatpush1.bf16.xpose.msra.mxu0 0
        %2104 = vmatprep.subr.bf16.mxu0 0
        %2105 = vmatpush1.bf16.xpose.msra.mxu0 0
        %2106 = vmatprep.subr.bf16.mxu0 0
        %2107 = vmatpush1.bf16.xpose.msra.mxu0 0
        %2108 = vmatprep.subr.bf16.mxu0 0
        %2109 = vmatpush1.bf16.xpose.msra.mxu0 0
        %2110 = vmatprep.subr.bf16.mxu0 0
        %2111 = vmatpush1.bf16.xpose.msra.mxu0 0
        %2112 = vmatprep.subr.bf16.mxu0 0
        %2113 = vmatpush1.bf16.xpose.msra.mxu0 0
        %2114 = vmatprep.subr.bf16.mxu0 0
        %2115 = vmatpush1.bf16.xpose.msra.mxu0 0
        %2116 = vmatprep.subr.bf16.mxu0 0
        %2117 = vmatpush1.bf16.xpose.msra.mxu0 0
        %2118 = vmatprep.subr.bf16.mxu0 0
        %2119 = vmatpush1.bf16.xpose.msra.mxu0 0
        %2120 = vmatprep.subr.bf16.mxu0 0
        %2121 = vmatpush1.bf16.xpose.msra.mxu0 0
        %2122 = vmatprep.subr.bf16.mxu0 0
        %2123 = vmatpush1.bf16.xpose.msra.mxu0 0
        %2124 = vmatprep.subr.bf16.mxu0 0
        %2125 = vmatpush1.bf16.xpose.msra.mxu0 0
        %2126 = vmatprep.subr.bf16.mxu0 0
        %2127 = vmatpush1.bf16.xpose.msra.mxu0 0
        %2128 = vmatprep.subr.bf16.mxu0 0
        %2129 = vmatpush1.bf16.xpose.msra.mxu0 0
        %2130 = vmatprep.mubr.bf16.mxu0 0
        %2131 = vmatmul.mubr.bf16.gmra.mrb[0].mxu0 %v2093
        %v2132 = vpop.f32.mrb[0].mxu0
        %v2133 = vadd.f32 %v1764, %v2132
        %v2134 = vpop.f32.mrb[0].mxu0
        %v2135 = vpop.f32.mrb[0].mxu0
        %v2136 = vpop.f32.mrb[0].mxu0
        %2137 = vdwg.mxu0
        %v2138 = vsel %vm1813, %v2133, -inf
        %2139 = vmax.xlane.f32.xlu0 %v2138
        %v2140 = vpop.xlane.xlu0 %2139
        %v2141 = vsub.f32 %v2133, %v2140
        %v2142 = vmul.f32 %v2141, 1.442695
        %v2143 = vpow.pop %v2142
        %v2144 = vsel %vm1813, %v2143, 0.0
        %2145 = vadd.xlane.f32.xlu0 %v2144
        %v2146 = vpop.xlane.xlu0 %2145
        %v2147 = vrcp.pop %v2146
        %v2148 = vmul.f32 %v2143, %v2147
        %v2149 = vpack.c.bf16 %v2148, %v2148
        %2150 = vrot.lane.b32.xlu0 %v1759, 32
        %v2151 = vpop.permute.xlu0 %2150
        %v2154 = vsel %vm1813, %v2149, 0
        %2156 = vmatprep.subr.bf16.mxu0 0
        %2157 = vmatpush1.bf16.msra.mxu0 %v2151
        %2158 = vmatprep.subr.bf16.mxu0 0
        %2159 = vmatpush1.bf16.msra.mxu0 0
        %2160 = vmatprep.subr.bf16.mxu0 0
        %2161 = vmatpush1.bf16.msra.mxu0 0
        %2162 = vmatprep.subr.bf16.mxu0 0
        %2163 = vmatpush1.bf16.msra.mxu0 0
        %2164 = vmatprep.subr.bf16.mxu0 0
        %2165 = vmatpush1.bf16.msra.mxu0 0
        %2166 = vmatprep.subr.bf16.mxu0 0
        %2167 = vmatpush1.bf16.msra.mxu0 0
        %2168 = vmatprep.subr.bf16.mxu0 0
        %2169 = vmatpush1.bf16.msra.mxu0 0
        %2170 = vmatprep.subr.bf16.mxu0 0
        %2171 = vmatpush1.bf16.msra.mxu0 0
        %2172 = vmatprep.subr.bf16.mxu0 0
        %2173 = vmatpush1.bf16.msra.mxu0 0
        %2174 = vmatprep.subr.bf16.mxu0 0
        %2175 = vmatpush1.bf16.msra.mxu0 0
        %2176 = vmatprep.subr.bf16.mxu0 0
        %2177 = vmatpush1.bf16.msra.mxu0 0
        %2178 = vmatprep.subr.bf16.mxu0 0
        %2179 = vmatpush1.bf16.msra.mxu0 0
        %2180 = vmatprep.subr.bf16.mxu0 0
        %2181 = vmatpush1.bf16.msra.mxu0 0
        %2182 = vmatprep.subr.bf16.mxu0 0
        %2183 = vmatpush1.bf16.msra.mxu0 0
        %2184 = vmatprep.subr.bf16.mxu0 0
        %2185 = vmatpush1.bf16.msra.mxu0 0
        %2186 = vmatprep.subr.bf16.mxu0 0
        %2187 = vmatpush1.bf16.msra.mxu0 0
        %2188 = vmatprep.mubr.bf16.mxu0 0
        %2189 = vmatmul.mubr.bf16.gmra.mrb[0].mxu0 %v2154
        %v2190 = vpop.f32.mrb[0].mxu0
        %v2191 = vadd.f32 0.0, %v2190
        %v2192 = vpop.f32.mrb[0].mxu0
        %v2193 = vpop.f32.mrb[0].mxu0
        %v2194 = vpop.f32.mrb[0].mxu0
        %2195 = vdwg.mxu0
        %2197 = vrot.lane.b32.xlu0 %v1975, 32
        %v2198 = vpop.permute.xlu0 %2197
        %2201 = vrot.lane.b32.xlu0 %v2083, 64
        %v2202 = vpop.permute.xlu0 %2201
        %2205 = vrot.lane.b32.xlu0 %v2191, 96
        %v2206 = vpop.permute.xlu0 %2205
        %v2208 = vsel %vm1766, %v1864, %v2198
        %vm2209 = vcmask 523264
        %v2210 = vsel %vm2209, %v2208, %v2202
        %vm2211 = vcmask 785408
        %v2212 = vsel %vm2211, %v2210, %v2206
        %v2213 = vpack.c.bf16 %v2212, %v2212
        %v2215 = vlaneseq
        %v2216 = vshrl.u32 %v2215, 7
        %v2217 = vsub.s32 0, %v2216
        %v2218 = vrot.slane %v1468, %v2217
        %v2236 = vunpack.c.l.b16 %v1452
        %v2237 = vunpack.c.l.b16 %v1453
        %v2238 = vunpack.c.l.b16 %v1454
        %v2239 = vunpack.c.l.b16 %v1455
        %v2240 = vunpack.c.l.b16 %v1456
        %v2241 = vunpack.c.l.b16 %v1457
        %v2242 = vunpack.c.l.b16 %v1458
        %v2243 = vunpack.c.l.b16 %v1459
        %v2244 = vunpack.c.l.b16 %v1460
        %v2245 = vunpack.c.l.b16 %v1461
        %v2246 = vunpack.c.l.b16 %v1462
        %v2247 = vunpack.c.l.b16 %v1463
        %v2248 = vunpack.c.l.b16 %v1464
        %v2249 = vunpack.c.l.b16 %v1465
        %v2250 = vunpack.c.l.b16 %v1466
        %v2251 = vunpack.c.l.b16 %v1467
        %v2252 = vpack.c.b16 %v2237, %v2236
        %v2253 = vpack.c.b16 %v2239, %v2238
        %v2254 = vpack.c.b16 %v2241, %v2240
        %v2255 = vpack.c.b16 %v2243, %v2242
        %v2256 = vpack.c.b16 %v2245, %v2244
        %v2257 = vpack.c.b16 %v2247, %v2246
        %v2258 = vpack.c.b16 %v2249, %v2248
        %v2259 = vpack.c.b16 %v2251, %v2250
        %2268 = vmatprep.subr.bf16.mxu0 0
        %2269 = vmatpush1.bf16.msra.mxu0 %v2252
        %2270 = vmatprep.subr.bf16.mxu0 0
        %2271 = vmatpush1.bf16.msra.mxu0 %v2253
        %2272 = vmatprep.subr.bf16.mxu0 0
        %2273 = vmatpush1.bf16.msra.mxu0 %v2254
        %2274 = vmatprep.subr.bf16.mxu0 0
        %2275 = vmatpush1.bf16.msra.mxu0 %v2255
        %2276 = vmatprep.subr.bf16.mxu0 0
        %2277 = vmatpush1.bf16.msra.mxu0 %v2256
        %2278 = vmatprep.subr.bf16.mxu0 0
        %2279 = vmatpush1.bf16.msra.mxu0 %v2257
        %2280 = vmatprep.subr.bf16.mxu0 0
        %2281 = vmatpush1.bf16.msra.mxu0 %v2258
        %2282 = vmatprep.subr.bf16.mxu0 0
        %2283 = vmatpush1.bf16.msra.mxu0 %v2259
        %2284 = vmatprep.subr.bf16.mxu0 0
        %2285 = vmatpush1.bf16.msra.mxu0 0
        %2286 = vmatprep.subr.bf16.mxu0 0
        %2287 = vmatpush1.bf16.msra.mxu0 0
        %2288 = vmatprep.subr.bf16.mxu0 0
        %2289 = vmatpush1.bf16.msra.mxu0 0
        %2290 = vmatprep.subr.bf16.mxu0 0
        %2291 = vmatpush1.bf16.msra.mxu0 0
        %2292 = vmatprep.subr.bf16.mxu0 0
        %2293 = vmatpush1.bf16.msra.mxu0 0
        %2294 = vmatprep.subr.bf16.mxu0 0
        %2295 = vmatpush1.bf16.msra.mxu0 0
        %2296 = vmatprep.subr.bf16.mxu0 0
        %2297 = vmatpush1.bf16.msra.mxu0 0
        %2298 = vmatprep.subr.bf16.mxu0 0
        %2299 = vmatpush1.bf16.msra.mxu0 0
        %2300 = vmatprep.mubr.bf16.mxu0 0
        %2301 = vmatmul.mubr.bf16.gmra.mrb[0].mxu0 %v2213
        %v2302 = vpop.f32.mrb[0].mxu0
        %v2303 = vadd.f32 %v2218, %v2302
        %v2304 = vpop.f32.mrb[0].mxu0
        %v2305 = vpop.f32.mrb[0].mxu0
        %v2306 = vpop.f32.mrb[0].mxu0
        %2307 = vdwg.mxu0
        %v2308 = vadd.f32 %v2303, %v1397
        %2309 = vadd.xlane.f32.xlu0 %v2308
        %v2310 = vpop.xlane.xlu0 %2309
        %v2311 = vrcp.pop 128.0
        %v2312 = vmul.f32 %v2310, %v2311
        %v2313 = vsub.f32 %v2308, %v2312
        %v2314 = vmul.f32 %v2313, %v2313
        %2315 = vadd.xlane.f32.xlu0 %v2314
        %v2316 = vpop.xlane.xlu0 %2315
        %v2317 = vmul.f32 %v2316, %v2311
        %v2318 = vadd.f32 %v2317, 1e-12
        %v2319 = vrsqrt.pop %v2318
        %v2320 = vmul.f32 %v2313, %v2319
        %v2322 = vlaneseq
        %v2323 = vshrl.u32 %v2322, 7
        %v2324 = vsub.s32 0, %v2323
        %v2325 = vrot.slane %v1469, %v2324
        %v2327 = vmul.f32 %v2320, %v2325
        %v2329 = vlaneseq
        %v2330 = vshrl.u32 %v2329, 7
        %v2331 = vsub.s32 0, %v2330
        %v2332 = vrot.slane %v1470, %v2331
        %v2334 = vadd.f32 %v2327, %v2332
        %v2335 = vld [vmem:[%s1202] sm:$0x1]
        %v2336 = vld [vmem:[#allocation25] sm:$0xf]
        %v2337 = vld [vmem:[#allocation25 + $0x4] sm:$0xf]
        %v2338 = vld [vmem:[#allocation25 + $0x8] sm:$0xf]
        %v2339 = vld [vmem:[#allocation25 + $0xc] sm:$0xf]
        %v2340 = vld [vmem:[#allocation25 + $0x10] sm:$0xf]
        %v2341 = vld [vmem:[#allocation25 + $0x14] sm:$0xf]
        %v2342 = vld [vmem:[#allocation25 + $0x18] sm:$0xf]
        %v2343 = vld [vmem:[#allocation25 + $0x1c] sm:$0xf]
        %v2344 = vld [vmem:[#allocation25 + $0x20] sm:$0xf]
        %v2345 = vld [vmem:[#allocation25 + $0x24] sm:$0xf]
        %v2346 = vld [vmem:[#allocation25 + $0x28] sm:$0xf]
        %v2347 = vld [vmem:[#allocation25 + $0x2c] sm:$0xf]
        %v2348 = vld [vmem:[#allocation25 + $0x30] sm:$0xf]
        %v2349 = vld [vmem:[#allocation25 + $0x34] sm:$0xf]
        %v2350 = vld [vmem:[#allocation25 + $0x38] sm:$0xf]
        %v2351 = vld [vmem:[#allocation25 + $0x3c] sm:$0xf]
        %v2352 = vld [vmem:[#allocation26] sm:$0x1]
        %v2353 = vld [vmem:[#allocation28] sm:$0xf]
        %v2354 = vld [vmem:[#allocation28 + $0x4] sm:$0xf]
        %v2355 = vld [vmem:[#allocation28 + $0x8] sm:$0xf]
        %v2356 = vld [vmem:[#allocation28 + $0xc] sm:$0xf]
        %v2357 = vld [vmem:[#allocation28 + $0x10] sm:$0xf]
        %v2358 = vld [vmem:[#allocation28 + $0x14] sm:$0xf]
        %v2359 = vld [vmem:[#allocation28 + $0x18] sm:$0xf]
        %v2360 = vld [vmem:[#allocation28 + $0x1c] sm:$0xf]
        %v2361 = vld [vmem:[#allocation28 + $0x20] sm:$0xf]
        %v2362 = vld [vmem:[#allocation28 + $0x24] sm:$0xf]
        %v2363 = vld [vmem:[#allocation28 + $0x28] sm:$0xf]
        %v2364 = vld [vmem:[#allocation28 + $0x2c] sm:$0xf]
        %v2365 = vld [vmem:[#allocation28 + $0x30] sm:$0xf]
        %v2366 = vld [vmem:[#allocation28 + $0x34] sm:$0xf]
        %v2367 = vld [vmem:[#allocation28 + $0x38] sm:$0xf]
        %v2368 = vld [vmem:[#allocation28 + $0x3c] sm:$0xf]
        %v2369 = vld [vmem:[#allocation29] sm:$0x1]
        %v2370 = vld [vmem:[#allocation31] sm:$0xf]
        %v2371 = vld [vmem:[#allocation31 + $0x4] sm:$0xf]
        %v2372 = vld [vmem:[#allocation31 + $0x8] sm:$0xf]
        %v2373 = vld [vmem:[#allocation31 + $0xc] sm:$0xf]
        %v2374 = vld [vmem:[#allocation31 + $0x10] sm:$0xf]
        %v2375 = vld [vmem:[#allocation31 + $0x14] sm:$0xf]
        %v2376 = vld [vmem:[#allocation31 + $0x18] sm:$0xf]
        %v2377 = vld [vmem:[#allocation31 + $0x1c] sm:$0xf]
        %v2378 = vld [vmem:[#allocation31 + $0x20] sm:$0xf]
        %v2379 = vld [vmem:[#allocation31 + $0x24] sm:$0xf]
        %v2380 = vld [vmem:[#allocation31 + $0x28] sm:$0xf]
        %v2381 = vld [vmem:[#allocation31 + $0x2c] sm:$0xf]
        %v2382 = vld [vmem:[#allocation31 + $0x30] sm:$0xf]
        %v2383 = vld [vmem:[#allocation31 + $0x34] sm:$0xf]
        %v2384 = vld [vmem:[#allocation31 + $0x38] sm:$0xf]
        %v2385 = vld [vmem:[#allocation31 + $0x3c] sm:$0xf]
        %v2386 = vld [vmem:[#allocation32] sm:$0x1]
        %v2387 = vld [vmem:[#allocation34] sm:$0xf]
        %v2388 = vld [vmem:[#allocation34 + $0x4] sm:$0xf]
        %v2389 = vld [vmem:[#allocation34 + $0x8] sm:$0xf]
        %v2390 = vld [vmem:[#allocation34 + $0xc] sm:$0xf]
        %v2391 = vld [vmem:[#allocation34 + $0x10] sm:$0xf]
        %v2392 = vld [vmem:[#allocation34 + $0x14] sm:$0xf]
        %v2393 = vld [vmem:[#allocation34 + $0x18] sm:$0xf]
        %v2394 = vld [vmem:[#allocation34 + $0x1c] sm:$0xf]
        %v2395 = vld [vmem:[#allocation34 + $0x20] sm:$0xf]
        %v2396 = vld [vmem:[#allocation34 + $0x24] sm:$0xf]
        %v2397 = vld [vmem:[#allocation34 + $0x28] sm:$0xf]
        %v2398 = vld [vmem:[#allocation34 + $0x2c] sm:$0xf]
        %v2399 = vld [vmem:[#allocation34 + $0x30] sm:$0xf]
        %v2400 = vld [vmem:[#allocation34 + $0x34] sm:$0xf]
        %v2401 = vld [vmem:[#allocation34 + $0x38] sm:$0xf]
        %v2402 = vld [vmem:[#allocation34 + $0x3c] sm:$0xf]
        %v2403 = vld [vmem:[#allocation35] sm:$0x1]
        %v2404 = vld [vmem:[#allocation37] sm:$0x1]
        %v2405 = vld [vmem:[#allocation38] sm:$0x1]
        %v2406 = vpack.c.bf16 %v2334, %v2334
        %v2408 = vlaneseq
        %v2409 = vshrl.u32 %v2408, 7
        %v2410 = vsub.s32 0, %v2409
        %v2411 = vrot.slane %v2352, %v2410
        %v2429 = vunpack.c.l.b16 %v2336
        %v2430 = vunpack.c.l.b16 %v2337
        %v2431 = vunpack.c.l.b16 %v2338
        %v2432 = vunpack.c.l.b16 %v2339
        %v2433 = vunpack.c.l.b16 %v2340
        %v2434 = vunpack.c.l.b16 %v2341
        %v2435 = vunpack.c.l.b16 %v2342
        %v2436 = vunpack.c.l.b16 %v2343
        %v2437 = vunpack.c.l.b16 %v2344
        %v2438 = vunpack.c.l.b16 %v2345
        %v2439 = vunpack.c.l.b16 %v2346
        %v2440 = vunpack.c.l.b16 %v2347
        %v2441 = vunpack.c.l.b16 %v2348
        %v2442 = vunpack.c.l.b16 %v2349
        %v2443 = vunpack.c.l.b16 %v2350
        %v2444 = vunpack.c.l.b16 %v2351
        %v2445 = vpack.c.b16 %v2430, %v2429
        %v2446 = vpack.c.b16 %v2432, %v2431
        %v2447 = vpack.c.b16 %v2434, %v2433
        %v2448 = vpack.c.b16 %v2436, %v2435
        %v2449 = vpack.c.b16 %v2438, %v2437
        %v2450 = vpack.c.b16 %v2440, %v2439
        %v2451 = vpack.c.b16 %v2442, %v2441
        %v2452 = vpack.c.b16 %v2444, %v2443
        %2461 = vmatprep.subr.bf16.mxu0 0
        %2462 = vmatpush1.bf16.msra.mxu0 %v2445
        %2463 = vmatprep.subr.bf16.mxu0 0
        %2464 = vmatpush1.bf16.msra.mxu0 %v2446
        %2465 = vmatprep.subr.bf16.mxu0 0
        %2466 = vmatpush1.bf16.msra.mxu0 %v2447
        %2467 = vmatprep.subr.bf16.mxu0 0
        %2468 = vmatpush1.bf16.msra.mxu0 %v2448
        %2469 = vmatprep.subr.bf16.mxu0 0
        %2470 = vmatpush1.bf16.msra.mxu0 %v2449
        %2471 = vmatprep.subr.bf16.mxu0 0
        %2472 = vmatpush1.bf16.msra.mxu0 %v2450
        %2473 = vmatprep.subr.bf16.mxu0 0
        %2474 = vmatpush1.bf16.msra.mxu0 %v2451
        %2475 = vmatprep.subr.bf16.mxu0 0
        %2476 = vmatpush1.bf16.msra.mxu0 %v2452
        %2477 = vmatprep.subr.bf16.mxu0 0
        %2478 = vmatpush1.bf16.msra.mxu0 0
        %2479 = vmatprep.subr.bf16.mxu0 0
        %2480 = vmatpush1.bf16.msra.mxu0 0
        %2481 = vmatprep.subr.bf16.mxu0 0
        %2482 = vmatpush1.bf16.msra.mxu0 0
        %2483 = vmatprep.subr.bf16.mxu0 0
        %2484 = vmatpush1.bf16.msra.mxu0 0
        %2485 = vmatprep.subr.bf16.mxu0 0
        %2486 = vmatpush1.bf16.msra.mxu0 0
        %2487 = vmatprep.subr.bf16.mxu0 0
        %2488 = vmatpush1.bf16.msra.mxu0 0
        %2489 = vmatprep.subr.bf16.mxu0 0
        %2490 = vmatpush1.bf16.msra.mxu0 0
        %2491 = vmatprep.subr.bf16.mxu0 0
        %2492 = vmatpush1.bf16.msra.mxu0 0
        %2493 = vmatprep.mubr.bf16.mxu0 0
        %2494 = vmatmul.mubr.bf16.gmra.mrb[0].mxu0 %v2406
        %v2495 = vpop.f32.mrb[0].mxu0
        %v2496 = vadd.f32 %v2411, %v2495
        %v2497 = vpop.f32.mrb[0].mxu0
        %v2498 = vpop.f32.mrb[0].mxu0
        %v2499 = vpop.f32.mrb[0].mxu0
        %2500 = vdwg.mxu0
        %v2501 = vpack.c.bf16 %v2496, %v2496
        %v2503 = vlaneseq
        %v2504 = vshrl.u32 %v2503, 7
        %v2505 = vsub.s32 0, %v2504
        %v2506 = vrot.slane %v2369, %v2505
        %v2524 = vunpack.c.l.b16 %v2353
        %v2525 = vunpack.c.l.b16 %v2354
        %v2526 = vunpack.c.l.b16 %v2355
        %v2527 = vunpack.c.l.b16 %v2356
        %v2528 = vunpack.c.l.b16 %v2357
        %v2529 = vunpack.c.l.b16 %v2358
        %v2530 = vunpack.c.l.b16 %v2359
        %v2531 = vunpack.c.l.b16 %v2360
        %v2532 = vunpack.c.l.b16 %v2361
        %v2533 = vunpack.c.l.b16 %v2362
        %v2534 = vunpack.c.l.b16 %v2363
        %v2535 = vunpack.c.l.b16 %v2364
        %v2536 = vunpack.c.l.b16 %v2365
        %v2537 = vunpack.c.l.b16 %v2366
        %v2538 = vunpack.c.l.b16 %v2367
        %v2539 = vunpack.c.l.b16 %v2368
        %v2540 = vpack.c.b16 %v2525, %v2524
        %v2541 = vpack.c.b16 %v2527, %v2526
        %v2542 = vpack.c.b16 %v2529, %v2528
        %v2543 = vpack.c.b16 %v2531, %v2530
        %v2544 = vpack.c.b16 %v2533, %v2532
        %v2545 = vpack.c.b16 %v2535, %v2534
        %v2546 = vpack.c.b16 %v2537, %v2536
        %v2547 = vpack.c.b16 %v2539, %v2538
        %2556 = vmatprep.subr.bf16.mxu0 0
        %2557 = vmatpush1.bf16.msra.mxu0 %v2540
        %2558 = vmatprep.subr.bf16.mxu0 0
        %2559 = vmatpush1.bf16.msra.mxu0 %v2541
        %2560 = vmatprep.subr.bf16.mxu0 0
        %2561 = vmatpush1.bf16.msra.mxu0 %v2542
        %2562 = vmatprep.subr.bf16.mxu0 0
        %2563 = vmatpush1.bf16.msra.mxu0 %v2543
        %2564 = vmatprep.subr.bf16.mxu0 0
        %2565 = vmatpush1.bf16.msra.mxu0 %v2544
        %2566 = vmatprep.subr.bf16.mxu0 0
        %2567 = vmatpush1.bf16.msra.mxu0 %v2545
        %2568 = vmatprep.subr.bf16.mxu0 0
        %2569 = vmatpush1.bf16.msra.mxu0 %v2546
        %2570 = vmatprep.subr.bf16.mxu0 0
        %2571 = vmatpush1.bf16.msra.mxu0 %v2547
        %2572 = vmatprep.subr.bf16.mxu0 0
        %2573 = vmatpush1.bf16.msra.mxu0 0
        %2574 = vmatprep.subr.bf16.mxu0 0
        %2575 = vmatpush1.bf16.msra.mxu0 0
        %2576 = vmatprep.subr.bf16.mxu0 0
        %2577 = vmatpush1.bf16.msra.mxu0 0
        %2578 = vmatprep.subr.bf16.mxu0 0
        %2579 = vmatpush1.bf16.msra.mxu0 0
        %2580 = vmatprep.subr.bf16.mxu0 0
        %2581 = vmatpush1.bf16.msra.mxu0 0
        %2582 = vmatprep.subr.bf16.mxu0 0
        %2583 = vmatpush1.bf16.msra.mxu0 0
        %2584 = vmatprep.subr.bf16.mxu0 0
        %2585 = vmatpush1.bf16.msra.mxu0 0
        %2586 = vmatprep.subr.bf16.mxu0 0
        %2587 = vmatpush1.bf16.msra.mxu0 0
        %2588 = vmatprep.mubr.bf16.mxu0 0
        %2589 = vmatmul.mubr.bf16.gmra.mrb[0].mxu0 %v2406
        %v2590 = vpop.f32.mrb[0].mxu0
        %v2591 = vadd.f32 %v2506, %v2590
        %v2592 = vpop.f32.mrb[0].mxu0
        %v2593 = vpop.f32.mrb[0].mxu0
        %v2594 = vpop.f32.mrb[0].mxu0
        %2595 = vdwg.mxu0
        %v2596 = vpack.c.bf16 %v2591, %v2591
        %v2598 = vlaneseq
        %v2599 = vshrl.u32 %v2598, 7
        %v2600 = vsub.s32 0, %v2599
        %v2601 = vrot.slane %v2386, %v2600
        %v2619 = vunpack.c.l.b16 %v2370
        %v2620 = vunpack.c.l.b16 %v2371
        %v2621 = vunpack.c.l.b16 %v2372
        %v2622 = vunpack.c.l.b16 %v2373
        %v2623 = vunpack.c.l.b16 %v2374
        %v2624 = vunpack.c.l.b16 %v2375
        %v2625 = vunpack.c.l.b16 %v2376
        %v2626 = vunpack.c.l.b16 %v2377
        %v2627 = vunpack.c.l.b16 %v2378
        %v2628 = vunpack.c.l.b16 %v2379
        %v2629 = vunpack.c.l.b16 %v2380
        %v2630 = vunpack.c.l.b16 %v2381
        %v2631 = vunpack.c.l.b16 %v2382
        %v2632 = vunpack.c.l.b16 %v2383
        %v2633 = vunpack.c.l.b16 %v2384
        %v2634 = vunpack.c.l.b16 %v2385
        %v2635 = vpack.c.b16 %v2620, %v2619
        %v2636 = vpack.c.b16 %v2622, %v2621
        %v2637 = vpack.c.b16 %v2624, %v2623
        %v2638 = vpack.c.b16 %v2626, %v2625
        %v2639 = vpack.c.b16 %v2628, %v2627
        %v2640 = vpack.c.b16 %v2630, %v2629
        %v2641 = vpack.c.b16 %v2632, %v2631
        %v2642 = vpack.c.b16 %v2634, %v2633
        %2651 = vmatprep.subr.bf16.mxu0 0
        %2652 = vmatpush1.bf16.msra.mxu0 %v2635
        %2653 = vmatprep.subr.bf16.mxu0 0
        %2654 = vmatpush1.bf16.msra.mxu0 %v2636
        %2655 = vmatprep.subr.bf16.mxu0 0
        %2656 = vmatpush1.bf16.msra.mxu0 %v2637
        %2657 = vmatprep.subr.bf16.mxu0 0
        %2658 = vmatpush1.bf16.msra.mxu0 %v2638
        %2659 = vmatprep.subr.bf16.mxu0 0
        %2660 = vmatpush1.bf16.msra.mxu0 %v2639
        %2661 = vmatprep.subr.bf16.mxu0 0
        %2662 = vmatpush1.bf16.msra.mxu0 %v2640
        %2663 = vmatprep.subr.bf16.mxu0 0
        %2664 = vmatpush1.bf16.msra.mxu0 %v2641
        %2665 = vmatprep.subr.bf16.mxu0 0
        %2666 = vmatpush1.bf16.msra.mxu0 %v2642
        %2667 = vmatprep.subr.bf16.mxu0 0
        %2668 = vmatpush1.bf16.msra.mxu0 0
        %2669 = vmatprep.subr.bf16.mxu0 0
        %2670 = vmatpush1.bf16.msra.mxu0 0
        %2671 = vmatprep.subr.bf16.mxu0 0
        %2672 = vmatpush1.bf16.msra.mxu0 0
        %2673 = vmatprep.subr.bf16.mxu0 0
        %2674 = vmatpush1.bf16.msra.mxu0 0
        %2675 = vmatprep.subr.bf16.mxu0 0
        %2676 = vmatpush1.bf16.msra.mxu0 0
        %2677 = vmatprep.subr.bf16.mxu0 0
        %2678 = vmatpush1.bf16.msra.mxu0 0
        %2679 = vmatprep.subr.bf16.mxu0 0
        %2680 = vmatpush1.bf16.msra.mxu0 0
        %2681 = vmatprep.subr.bf16.mxu0 0
        %2682 = vmatpush1.bf16.msra.mxu0 0
        %2683 = vmatprep.mubr.bf16.mxu0 0
        %2684 = vmatmul.mubr.bf16.gmra.mrb[0].mxu0 %v2406
        %v2685 = vpop.f32.mrb[0].mxu0
        %v2686 = vadd.f32 %v2601, %v2685
        %v2687 = vpop.f32.mrb[0].mxu0
        %v2688 = vpop.f32.mrb[0].mxu0
        %v2689 = vpop.f32.mrb[0].mxu0
        %2690 = vdwg.mxu0
        %v2691 = vpack.c.bf16 %v2686, %v2686
        %v2693 = vlaneseq
        %v2694 = vshrl.u32 %v2693, 7
        %v2695 = vsub.s32 0, %v2694
        %v2696 = vrot.slane %v2335, %v2695
        %v2699 = vsel %vm1766, %v2501, 0
        %v2702 = vsel %vm1766, %v2596, 0
        %2704 = vmatprep.subr.bf16.mxu0 0
        %2705 = vmatpush1.bf16.xpose.msra.mxu0 %v2702
        %2706 = vmatprep.subr.bf16.mxu0 0
        %2707 = vmatpush1.bf16.xpose.msra.mxu0 0
        %2708 = vmatprep.subr.bf16.mxu0 0
        %2709 = vmatpush1.bf16.xpose.msra.mxu0 0
        %2710 = vmatprep.subr.bf16.mxu0 0
        %2711 = vmatpush1.bf16.xpose.msra.mxu0 0
        %2712 = vmatprep.subr.bf16.mxu0 0
        %2713 = vmatpush1.bf16.xpose.msra.mxu0 0
        %2714 = vmatprep.subr.bf16.mxu0 0
        %2715 = vmatpush1.bf16.xpose.msra.mxu0 0
        %2716 = vmatprep.subr.bf16.mxu0 0
        %2717 = vmatpush1.bf16.xpose.msra.mxu0 0
        %2718 = vmatprep.subr.bf16.mxu0 0
        %2719 = vmatpush1.bf16.xpose.msra.mxu0 0
        %2720 = vmatprep.subr.bf16.mxu0 0
        %2721 = vmatpush1.bf16.xpose.msra.mxu0 0
        %2722 = vmatprep.subr.bf16.mxu0 0
        %2723 = vmatpush1.bf16.xpose.msra.mxu0 0
        %2724 = vmatprep.subr.bf16.mxu0 0
        %2725 = vmatpush1.bf16.xpose.msra.mxu0 0
        %2726 = vmatprep.subr.bf16.mxu0 0
        %2727 = vmatpush1.bf16.xpose.msra.mxu0 0
        %2728 = vmatprep.subr.bf16.mxu0 0
        %2729 = vmatpush1.bf16.xpose.msra.mxu0 0
        %2730 = vmatprep.subr.bf16.mxu0 0
        %2731 = vmatpush1.bf16.xpose.msra.mxu0 0
        %2732 = vmatprep.subr.bf16.mxu0 0
        %2733 = vmatpush1.bf16.xpose.msra.mxu0 0
        %2734 = vmatprep.subr.bf16.mxu0 0
        %2735 = vmatpush1.bf16.xpose.msra.mxu0 0
        %2736 = vmatprep.mubr.bf16.mxu0 0
        %2737 = vmatmul.mubr.bf16.gmra.mrb[0].mxu0 %v2699
        %v2738 = vpop.f32.mrb[0].mxu0
        %v2739 = vadd.f32 %v2696, %v2738
        %v2740 = vpop.f32.mrb[0].mxu0
        %v2741 = vpop.f32.mrb[0].mxu0
        %v2742 = vpop.f32.mrb[0].mxu0
        %2743 = vdwg.mxu0
        %vm2744 = vcmask 64512
        %v2745 = vsel %vm2744, %v2739, -inf
        %2746 = vmax.xlane.f32.xlu0 %v2745
        %v2747 = vpop.xlane.xlu0 %2746
        %v2748 = vsub.f32 %v2739, %v2747
        %v2749 = vmul.f32 %v2748, 1.442695
        %v2750 = vpow.pop %v2749
        %v2751 = vsel %vm2744, %v2750, 0.0
        %2752 = vadd.xlane.f32.xlu0 %v2751
        %v2753 = vpop.xlane.xlu0 %2752
        %v2754 = vrcp.pop %v2753
        %v2755 = vmul.f32 %v2750, %v2754
        %v2756 = vpack.c.bf16 %v2755, %v2755
        %v2758 = vsel %vm2744, %v2756, 0
        %vm2760 = vcmask 1043456
        %v2762 = vsel %vm2760, %v2691, 0
        %2764 = vmatprep.subr.bf16.mxu0 0
        %2765 = vmatpush1.bf16.msra.mxu0 %v2762
        %2766 = vmatprep.subr.bf16.mxu0 0
        %2767 = vmatpush1.bf16.msra.mxu0 0
        %2768 = vmatprep.subr.bf16.mxu0 0
        %2769 = vmatpush1.bf16.msra.mxu0 0
        %2770 = vmatprep.subr.bf16.mxu0 0
        %2771 = vmatpush1.bf16.msra.mxu0 0
        %2772 = vmatprep.subr.bf16.mxu0 0
        %2773 = vmatpush1.bf16.msra.mxu0 0
        %2774 = vmatprep.subr.bf16.mxu0 0
        %2775 = vmatpush1.bf16.msra.mxu0 0
        %2776 = vmatprep.subr.bf16.mxu0 0
        %2777 = vmatpush1.bf16.msra.mxu0 0
        %2778 = vmatprep.subr.bf16.mxu0 0
        %2779 = vmatpush1.bf16.msra.mxu0 0
        %2780 = vmatprep.subr.bf16.mxu0 0
        %2781 = vmatpush1.bf16.msra.mxu0 0
        %2782 = vmatprep.subr.bf16.mxu0 0
        %2783 = vmatpush1.bf16.msra.mxu0 0
        %2784 = vmatprep.subr.bf16.mxu0 0
        %2785 = vmatpush1.bf16.msra.mxu0 0
        %2786 = vmatprep.subr.bf16.mxu0 0
        %2787 = vmatpush1.bf16.msra.mxu0 0
        %2788 = vmatprep.subr.bf16.mxu0 0
        %2789 = vmatpush1.bf16.msra.mxu0 0
        %2790 = vmatprep.subr.bf16.mxu0 0
        %2791 = vmatpush1.bf16.msra.mxu0 0
        %2792 = vmatprep.subr.bf16.mxu0 0
        %2793 = vmatpush1.bf16.msra.mxu0 0
        %2794 = vmatprep.subr.bf16.mxu0 0
        %2795 = vmatpush1.bf16.msra.mxu0 0
        %2796 = vmatprep.mubr.bf16.mxu0 0
        %2797 = vmatmul.mubr.bf16.gmra.mrb[0].mxu0 %v2758
        %v2798 = vpop.f32.mrb[0].mxu0
        %v2799 = vadd.f32 0.0, %v2798
        %v2800 = vpop.f32.mrb[0].mxu0
        %v2801 = vpop.f32.mrb[0].mxu0
        %v2802 = vpop.f32.mrb[0].mxu0
        %2803 = vdwg.mxu0
        %2805 = vrot.lane.b32.xlu0 %v2501, 96
        %v2806 = vpop.permute.xlu0 %2805
        %2808 = vrot.lane.b32.xlu0 %v2596, 96
        %v2809 = vpop.permute.xlu0 %2808
        %v2811 = vsel %vm1766, %v2806, 0
        %v2814 = vsel %vm1766, %v2809, 0
        %2816 = vmatprep.subr.bf16.mxu0 0
        %2817 = vmatpush1.bf16.xpose.msra.mxu0 %v2814
        %2818 = vmatprep.subr.bf16.mxu0 0
        %2819 = vmatpush1.bf16.xpose.msra.mxu0 0
        %2820 = vmatprep.subr.bf16.mxu0 0
        %2821 = vmatpush1.bf16.xpose.msra.mxu0 0
        %2822 = vmatprep.subr.bf16.mxu0 0
        %2823 = vmatpush1.bf16.xpose.msra.mxu0 0
        %2824 = vmatprep.subr.bf16.mxu0 0
        %2825 = vmatpush1.bf16.xpose.msra.mxu0 0
        %2826 = vmatprep.subr.bf16.mxu0 0
        %2827 = vmatpush1.bf16.xpose.msra.mxu0 0
        %2828 = vmatprep.subr.bf16.mxu0 0
        %2829 = vmatpush1.bf16.xpose.msra.mxu0 0
        %2830 = vmatprep.subr.bf16.mxu0 0
        %2831 = vmatpush1.bf16.xpose.msra.mxu0 0
        %2832 = vmatprep.subr.bf16.mxu0 0
        %2833 = vmatpush1.bf16.xpose.msra.mxu0 0
        %2834 = vmatprep.subr.bf16.mxu0 0
        %2835 = vmatpush1.bf16.xpose.msra.mxu0 0
        %2836 = vmatprep.subr.bf16.mxu0 0
        %2837 = vmatpush1.bf16.xpose.msra.mxu0 0
        %2838 = vmatprep.subr.bf16.mxu0 0
        %2839 = vmatpush1.bf16.xpose.msra.mxu0 0
        %2840 = vmatprep.subr.bf16.mxu0 0
        %2841 = vmatpush1.bf16.xpose.msra.mxu0 0
        %2842 = vmatprep.subr.bf16.mxu0 0
        %2843 = vmatpush1.bf16.xpose.msra.mxu0 0
        %2844 = vmatprep.subr.bf16.mxu0 0
        %2845 = vmatpush1.bf16.xpose.msra.mxu0 0
        %2846 = vmatprep.subr.bf16.mxu0 0
        %2847 = vmatpush1.bf16.xpose.msra.mxu0 0
        %2848 = vmatprep.mubr.bf16.mxu0 0
        %2849 = vmatmul.mubr.bf16.gmra.mrb[0].mxu0 %v2811
        %v2850 = vpop.f32.mrb[0].mxu0
        %v2851 = vadd.f32 %v2696, %v2850
        %v2852 = vpop.f32.mrb[0].mxu0
        %v2853 = vpop.f32.mrb[0].mxu0
        %v2854 = vpop.f32.mrb[0].mxu0
        %2855 = vdwg.mxu0
        %v2856 = vsel %vm2744, %v2851, -inf
        %2857 = vmax.xlane.f32.xlu0 %v2856
        %v2858 = vpop.xlane.xlu0 %2857
        %v2859 = vsub.f32 %v2851, %v2858
        %v2860 = vmul.f32 %v2859, 1.442695
        %v2861 = vpow.pop %v2860
        %v2862 = vsel %vm2744, %v2861, 0.0
        %2863 = vadd.xlane.f32.xlu0 %v2862
        %v2864 = vpop.xlane.xlu0 %2863
        %v2865 = vrcp.pop %v2864
        %v2866 = vmul.f32 %v2861, %v2865
        %v2867 = vpack.c.bf16 %v2866, %v2866
        %2869 = vrot.lane.b32.xlu0 %v2691, 96
        %v2870 = vpop.permute.xlu0 %2869
        %v2872 = vsel %vm2744, %v2867, 0
        %v2875 = vsel %vm2760, %v2870, 0
        %2877 = vmatprep.subr.bf16.mxu0 0
        %2878 = vmatpush1.bf16.msra.mxu0 %v2875
        %2879 = vmatprep.subr.bf16.mxu0 0
        %2880 = vmatpush1.bf16.msra.mxu0 0
        %2881 = vmatprep.subr.bf16.mxu0 0
        %2882 = vmatpush1.bf16.msra.mxu0 0
        %2883 = vmatprep.subr.bf16.mxu0 0
        %2884 = vmatpush1.bf16.msra.mxu0 0
        %2885 = vmatprep.subr.bf16.mxu0 0
        %2886 = vmatpush1.bf16.msra.mxu0 0
        %2887 = vmatprep.subr.bf16.mxu0 0
        %2888 = vmatpush1.bf16.msra.mxu0 0
        %2889 = vmatprep.subr.bf16.mxu0 0
        %2890 = vmatpush1.bf16.msra.mxu0 0
        %2891 = vmatprep.subr.bf16.mxu0 0
        %2892 = vmatpush1.bf16.msra.mxu0 0
        %2893 = vmatprep.subr.bf16.mxu0 0
        %2894 = vmatpush1.bf16.msra.mxu0 0
        %2895 = vmatprep.subr.bf16.mxu0 0
        %2896 = vmatpush1.bf16.msra.mxu0 0
        %2897 = vmatprep.subr.bf16.mxu0 0
        %2898 = vmatpush1.bf16.msra.mxu0 0
        %2899 = vmatprep.subr.bf16.mxu0 0
        %2900 = vmatpush1.bf16.msra.mxu0 0
        %2901 = vmatprep.subr.bf16.mxu0 0
        %2902 = vmatpush1.bf16.msra.mxu0 0
        %2903 = vmatprep.subr.bf16.mxu0 0
        %2904 = vmatpush1.bf16.msra.mxu0 0
        %2905 = vmatprep.subr.bf16.mxu0 0
        %2906 = vmatpush1.bf16.msra.mxu0 0
        %2907 = vmatprep.subr.bf16.mxu0 0
        %2908 = vmatpush1.bf16.msra.mxu0 0
        %2909 = vmatprep.mubr.bf16.mxu0 0
        %2910 = vmatmul.mubr.bf16.gmra.mrb[0].mxu0 %v2872
        %v2911 = vpop.f32.mrb[0].mxu0
        %v2912 = vadd.f32 0.0, %v2911
        %v2913 = vpop.f32.mrb[0].mxu0
        %v2914 = vpop.f32.mrb[0].mxu0
        %v2915 = vpop.f32.mrb[0].mxu0
        %2916 = vdwg.mxu0
        %2917 = vrot.lane.b32.xlu0 %v2501, 64
        %v2918 = vpop.permute.xlu0 %2917
        %2919 = vrot.lane.b32.xlu0 %v2596, 64
        %v2920 = vpop.permute.xlu0 %2919
        %v2922 = vsel %vm1766, %v2918, 0
        %v2925 = vsel %vm1766, %v2920, 0
        %2927 = vmatprep.subr.bf16.mxu0 0
        %2928 = vmatpush1.bf16.xpose.msra.mxu0 %v2925
        %2929 = vmatprep.subr.bf16.mxu0 0
        %2930 = vmatpush1.bf16.xpose.msra.mxu0 0
        %2931 = vmatprep.subr.bf16.mxu0 0
        %2932 = vmatpush1.bf16.xpose.msra.mxu0 0
        %2933 = vmatprep.subr.bf16.mxu0 0
        %2934 = vmatpush1.bf16.xpose.msra.mxu0 0
        %2935 = vmatprep.subr.bf16.mxu0 0
        %2936 = vmatpush1.bf16.xpose.msra.mxu0 0
        %2937 = vmatprep.subr.bf16.mxu0 0
        %2938 = vmatpush1.bf16.xpose.msra.mxu0 0
        %2939 = vmatprep.subr.bf16.mxu0 0
        %2940 = vmatpush1.bf16.xpose.msra.mxu0 0
        %2941 = vmatprep.subr.bf16.mxu0 0
        %2942 = vmatpush1.bf16.xpose.msra.mxu0 0
        %2943 = vmatprep.subr.bf16.mxu0 0
        %2944 = vmatpush1.bf16.xpose.msra.mxu0 0
        %2945 = vmatprep.subr.bf16.mxu0 0
        %2946 = vmatpush1.bf16.xpose.msra.mxu0 0
        %2947 = vmatprep.subr.bf16.mxu0 0
        %2948 = vmatpush1.bf16.xpose.msra.mxu0 0
        %2949 = vmatprep.subr.bf16.mxu0 0
        %2950 = vmatpush1.bf16.xpose.msra.mxu0 0
        %2951 = vmatprep.subr.bf16.mxu0 0
        %2952 = vmatpush1.bf16.xpose.msra.mxu0 0
        %2953 = vmatprep.subr.bf16.mxu0 0
        %2954 = vmatpush1.bf16.xpose.msra.mxu0 0
        %2955 = vmatprep.subr.bf16.mxu0 0
        %2956 = vmatpush1.bf16.xpose.msra.mxu0 0
        %2957 = vmatprep.subr.bf16.mxu0 0
        %2958 = vmatpush1.bf16.xpose.msra.mxu0 0
        %2959 = vmatprep.mubr.bf16.mxu0 0
        %2960 = vmatmul.mubr.bf16.gmra.mrb[0].mxu0 %v2922
        %v2961 = vpop.f32.mrb[0].mxu0
        %v2962 = vadd.f32 %v2696, %v2961
        %v2963 = vpop.f32.mrb[0].mxu0
        %v2964 = vpop.f32.mrb[0].mxu0
        %v2965 = vpop.f32.mrb[0].mxu0
        %2966 = vdwg.mxu0
        %v2967 = vsel %vm2744, %v2962, -inf
        %2968 = vmax.xlane.f32.xlu0 %v2967
        %v2969 = vpop.xlane.xlu0 %2968
        %v2970 = vsub.f32 %v2962, %v2969
        %v2971 = vmul.f32 %v2970, 1.442695
        %v2972 = vpow.pop %v2971
        %v2973 = vsel %vm2744, %v2972, 0.0
        %2974 = vadd.xlane.f32.xlu0 %v2973
        %v2975 = vpop.xlane.xlu0 %2974
        %v2976 = vrcp.pop %v2975
        %v2977 = vmul.f32 %v2972, %v2976
        %v2978 = vpack.c.bf16 %v2977, %v2977
        %2979 = vrot.lane.b32.xlu0 %v2691, 64
        %v2980 = vpop.permute.xlu0 %2979
        %v2982 = vsel %vm2744, %v2978, 0
        %v2985 = vsel %vm2760, %v2980, 0
        %2987 = vmatprep.subr.bf16.mxu0 0
        %2988 = vmatpush1.bf16.msra.mxu0 %v2985
        %2989 = vmatprep.subr.bf16.mxu0 0
        %2990 = vmatpush1.bf16.msra.mxu0 0
        %2991 = vmatprep.subr.bf16.mxu0 0
        %2992 = vmatpush1.bf16.msra.mxu0 0
        %2993 = vmatprep.subr.bf16.mxu0 0
        %2994 = vmatpush1.bf16.msra.mxu0 0
        %2995 = vmatprep.subr.bf16.mxu0 0
        %2996 = vmatpush1.bf16.msra.mxu0 0
        %2997 = vmatprep.subr.bf16.mxu0 0
        %2998 = vmatpush1.bf16.msra.mxu0 0
        %2999 = vmatprep.subr.bf16.mxu0 0
        %3000 = vmatpush1.bf16.msra.mxu0 0
        %3001 = vmatprep.subr.bf16.mxu0 0
        %3002 = vmatpush1.bf16.msra.mxu0 0
        %3003 = vmatprep.subr.bf16.mxu0 0
        %3004 = vmatpush1.bf16.msra.mxu0 0
        %3005 = vmatprep.subr.bf16.mxu0 0
        %3006 = vmatpush1.bf16.msra.mxu0 0
        %3007 = vmatprep.subr.bf16.mxu0 0
        %3008 = vmatpush1.bf16.msra.mxu0 0
        %3009 = vmatprep.subr.bf16.mxu0 0
        %3010 = vmatpush1.bf16.msra.mxu0 0
        %3011 = vmatprep.subr.bf16.mxu0 0
        %3012 = vmatpush1.bf16.msra.mxu0 0
        %3013 = vmatprep.subr.bf16.mxu0 0
        %3014 = vmatpush1.bf16.msra.mxu0 0
        %3015 = vmatprep.subr.bf16.mxu0 0
        %3016 = vmatpush1.bf16.msra.mxu0 0
        %3017 = vmatprep.subr.bf16.mxu0 0
        %3018 = vmatpush1.bf16.msra.mxu0 0
        %3019 = vmatprep.mubr.bf16.mxu0 0
        %3020 = vmatmul.mubr.bf16.gmra.mrb[0].mxu0 %v2982
        %v3021 = vpop.f32.mrb[0].mxu0
        %v3022 = vadd.f32 0.0, %v3021
        %v3023 = vpop.f32.mrb[0].mxu0
        %v3024 = vpop.f32.mrb[0].mxu0
        %v3025 = vpop.f32.mrb[0].mxu0
        %3026 = vdwg.mxu0
        %3027 = vrot.lane.b32.xlu0 %v2501, 32
        %v3028 = vpop.permute.xlu0 %3027
        %3029 = vrot.lane.b32.xlu0 %v2596, 32
        %v3030 = vpop.permute.xlu0 %3029
        %v3032 = vsel %vm1766, %v3028, 0
        %v3035 = vsel %vm1766, %v3030, 0
        %3037 = vmatprep.subr.bf16.mxu0 0
        %3038 = vmatpush1.bf16.xpose.msra.mxu0 %v3035
        %3039 = vmatprep.subr.bf16.mxu0 0
        %3040 = vmatpush1.bf16.xpose.msra.mxu0 0
        %3041 = vmatprep.subr.bf16.mxu0 0
        %3042 = vmatpush1.bf16.xpose.msra.mxu0 0
        %3043 = vmatprep.subr.bf16.mxu0 0
        %3044 = vmatpush1.bf16.xpose.msra.mxu0 0
        %3045 = vmatprep.subr.bf16.mxu0 0
        %3046 = vmatpush1.bf16.xpose.msra.mxu0 0
        %3047 = vmatprep.subr.bf16.mxu0 0
        %3048 = vmatpush1.bf16.xpose.msra.mxu0 0
        %3049 = vmatprep.subr.bf16.mxu0 0
        %3050 = vmatpush1.bf16.xpose.msra.mxu0 0
        %3051 = vmatprep.subr.bf16.mxu0 0
        %3052 = vmatpush1.bf16.xpose.msra.mxu0 0
        %3053 = vmatprep.subr.bf16.mxu0 0
        %3054 = vmatpush1.bf16.xpose.msra.mxu0 0
        %3055 = vmatprep.subr.bf16.mxu0 0
        %3056 = vmatpush1.bf16.xpose.msra.mxu0 0
        %3057 = vmatprep.subr.bf16.mxu0 0
        %3058 = vmatpush1.bf16.xpose.msra.mxu0 0
        %3059 = vmatprep.subr.bf16.mxu0 0
        %3060 = vmatpush1.bf16.xpose.msra.mxu0 0
        %3061 = vmatprep.subr.bf16.mxu0 0
        %3062 = vmatpush1.bf16.xpose.msra.mxu0 0
        %3063 = vmatprep.subr.bf16.mxu0 0
        %3064 = vmatpush1.bf16.xpose.msra.mxu0 0
        %3065 = vmatprep.subr.bf16.mxu0 0
        %3066 = vmatpush1.bf16.xpose.msra.mxu0 0
        %3067 = vmatprep.subr.bf16.mxu0 0
        %3068 = vmatpush1.bf16.xpose.msra.mxu0 0
        %3069 = vmatprep.mubr.bf16.mxu0 0
        %3070 = vmatmul.mubr.bf16.gmra.mrb[0].mxu0 %v3032
        %v3071 = vpop.f32.mrb[0].mxu0
        %v3072 = vadd.f32 %v2696, %v3071
        %v3073 = vpop.f32.mrb[0].mxu0
        %v3074 = vpop.f32.mrb[0].mxu0
        %v3075 = vpop.f32.mrb[0].mxu0
        %3076 = vdwg.mxu0
        %v3077 = vsel %vm2744, %v3072, -inf
        %3078 = vmax.xlane.f32.xlu0 %v3077
        %v3079 = vpop.xlane.xlu0 %3078
        %v3080 = vsub.f32 %v3072, %v3079
        %v3081 = vmul.f32 %v3080, 1.442695
        %v3082 = vpow.pop %v3081
        %v3083 = vsel %vm2744, %v3082, 0.0
        %3084 = vadd.xlane.f32.xlu0 %v3083
        %v3085 = vpop.xlane.xlu0 %3084
        %v3086 = vrcp.pop %v3085
        %v3087 = vmul.f32 %v3082, %v3086
        %v3088 = vpack.c.bf16 %v3087, %v3087
        %3089 = vrot.lane.b32.xlu0 %v2691, 32
        %v3090 = vpop.permute.xlu0 %3089
        %v3092 = vsel %vm2744, %v3088, 0
        %v3095 = vsel %vm2760, %v3090, 0
        %3097 = vmatprep.subr.bf16.mxu0 0
        %3098 = vmatpush1.bf16.msra.mxu0 %v3095
        %3099 = vmatprep.subr.bf16.mxu0 0
        %3100 = vmatpush1.bf16.msra.mxu0 0
        %3101 = vmatprep.subr.bf16.mxu0 0
        %3102 = vmatpush1.bf16.msra.mxu0 0
        %3103 = vmatprep.subr.bf16.mxu0 0
        %3104 = vmatpush1.bf16.msra.mxu0 0
        %3105 = vmatprep.subr.bf16.mxu0 0
        %3106 = vmatpush1.bf16.msra.mxu0 0
        %3107 = vmatprep.subr.bf16.mxu0 0
        %3108 = vmatpush1.bf16.msra.mxu0 0
        %3109 = vmatprep.subr.bf16.mxu0 0
        %3110 = vmatpush1.bf16.msra.mxu0 0
        %3111 = vmatprep.subr.bf16.mxu0 0
        %3112 = vmatpush1.bf16.msra.mxu0 0
        %3113 = vmatprep.subr.bf16.mxu0 0
        %3114 = vmatpush1.bf16.msra.mxu0 0
        %3115 = vmatprep.subr.bf16.mxu0 0
        %3116 = vmatpush1.bf16.msra.mxu0 0
        %3117 = vmatprep.subr.bf16.mxu0 0
        %3118 = vmatpush1.bf16.msra.mxu0 0
        %3119 = vmatprep.subr.bf16.mxu0 0
        %3120 = vmatpush1.bf16.msra.mxu0 0
        %3121 = vmatprep.subr.bf16.mxu0 0
        %3122 = vmatpush1.bf16.msra.mxu0 0
        %3123 = vmatprep.subr.bf16.mxu0 0
        %3124 = vmatpush1.bf16.msra.mxu0 0
        %3125 = vmatprep.subr.bf16.mxu0 0
        %3126 = vmatpush1.bf16.msra.mxu0 0
        %3127 = vmatprep.subr.bf16.mxu0 0
        %3128 = vmatpush1.bf16.msra.mxu0 0
        %3129 = vmatprep.mubr.bf16.mxu0 0
        %3130 = vmatmul.mubr.bf16.gmra.mrb[0].mxu0 %v3092
        %v3131 = vpop.f32.mrb[0].mxu0
        %v3132 = vadd.f32 0.0, %v3131
        %v3133 = vpop.f32.mrb[0].mxu0
        %v3134 = vpop.f32.mrb[0].mxu0
        %v3135 = vpop.f32.mrb[0].mxu0
        %3136 = vdwg.mxu0
        %3138 = vrot.lane.b32.xlu0 %v2912, 32
        %v3139 = vpop.permute.xlu0 %3138
        %3142 = vrot.lane.b32.xlu0 %v3022, 64
        %v3143 = vpop.permute.xlu0 %3142
        %3146 = vrot.lane.b32.xlu0 %v3132, 96
        %v3147 = vpop.permute.xlu0 %3146
        %v3149 = vsel %vm1766, %v2799, %v3139
        %v3150 = vsel %vm2209, %v3149, %v3143
        %v3151 = vsel %vm2211, %v3150, %v3147
        %v3152 = vpack.c.bf16 %v3151, %v3151
        %v3154 = vlaneseq
        %v3155 = vshrl.u32 %v3154, 7
        %v3156 = vsub.s32 0, %v3155
        %v3157 = vrot.slane %v2403, %v3156
        %v3175 = vunpack.c.l.b16 %v2387
        %v3176 = vunpack.c.l.b16 %v2388
        %v3177 = vunpack.c.l.b16 %v2389
        %v3178 = vunpack.c.l.b16 %v2390
        %v3179 = vunpack.c.l.b16 %v2391
        %v3180 = vunpack.c.l.b16 %v2392
        %v3181 = vunpack.c.l.b16 %v2393
        %v3182 = vunpack.c.l.b16 %v2394
        %v3183 = vunpack.c.l.b16 %v2395
        %v3184 = vunpack.c.l.b16 %v2396
        %v3185 = vunpack.c.l.b16 %v2397
        %v3186 = vunpack.c.l.b16 %v2398
        %v3187 = vunpack.c.l.b16 %v2399
        %v3188 = vunpack.c.l.b16 %v2400
        %v3189 = vunpack.c.l.b16 %v2401
        %v3190 = vunpack.c.l.b16 %v2402
        %v3191 = vpack.c.b16 %v3176, %v3175
        %v3192 = vpack.c.b16 %v3178, %v3177
        %v3193 = vpack.c.b16 %v3180, %v3179
        %v3194 = vpack.c.b16 %v3182, %v3181
        %v3195 = vpack.c.b16 %v3184, %v3183
        %v3196 = vpack.c.b16 %v3186, %v3185
        %v3197 = vpack.c.b16 %v3188, %v3187
        %v3198 = vpack.c.b16 %v3190, %v3189
        %3207 = vmatprep.subr.bf16.mxu0 0
        %3208 = vmatpush1.bf16.msra.mxu0 %v3191
        %3209 = vmatprep.subr.bf16.mxu0 0
        %3210 = vmatpush1.bf16.msra.mxu0 %v3192
        %3211 = vmatprep.subr.bf16.mxu0 0
        %3212 = vmatpush1.bf16.msra.mxu0 %v3193
        %3213 = vmatprep.subr.bf16.mxu0 0
        %3214 = vmatpush1.bf16.msra.mxu0 %v3194
        %3215 = vmatprep.subr.bf16.mxu0 0
        %3216 = vmatpush1.bf16.msra.mxu0 %v3195
        %3217 = vmatprep.subr.bf16.mxu0 0
        %3218 = vmatpush1.bf16.msra.mxu0 %v3196
        %3219 = vmatprep.subr.bf16.mxu0 0
        %3220 = vmatpush1.bf16.msra.mxu0 %v3197
        %3221 = vmatprep.subr.bf16.mxu0 0
        %3222 = vmatpush1.bf16.msra.mxu0 %v3198
        %3223 = vmatprep.subr.bf16.mxu0 0
        %3224 = vmatpush1.bf16.msra.mxu0 0
        %3225 = vmatprep.subr.bf16.mxu0 0
        %3226 = vmatpush1.bf16.msra.mxu0 0
        %3227 = vmatprep.subr.bf16.mxu0 0
        %3228 = vmatpush1.bf16.msra.mxu0 0
        %3229 = vmatprep.subr.bf16.mxu0 0
        %3230 = vmatpush1.bf16.msra.mxu0 0
        %3231 = vmatprep.subr.bf16.mxu0 0
        %3232 = vmatpush1.bf16.msra.mxu0 0
        %3233 = vmatprep.subr.bf16.mxu0 0
        %3234 = vmatpush1.bf16.msra.mxu0 0
        %3235 = vmatprep.subr.bf16.mxu0 0
        %3236 = vmatpush1.bf16.msra.mxu0 0
        %3237 = vmatprep.subr.bf16.mxu0 0
        %3238 = vmatpush1.bf16.msra.mxu0 0
        %3239 = vmatprep.mubr.bf16.mxu0 0
        %3240 = vmatmul.mubr.bf16.gmra.mrb[0].mxu0 %v3152
        %v3241 = vpop.f32.mrb[0].mxu0
        %v3242 = vadd.f32 %v3157, %v3241
        %v3243 = vpop.f32.mrb[0].mxu0
        %v3244 = vpop.f32.mrb[0].mxu0
        %v3245 = vpop.f32.mrb[0].mxu0
        %3246 = vdwg.mxu0
        %v3247 = vadd.f32 %v3242, %v2334
        %3248 = vadd.xlane.f32.xlu0 %v3247
        %v3249 = vpop.xlane.xlu0 %3248
        %v3250 = vmul.f32 %v3249, %v2311
        %v3251 = vsub.f32 %v3247, %v3250
        %v3252 = vmul.f32 %v3251, %v3251
        %3253 = vadd.xlane.f32.xlu0 %v3252
        %v3254 = vpop.xlane.xlu0 %3253
        %v3255 = vmul.f32 %v3254, %v2311
        %v3256 = vadd.f32 %v3255, 1e-12
        %v3257 = vrsqrt.pop %v3256
        %v3258 = vmul.f32 %v3251, %v3257
        %v3260 = vlaneseq
        %v3261 = vshrl.u32 %v3260, 7
        %v3262 = vsub.s32 0, %v3261
        %v3263 = vrot.slane %v2404, %v3262
        %v3265 = vmul.f32 %v3258, %v3263
        %v3267 = vlaneseq
        %v3268 = vshrl.u32 %v3267, 7
        %v3269 = vsub.s32 0, %v3268
        %v3270 = vrot.slane %v2405, %v3269
        %v3272 = vadd.f32 %v3265, %v3270
        %v3273 = vld [vmem:[#allocation40] sm:$0xff]
        %v3274 = vld [vmem:[#allocation40 + $0x8] sm:$0xff]
        %v3275 = vld [vmem:[#allocation40 + $0x10] sm:$0xff]
        %v3276 = vld [vmem:[#allocation40 + $0x18] sm:$0xff]
        %v3277 = vld [vmem:[#allocation40 + $0x20] sm:$0xff]
        %v3278 = vld [vmem:[#allocation40 + $0x28] sm:$0xff]
        %v3279 = vld [vmem:[#allocation40 + $0x30] sm:$0xff]
        %v3280 = vld [vmem:[#allocation40 + $0x38] sm:$0xff]
        %v3281 = vld [vmem:[#allocation40 + $0x40] sm:$0xff]
        %v3282 = vld [vmem:[#allocation40 + $0x48] sm:$0xff]
        %v3283 = vld [vmem:[#allocation40 + $0x50] sm:$0xff]
        %v3284 = vld [vmem:[#allocation40 + $0x58] sm:$0xff]
        %v3285 = vld [vmem:[#allocation40 + $0x60] sm:$0xff]
        %v3286 = vld [vmem:[#allocation40 + $0x68] sm:$0xff]
        %v3287 = vld [vmem:[#allocation40 + $0x70] sm:$0xff]
        %v3288 = vld [vmem:[#allocation40 + $0x78] sm:$0xff]
        %v3289 = vld [vmem:[#allocation41] sm:$0x3]
        %v3290 = vld [vmem:[#allocation43] sm:$0xf]
        %v3291 = vld [vmem:[#allocation43 + $0x4] sm:$0xf]
        %v3292 = vld [vmem:[#allocation43 + $0x8] sm:$0xf]
        %v3293 = vld [vmem:[#allocation43 + $0xc] sm:$0xf]
        %v3294 = vld [vmem:[#allocation43 + $0x10] sm:$0xf]
        %v3295 = vld [vmem:[#allocation43 + $0x14] sm:$0xf]
        %v3296 = vld [vmem:[#allocation43 + $0x18] sm:$0xf]
        %v3297 = vld [vmem:[#allocation43 + $0x1c] sm:$0xf]
        %v3298 = vld [vmem:[#allocation43 + $0x20] sm:$0xf]
        %v3299 = vld [vmem:[#allocation43 + $0x24] sm:$0xf]
        %v3300 = vld [vmem:[#allocation43 + $0x28] sm:$0xf]
        %v3301 = vld [vmem:[#allocation43 + $0x2c] sm:$0xf]
        %v3302 = vld [vmem:[#allocation43 + $0x30] sm:$0xf]
        %v3303 = vld [vmem:[#allocation43 + $0x34] sm:$0xf]
        %v3304 = vld [vmem:[#allocation43 + $0x38] sm:$0xf]
        %v3305 = vld [vmem:[#allocation43 + $0x3c] sm:$0xf]
        %v3306 = vld [vmem:[#allocation43 + $0x40] sm:$0xf]
        %v3307 = vld [vmem:[#allocation43 + $0x44] sm:$0xf]
        %v3308 = vld [vmem:[#allocation43 + $0x48] sm:$0xf]
        %v3309 = vld [vmem:[#allocation43 + $0x4c] sm:$0xf]
        %v3310 = vld [vmem:[#allocation43 + $0x50] sm:$0xf]
        %v3311 = vld [vmem:[#allocation43 + $0x54] sm:$0xf]
        %v3312 = vld [vmem:[#allocation43 + $0x58] sm:$0xf]
        %v3313 = vld [vmem:[#allocation43 + $0x5c] sm:$0xf]
        %v3314 = vld [vmem:[#allocation43 + $0x60] sm:$0xf]
        %v3315 = vld [vmem:[#allocation43 + $0x64] sm:$0xf]
        %v3316 = vld [vmem:[#allocation43 + $0x68] sm:$0xf]
        %v3317 = vld [vmem:[#allocation43 + $0x6c] sm:$0xf]
        %v3318 = vld [vmem:[#allocation43 + $0x70] sm:$0xf]
        %v3319 = vld [vmem:[#allocation43 + $0x74] sm:$0xf]
        %v3320 = vld [vmem:[#allocation43 + $0x78] sm:$0xf]
        %v3321 = vld [vmem:[#allocation43 + $0x7c] sm:$0xf]
        %v3322 = vld [vmem:[#allocation44] sm:$0x1]
        %v3323 = vld [vmem:[#allocation46] sm:$0x1]
        %v3324 = vld [vmem:[#allocation47] sm:$0x1]
        %v3325 = vpack.c.bf16 %v3272, %v3272
        %v3327 = vlaneseq
        %v3328 = vshrl.u32 %v3327, 7
        %v3329 = vsub.s32 0, %v3328
        %v3330 = vrot.slane %v3289, %v3329
        %v3331 = vlaneseq
        %v3332 = vshrl.u32 %v3331, 7
        %v3333 = vsub.s32 1, %v3332
        %v3334 = vrot.slane %v3289, %v3333
        %v3353 = vunpack.c.l.b16 %v3273
        %v3354 = vunpack.c.h.b16 %v3273
        %v3355 = vunpack.c.l.b16 %v3274
        %v3356 = vunpack.c.h.b16 %v3274
        %v3357 = vunpack.c.l.b16 %v3275
        %v3358 = vunpack.c.h.b16 %v3275
        %v3359 = vunpack.c.l.b16 %v3276
        %v3360 = vunpack.c.h.b16 %v3276
        %v3361 = vunpack.c.l.b16 %v3277
        %v3362 = vunpack.c.h.b16 %v3277
        %v3363 = vunpack.c.l.b16 %v3278
        %v3364 = vunpack.c.h.b16 %v3278
        %v3365 = vunpack.c.l.b16 %v3279
        %v3366 = vunpack.c.h.b16 %v3279
        %v3367 = vunpack.c.l.b16 %v3280
        %v3368 = vunpack.c.h.b16 %v3280
        %v3369 = vunpack.c.l.b16 %v3281
        %v3370 = vunpack.c.h.b16 %v3281
        %v3371 = vunpack.c.l.b16 %v3282
        %v3372 = vunpack.c.h.b16 %v3282
        %v3373 = vunpack.c.l.b16 %v3283
        %v3374 = vunpack.c.h.b16 %v3283
        %v3375 = vunpack.c.l.b16 %v3284
        %v3376 = vunpack.c.h.b16 %v3284
        %v3377 = vunpack.c.l.b16 %v3285
        %v3378 = vunpack.c.h.b16 %v3285
        %v3379 = vunpack.c.l.b16 %v3286
        %v3380 = vunpack.c.h.b16 %v3286
        %v3381 = vunpack.c.l.b16 %v3287
        %v3382 = vunpack.c.h.b16 %v3287
        %v3383 = vunpack.c.l.b16 %v3288
        %v3384 = vunpack.c.h.b16 %v3288
        %v3385 = vpack.c.b16 %v3355, %v3353
        %v3386 = vpack.c.b16 %v3356, %v3354
        %v3387 = vpack.c.b16 %v3359, %v3357
        %v3388 = vpack.c.b16 %v3360, %v3358
        %v3389 = vpack.c.b16 %v3363, %v3361
        %v3390 = vpack.c.b16 %v3364, %v3362
        %v3391 = vpack.c.b16 %v3367, %v3365
        %v3392 = vpack.c.b16 %v3368, %v3366
        %v3393 = vpack.c.b16 %v3371, %v3369
        %v3394 = vpack.c.b16 %v3372, %v3370
        %v3395 = vpack.c.b16 %v3375, %v3373
        %v3396 = vpack.c.b16 %v3376, %v3374
        %v3397 = vpack.c.b16 %v3379, %v3377
        %v3398 = vpack.c.b16 %v3380, %v3378
        %v3399 = vpack.c.b16 %v3383, %v3381
        %v3400 = vpack.c.b16 %v3384, %v3382
        %3417 = vmatprep.subr.bf16.mxu0 %v3386
        %3418 = vmatpush1.bf16.msra.mxu0 %v3385
        %3419 = vmatprep.subr.bf16.mxu0 %v3388
        %3420 = vmatpush1.bf16.msra.mxu0 %v3387
        %3421 = vmatprep.subr.bf16.mxu0 %v3390
        %3422 = vmatpush1.bf16.msra.mxu0 %v3389
        %3423 = vmatprep.subr.bf16.mxu0 %v3392
        %3424 = vmatpush1.bf16.msra.mxu0 %v3391
        %3425 = vmatprep.subr.bf16.mxu0 %v3394
        %3426 = vmatpush1.bf16.msra.mxu0 %v3393
        %3427 = vmatprep.subr.bf16.mxu0 %v3396
        %3428 = vmatpush1.bf16.msra.mxu0 %v3395
        %3429 = vmatprep.subr.bf16.mxu0 %v3398
        %3430 = vmatpush1.bf16.msra.mxu0 %v3397
        %3431 = vmatprep.subr.bf16.mxu0 %v3400
        %3432 = vmatpush1.bf16.msra.mxu0 %v3399
        %3433 = vmatprep.subr.bf16.mxu0 0
        %3434 = vmatpush1.bf16.msra.mxu0 0
        %3435 = vmatprep.subr.bf16.mxu0 0
        %3436 = vmatpush1.bf16.msra.mxu0 0
        %3437 = vmatprep.subr.bf16.mxu0 0
        %3438 = vmatpush1.bf16.msra.mxu0 0
        %3439 = vmatprep.subr.bf16.mxu0 0
        %3440 = vmatpush1.bf16.msra.mxu0 0
        %3441 = vmatprep.subr.bf16.mxu0 0
        %3442 = vmatpush1.bf16.msra.mxu0 0
        %3443 = vmatprep.subr.bf16.mxu0 0
        %3444 = vmatpush1.bf16.msra.mxu0 0
        %3445 = vmatprep.subr.bf16.mxu0 0
        %3446 = vmatpush1.bf16.msra.mxu0 0
        %3447 = vmatprep.subr.bf16.mxu0 0
        %3448 = vmatpush1.bf16.msra.mxu0 0
        %3449 = vmatprep.mubr.bf16.mxu0 0
        %3450 = vmatmul.mubr.bf16.gmra.mrb[0].mxu0 %v3325
        %v3451 = vpop.f32.mrb[0].mxu0
        %v3452 = vadd.f32 %v3330, %v3451
        %v3453 = vpop.f32.mrb[0].mxu0
        %v3454 = vadd.f32 %v3334, %v3453
        %v3455 = vpop.f32.mrb[0].mxu0
        %v3456 = vpop.f32.mrb[0].mxu0
        %3457 = vdwg.mxu0
        %v3458 = vmul.f32 %v3452, 0.5
        %v3459 = vmul.f32 %v3454, 0.5
        %v3460 = vmul.f32 %v3452, 0.044715
        %v3461 = vmul.f32 %v3454, 0.044715
        %v3462 = vmul.f32 %v3460, %v3452
        %v3463 = vmul.f32 %v3461, %v3454
        %v3464 = vmul.f32 %v3462, %v3452
        %v3465 = vmul.f32 %v3463, %v3454
        %v3466 = vadd.f32 %v3452, %v3464
        %v3467 = vadd.f32 %v3454, %v3465
        %v3468 = vmul.f32 %v3466, 0.7978846
        %v3469 = vmul.f32 %v3467, 0.7978846
        %v3470 = vtanh.pop %v3468
        %v3471 = vtanh.pop %v3469
        %v3472 = vadd.f32 %v3470, 1.0
        %v3473 = vadd.f32 %v3471, 1.0
        %v3474 = vmul.f32 %v3458, %v3472
        %v3475 = vmul.f32 %v3459, %v3473
        %v3476 = vpack.c.bf16 %v3474, %v3474
        %v3477 = vpack.c.bf16 %v3475, %v3475
        %v3479 = vlaneseq
        %v3480 = vshrl.u32 %v3479, 7
        %v3481 = vsub.s32 0, %v3480
        %v3482 = vrot.slane %v3322, %v3481
        %v3516 = vunpack.c.l.b16 %v3290
        %v3517 = vunpack.c.l.b16 %v3291
        %v3518 = vunpack.c.l.b16 %v3292
        %v3519 = vunpack.c.l.b16 %v3293
        %v3520 = vunpack.c.l.b16 %v3294
        %v3521 = vunpack.c.l.b16 %v3295
        %v3522 = vunpack.c.l.b16 %v3296
        %v3523 = vunpack.c.l.b16 %v3297
        %v3524 = vunpack.c.l.b16 %v3298
        %v3525 = vunpack.c.l.b16 %v3299
        %v3526 = vunpack.c.l.b16 %v3300
        %v3527 = vunpack.c.l.b16 %v3301
        %v3528 = vunpack.c.l.b16 %v3302
        %v3529 = vunpack.c.l.b16 %v3303
        %v3530 = vunpack.c.l.b16 %v3304
        %v3531 = vunpack.c.l.b16 %v3305
        %v3532 = vunpack.c.l.b16 %v3306
        %v3533 = vunpack.c.l.b16 %v3307
        %v3534 = vunpack.c.l.b16 %v3308
        %v3535 = vunpack.c.l.b16 %v3309
        %v3536 = vunpack.c.l.b16 %v3310
        %v3537 = vunpack.c.l.b16 %v3311
        %v3538 = vunpack.c.l.b16 %v3312
        %v3539 = vunpack.c.l.b16 %v3313
        %v3540 = vunpack.c.l.b16 %v3314
        %v3541 = vunpack.c.l.b16 %v3315
        %v3542 = vunpack.c.l.b16 %v3316
        %v3543 = vunpack.c.l.b16 %v3317
        %v3544 = vunpack.c.l.b16 %v3318
        %v3545 = vunpack.c.l.b16 %v3319
        %v3546 = vunpack.c.l.b16 %v3320
        %v3547 = vunpack.c.l.b16 %v3321
        %v3548 = vpack.c.b16 %v3517, %v3516
        %v3549 = vpack.c.b16 %v3519, %v3518
        %v3550 = vpack.c.b16 %v3521, %v3520
        %v3551 = vpack.c.b16 %v3523, %v3522
        %v3552 = vpack.c.b16 %v3525, %v3524
        %v3553 = vpack.c.b16 %v3527, %v3526
        %v3554 = vpack.c.b16 %v3529, %v3528
        %v3555 = vpack.c.b16 %v3531, %v3530
        %v3556 = vpack.c.b16 %v3533, %v3532
        %v3557 = vpack.c.b16 %v3535, %v3534
        %v3558 = vpack.c.b16 %v3537, %v3536
        %v3559 = vpack.c.b16 %v3539, %v3538
        %v3560 = vpack.c.b16 %v3541, %v3540
        %v3561 = vpack.c.b16 %v3543, %v3542
        %v3562 = vpack.c.b16 %v3545, %v3544
        %v3563 = vpack.c.b16 %v3547, %v3546
        %3580 = vmatprep.subr.bf16.mxu0 0
        %3581 = vmatpush1.bf16.msra.mxu0 %v3548
        %3582 = vmatprep.subr.bf16.mxu0 0
        %3583 = vmatpush1.bf16.msra.mxu0 %v3549
        %3584 = vmatprep.subr.bf16.mxu0 0
        %3585 = vmatpush1.bf16.msra.mxu0 %v3550
        %3586 = vmatprep.subr.bf16.mxu0 0
        %3587 = vmatpush1.bf16.msra.mxu0 %v3551
        %3588 = vmatprep.subr.bf16.mxu0 0
        %3589 = vmatpush1.bf16.msra.mxu0 %v3552
        %3590 = vmatprep.subr.bf16.mxu0 0
        %3591 = vmatpush1.bf16.msra.mxu0 %v3553
        %3592 = vmatprep.subr.bf16.mxu0 0
        %3593 = vmatpush1.bf16.msra.mxu0 %v3554
        %3594 = vmatprep.subr.bf16.mxu0 0
        %3595 = vmatpush1.bf16.msra.mxu0 %v3555
        %3596 = vmatprep.subr.bf16.mxu0 0
        %3597 = vmatpush1.bf16.msra.mxu0 %v3556
        %3598 = vmatprep.subr.bf16.mxu0 0
        %3599 = vmatpush1.bf16.msra.mxu0 %v3557
        %3600 = vmatprep.subr.bf16.mxu0 0
        %3601 = vmatpush1.bf16.msra.mxu0 %v3558
        %3602 = vmatprep.subr.bf16.mxu0 0
        %3603 = vmatpush1.bf16.msra.mxu0 %v3559
        %3604 = vmatprep.subr.bf16.mxu0 0
        %3605 = vmatpush1.bf16.msra.mxu0 %v3560
        %3606 = vmatprep.subr.bf16.mxu0 0
        %3607 = vmatpush1.bf16.msra.mxu0 %v3561
        %3608 = vmatprep.subr.bf16.mxu0 0
        %3609 = vmatpush1.bf16.msra.mxu0 %v3562
        %3610 = vmatprep.subr.bf16.mxu0 0
        %3611 = vmatpush1.bf16.msra.mxu0 %v3563
        %3612 = vmatprep.mubr.bf16.mxu0 %v3477
        %3613 = vmatmul.mubr.bf16.gmra.mrb[0].mxu0 %v3476
        %v3614 = vpop.f32.mrb[0].mxu0
        %v3615 = vadd.f32 %v3482, %v3614
        %v3616 = vpop.f32.mrb[0].mxu0
        %v3617 = vpop.f32.mrb[0].mxu0
        %v3618 = vpop.f32.mrb[0].mxu0
        %3619 = vdwg.mxu0
        %v3620 = vadd.f32 %v3615, %v3272
        %3621 = vadd.xlane.f32.xlu0 %v3620
        %v3622 = vpop.xlane.xlu0 %3621
        %v3623 = vmul.f32 %v3622, %v2311
        %v3624 = vsub.f32 %v3620, %v3623
        %v3625 = vmul.f32 %v3624, %v3624
        %3626 = vadd.xlane.f32.xlu0 %v3625
        %v3627 = vpop.xlane.xlu0 %3626
        %v3628 = vmul.f32 %v3627, %v2311
        %v3629 = vadd.f32 %v3628, 1e-12
        %v3630 = vrsqrt.pop %v3629
        %v3631 = vmul.f32 %v3624, %v3630
        %v3633 = vlaneseq
        %v3634 = vshrl.u32 %v3633, 7
        %v3635 = vsub.s32 0, %v3634
        %v3636 = vrot.slane %v3323, %v3635
        %v3638 = vmul.f32 %v3631, %v3636
        %v3640 = vlaneseq
        %v3641 = vshrl.u32 %v3640, 7
        %v3642 = vsub.s32 0, %v3641
        %v3643 = vrot.slane %v3324, %v3642
        %v3645 = vadd.f32 %v3638, %v3643
        %3646 = vst [vmem:[%s1395] sm:$0xff] %v3645
        %s3647 = sand.u32 %s755, 1
        %s3648 = scalar_lea.sflag [#allocation4], %s3647
        %s3649 = sand.u32 %s755, 1
        %s3650 = smul.addr %s3649, 8
        %s3651 = scalar_lea.vmem [#allocation49], %s3650
        // Predicated region
        $region261: #{tpu_custom_call.1} parent=139 // pred_check
          %p3652 = pneg %p765
        $region262: #{tpu_custom_call.1} parent=139 // pred_check_branch
          %3654 = sbr.rel (%p3652) target = $region264
        $region263: #{tpu_custom_call.1} parent=139 // pred_region
          %s3656 = ssub.s32 128, 128
          %3657 = vsyncadd %s3648, %s3656
          %s3658 = smul.addr %s97, 128
          %s3659 = scalar_lea.hbm %s61, %s3658
          %s3661 = sshll.u32 %s3651, 4
          %s3662 = int_to_ptr.vmem [resolvable:$true] %s3661
          %3664 = dma.vmem_to_hbm [thread:$0]  %s3662, 128, %s3659, %s3648
        $region264: #{tpu_custom_call.1} parent=139 // pred_fallthru
          _
      $region140: #{tpu_custom_call.1} parent=5 // pred_fallthru
        _
      %p3665 = scmp.le.s32.totalorder 2, %s92
      // Predicated region
      $region265: #{tpu_custom_call.1} parent=5 // pred_check
        %p3666 = pneg %p3665
      $region266: #{tpu_custom_call.1} parent=5 // pred_check_branch
        %3668 = sbr.rel (%p3666) target = $region268
      $region267: #{tpu_custom_call.1} parent=5 // pred_region
        %s3669 = ssub.s32 %s92, 2
        // Predicated region
        $region269: #{tpu_custom_call.1} parent=267 // pred_check
          %p3670 = pneg %p771
        $region270: #{tpu_custom_call.1} parent=267 // pred_check_branch
          %3672 = sbr.rel (%p3670) target = $region272
        $region271: #{tpu_custom_call.1} parent=267 // pred_region
          %s3673 = sand.u32 %s756, 1
          %s3674 = scalar_lea.sflag [#allocation4], %s3673
          %s3675 = sand.u32 %s756, 1
          %s3676 = smul.addr %s3675, 8
          %s3677 = scalar_lea.vmem [#allocation49], %s3676
          %3678 = dma.done %s3674, 128
        $region272: #{tpu_custom_call.1} parent=267 // pred_fallthru
          _
      $region268: #{tpu_custom_call.1} parent=5 // pred_fallthru
        _
    $region6: #{tpu_custom_call.1} parent=1 // loop_footer
      %s96 = sadd.s32 1, %s92
    $region7: #{tpu_custom_call.1} parent=1 // loop_footer_branch
      %91 = sbr.rel target = $region3
    $region8: #{tpu_custom_call.1} parent=1 // loop_exit
      _
    %3679 = vsyncpa [#allocation3], 1
    %s3680 = scalar_lea.sflag [#allocation3], 1
    %3681 = vsyncpa %s3680, 1
    %3682 = vsyncpa [#allocation6], 1
    %s3683 = scalar_lea.sflag [#allocation6], 1
    %3684 = vsyncpa %s3683, 1
    %3685 = vsyncpa [#allocation9], 1
    %s3686 = scalar_lea.sflag [#allocation9], 1
    %3687 = vsyncpa %s3686, 1
    %3688 = vsyncpa [#allocation12], 1
    %3689 = vsyncpa [#allocation15], 1
    %3690 = vsyncpa [#allocation18], 1
    %3691 = vsyncpa [#allocation21], 1
    %3692 = vsyncpa [#allocation24], 1
    %3693 = vsyncpa [#allocation27], 1
    %3694 = vsyncpa [#allocation30], 1
    %3695 = vsyncpa [#allocation33], 1
    %3696 = vsyncpa [#allocation36], 1
    %3697 = vsyncpa [#allocation39], 1
    %3698 = vsyncpa [#allocation42], 1
    %3699 = vsyncpa [#allocation45], 1
    %3700 = vsyncpa [#allocation48], 1
    %3701 = vsyncpa [#allocation4], 1
    %s3702 = scalar_lea.sflag [#allocation4], 1
    %3703 = vsyncpa %s3702, 1

</llo_original>
